<compile_context>
chip_gen: v6e
topology: v6e:2x2x1
jax: 0.10.0
libtpu: 0.0.40
codegen_flags: <defaults>
</compile_context>

<pallas_src>
import functools
from collections import namedtuple

import jax
import jax.numpy as jnp
import numpy as np
from jax import lax
from jax.experimental import pallas as pl
from jax.experimental.pallas import tpu as pltpu


LayerCfg = namedtuple("LayerCfg", "ksize stride pad hin hpad hout cin cout act")


def _build_cfgs(params, h0):
    cfgs = []
    hin = h0
    for layer in params:
        k, cin, cout = layer["w"].shape
        s, p = layer["stride"], layer["pad"]
        hpad = hin + 2 * p
        hout = (hpad - k) // s + 1
        cfgs.append(LayerCfg(k, s, p, hin, hpad, hout, cin, cout, layer["act"]))
        hin = hout
    return tuple(cfgs)


# ----------------------------------------------------------------------------
# Fused kernel: layers 1..N-1 for ALL (batch, period) slabs in one grid step.
# ----------------------------------------------------------------------------
def _fused_kernel(*refs, cfgs, n_slabs, neg_slope):
    # refs layout (n_mid = number of middle LeakyReLU conv layers = len-2):
    #   [0]                         act0   (n_slabs, H1, C1)       bf16
    #   [1 .. 2*n_mid]              (w_l, b_l): w_l (K, Cin, Cout) bf16,
    #                                           b_l (1, Cout)      f32
    #   [1+2n .. 2+2n]              wf (Kf, Cin_f) f32, bf (1,) f32 in SMEM
    #   [3+2n .. 2+3n]              middle-layer outputs (n_slabs, Hout, Cout) f32
    #   [3+3n]                      final output (n_slabs, Hout_f) f32
    #   [4+3n .. 3+4n]              per-layer padded staging (n_slabs,Hpad,Cin) f32
    #   [4+4n]                      final-layer padded staging (f32)
    n_mid = len(cfgs) - 2
    act0_ref = refs[0]
    w_refs = [refs[1 + 2 * i] for i in range(n_mid)]
    b_refs = [refs[2 + 2 * i] for i in range(n_mid)]
    wf_ref = refs[1 + 2 * n_mid]
    bf_ref = refs[2 + 2 * n_mid]
    n_in = 3 + 2 * n_mid
    out_refs = refs[n_in:n_in + n_mid]
    outf_ref = refs[n_in + n_mid]
    pad_refs = refs[n_in + n_mid + 1:n_in + n_mid + 1 + n_mid]
    padf_ref = refs[n_in + n_mid + 1 + n_mid]

    def leaky(v):
        return jnp.where(v >= 0, v, neg_slope * v)

    def stage_padded(pad_ref, prev_ref, c):
        # Zero only the halo rows (interior rows are always overwritten).
        if c.pad > 0:
            pad_ref[:, :c.pad, :] = jnp.zeros((n_slabs, c.pad, c.cin),
                                              jnp.float32)
        tail = c.hpad - (c.pad + c.hin)
        if tail > 0:
            pad_ref[:, c.pad + c.hin:, :] = jnp.zeros((n_slabs, tail, c.cin),
                                                      jnp.float32)
        # One vectorized 3-D store across all slabs (no per-slab Python loop).
        pad_ref[:, c.pad:c.pad + c.hin, :] = prev_ref[...].astype(jnp.float32)

    def tap_slice(pad_ref, k, c):
        if c.stride == 1 or c.hout == 1:
            return pad_ref[:, pl.ds(k, c.hout), :]
        return pad_ref[:, pl.ds(k, c.hout, stride=c.stride), :]

    # ---- middle layers: K accumulated bf16 tap-matmuls, f32 accumulate -----
    prev_ref = act0_ref
    for i in range(n_mid):
        c = cfgs[1 + i]
        pad_ref = pad_refs[i]
        stage_padded(pad_ref, prev_ref, c)

        acc = jnp.zeros((n_slabs * c.hout, c.cout), jnp.float32)
        for k in range(c.ksize):
            xk = tap_slice(pad_ref, k, c)                       # (S, Hout, Cin)
            xk2 = xk.reshape(n_slabs * c.hout, c.cin).astype(jnp.bfloat16)
            acc = acc + jnp.dot(xk2, w_refs[i][k],
                                preferred_element_type=jnp.float32)
        y = leaky(acc + b_refs[i][...])
        out_refs[i][...] = y.reshape(n_slabs, c.hout, c.cout)
        prev_ref = out_refs[i]          # next layer re-reads from VMEM block

    # ---- final Cout==1 conv: f32 VPU multiply + cross-lane reduce ----------
    cf = cfgs[-1]
    stage_padded(padf_ref, prev_ref, cf)
    wf = wf_ref[...]                                            # (Kf, Cin_f)
    accf = jnp.zeros((n_slabs, cf.hout, cf.cin), jnp.float32)
    for k in range(cf.ksize):
        xk = tap_slice(padf_ref, k, cf)                         # (S, Hout, Cin)
        accf = accf + xk * wf[k][None, None, :]
    # lane-dense output: H is the last dim of the out block
    outf_ref[...] = jnp.sum(accf, axis=-1) + bf_ref[0]


# ----------------------------------------------------------------------------
# Forward pass (thin glue + fused Pallas kernel)
# ----------------------------------------------------------------------------
def hifigan_period_discriminator_forward(x, params, *, period=3,
                                         neg_slope=0.1):
    """x: (B, in_channels, T).  Returns the same list as the PyTorch module."""
    b, cin_x, t = x.shape
    if t % period != 0:
        n_pad = period - t % period
        x = jnp.pad(x, ((0, 0), (0, 0), (0, n_pad)), mode="reflect")
        t += n_pad
    h0 = t // period
    cfgs = _build_cfgs(params, h0)
    n_layers = len(cfgs)
    assert n_layers >= 2
    c0, cf = cfgs[0], cfgs[-1]
    # TODO(synk): generalize the fused final-layer path to out_channels > 1
    # (fallback: treat it like a middle layer without activation).
    assert cf.cout == 1, "fused output-conv path assumes out_channels == 1"
    n_slabs = b * period

    # ---- Layer 0 in the wrapper (XLA, f32). Cin==1 makes it lane-sparse and
    #      MXU-trivial inside the kernel; its output must hit HBM anyway
    #      (it is outs[0]), so nothing extra leaves VMEM.
    x4 = x.reshape(b, cin_x, h0, period)                       # (B, Cin, H0, P)
    w0 = jnp.transpose(params[0]["w"], (2, 1, 0))[:, :, :, None]    # OIHW
    y0 = lax.conv_general_dilated(
        x4, w0, (c0.stride, 1), ((c0.pad, c0.pad), (0, 0)),
        dimension_numbers=("NCHW", "OIHW", "NCHW"))
    y0 = y0 + params[0]["b"][None, :, None, None]
    if c0.act:
        y0 = jnp.where(y0 >= 0, y0, neg_slope * y0)            # (B, C1, H1, P)

    # Slab layout for the fused kernel: (B*period, H1, C1), bf16 (halves the
    # DMA; the layer-1 matmul operands are bf16 anyway).
    act0 = jnp.transpose(y0, (0, 3, 2, 1)).reshape(n_slabs, c0.hout, c0.cout)
    act0 = act0.astype(jnp.bfloat16)

    flat_inputs = [act0]
    in_specs = [pl.BlockSpec((n_slabs, c0.hout, c0.cout), lambda i: (0, 0, 0))]
    for l in range(1, n_layers - 1):
        c = cfgs[l]
        w = params[l]["w"].astype(jnp.bfloat16)                # (K, Cin, Cout)
        bias = params[l]["b"].reshape(1, c.cout).astype(jnp.float32)
        flat_inputs += [w, bias]
        in_specs += [pl.BlockSpec((c.ksize, c.cin, c.cout), lambda i: (0, 0, 0)),
                     pl.BlockSpec((1, c.cout), lambda i: (0, 0))]
    # Final Cout==1 conv stays f32 (MXU-cheap path replaced by VPU reduce);
    # weights laid out lane-dense as (K, Cin); scalar bias lives in SMEM.
    wf = params[-1]["w"][:, :, 0].astype(jnp.float32)
    bf = params[-1]["b"].reshape(-1).astype(jnp.float32)
    flat_inputs += [wf, bf]
    in_specs += [pl.BlockSpec((cf.ksize, cf.cin), lambda i: (0, 0)),
                 pl.BlockSpec(memory_space=pltpu.MemorySpace.SMEM)]

    out_shape = tuple(
        jax.ShapeDtypeStruct((n_slabs, c.hout, c.cout), jnp.float32)
        for c in cfgs[1:-1]) + (
        jax.ShapeDtypeStruct((n_slabs, cf.hout), jnp.float32),)
    out_specs = tuple(
        pl.BlockSpec((n_slabs, c.hout, c.cout), lambda i: (0, 0, 0))
        for c in cfgs[1:-1]) + (
        pl.BlockSpec((n_slabs, cf.hout), lambda i: (0, 0)),)

    # Only the small zero-padded staging buffers remain in scratch (the K*Cin
    # im2col column buffers are gone — taps are accumulated matmuls).
    scratch_shapes = (
        [pltpu.VMEM((n_slabs, c.hpad, c.cin), jnp.float32) for c in cfgs[1:-1]]
        + [pltpu.VMEM((n_slabs, cf.hpad, cf.cin), jnp.float32)])

    kernel = functools.partial(_fused_kernel, cfgs=cfgs, n_slabs=n_slabs,
                               neg_slope=neg_slope)
    kernel_outs = pl.pallas_call(
        kernel,
        grid=(1,),                  # batch + period folded into the matmul M dim
        out_shape=out_shape,
        in_specs=in_specs,
        out_specs=out_specs,
        scratch_shapes=scratch_shapes,
        compiler_params=pltpu.CompilerParams(
            dimension_semantics=("arbitrary",)),
    )(*flat_inputs)
    # TODO(synk): for long waveforms add an H-tiled grid axis with conv-halo
    # overlap (and an explicit vmem_limit_bytes sized per generation via
    # pltpu.get_tpu_info()); unnecessary at these activation sizes.

    # Layout glue back to PyTorch (B, C, H, period) — once per output, after
    # the fused kernel (never between layers).
    outs = [y0]
    for c, o in zip(cfgs[1:-1], kernel_outs[:-1]):
        o4 = o.reshape(b, period, c.hout, c.cout)
        outs.append(jnp.transpose(o4, (0, 3, 2, 1)))           # (B, C, H, P)
    of = kernel_outs[-1].reshape(b, period, cf.hout)           # (B, P, Hf)
    outs.append(jnp.transpose(of, (0, 2, 1)).reshape(b, -1))   # torch.flatten
    return outs


# ----------------------------------------------------------------------------
# Parameter construction (deterministic, synthetic)
# ----------------------------------------------------------------------------
def make_params(key, *, in_channels=1, out_channels=1, kernel_sizes=(5, 3),
                channels=32, downsample_scales=(3, 3, 3, 3, 1),
                max_downsample_channels=128):
    layers = []
    in_chs, out_chs = in_channels, channels
    keys = jax.random.split(key, len(downsample_scales) + 1)
    for i, ds in enumerate(downsample_scales):
        k = kernel_sizes[0]
        w = jax.random.normal(keys[i], (k, in_chs, out_chs), jnp.float32)
        w = w * (1.0 / np.sqrt(k * in_chs))
        bias = 0.01 * jax.random.normal(jax.random.fold_in(keys[i], 1),
                                        (out_chs,), jnp.float32)
        layers.append(dict(w=w, b=bias, stride=ds, pad=(k - 1) // 2, act=True))
        in_chs = out_chs
        out_chs = min(out_chs * 4, max_downsample_channels)
    k2 = kernel_sizes[1] - 1
    w = jax.random.normal(keys[-1], (k2, out_chs, out_channels), jnp.float32)
    w = w * (1.0 / np.sqrt(k2 * out_chs))
    bias = jnp.zeros((out_channels,), jnp.float32)
    layers.append(dict(w=w, b=bias, stride=1, pad=(kernel_sizes[1] - 1) // 2,
                       act=False))
    # TODO(synk): weight_norm at init is an identity reparameterization; fold
    # the g/v factors into w when loading a trained PyTorch checkpoint.
    return layers


# ----------------------------------------------------------------------------
# Pure-JAX reference (f32) — correctness check only
# ----------------------------------------------------------------------------
def reference_forward(x, params, *, period=3, neg_slope=0.1):
    b, c, t = x.shape
    if t % period != 0:
        n_pad = period - t % period
        x = jnp.pad(x, ((0, 0), (0, 0), (0, n_pad)), mode="reflect")
        t += n_pad
    h = x.reshape(b, c, t // period, period)
    outs = []
    for layer in params:
        w_t = jnp.transpose(layer["w"], (2, 1, 0))[:, :, :, None]  # OIHW
        h = lax.conv_general_dilated(
            h, w_t, (layer["stride"], 1),
            ((layer["pad"], layer["pad"]), (0, 0)),
            dimension_numbers=("NCHW", "OIHW", "NCHW"))
        h = h + layer["b"][None, :, None, None]
        if layer["act"]:
            h = jnp.where(h >= 0, h, neg_slope * h)
        outs.append(h)
    final = outs.pop()
    outs.append(final.reshape(b, -1))
    return outs


# ----------------------------------------------------------------------------
if __name__ == "__main__":
    key = jax.random.PRNGKey(0)
    k_x, k_p = jax.random.split(key)

    period = 3
    B, Cin, T = 2, 1, 46          # T % period != 0 -> exercises reflect pad
    x = jax.random.normal(k_x, (B, Cin, T), jnp.float32)

    params = make_params(k_p, in_channels=Cin, out_channels=1,
                         kernel_sizes=(5, 3), channels=32,
                         downsample_scales=(3, 3, 3, 3, 1),
                         max_downsample_channels=128)

    fwd = jax.jit(lambda xx: hifigan_period_discriminator_forward(
        xx, params, period=period))
    outs = jax.block_until_ready(fwd(x))
    refs = jax.block_until_ready(reference_forward(x, params, period=period))

    # Tolerance loosened vs. the f32 reference because the middle-layer matmul
    # operands are bf16 (first/last layers and all accumulation stay f32).
    ok = True
    for i, (o, r) in enumerate(zip(outs, refs)):
        o = np.asarray(o)
        r = np.asarray(r)
        if o.shape != r.shape:
            ok = False
            print(f"mismatch at output {i}: shapes {o.shape} vs {r.shape}")
        elif not np.allclose(o, r, atol=5e-2, rtol=5e-2):
            ok = False
            print(f"mismatch at output {i}: max err "
                  f"{np.max(np.abs(o - r))}")
    if ok:
        print("KERNEL_OK")
</pallas_src>

<mosaic_0001>
module attributes {stable_mosaic.version = 11 : i64} {
  func.func @_fused_kernel(%arg0: i32, %arg1: memref<6x6x32xbf16, #tpu.memory_space<vmem>>, %arg2: memref<5x32x128xbf16, #tpu.memory_space<vmem>>, %arg3: memref<1x128xf32, #tpu.memory_space<vmem>>, %arg4: memref<5x128x128xbf16, #tpu.memory_space<vmem>>, %arg5: memref<1x128xf32, #tpu.memory_space<vmem>>, %arg6: memref<5x128x128xbf16, #tpu.memory_space<vmem>>, %arg7: memref<1x128xf32, #tpu.memory_space<vmem>>, %arg8: memref<5x128x128xbf16, #tpu.memory_space<vmem>>, %arg9: memref<1x128xf32, #tpu.memory_space<vmem>>, %arg10: memref<2x128xf32, #tpu.memory_space<vmem>>, %arg11: memref<1xf32, #tpu.memory_space<smem>>, %arg12: memref<6x2x128xf32, #tpu.memory_space<vmem>>, %arg13: memref<6x1x128xf32, #tpu.memory_space<vmem>>, %arg14: memref<6x1x128xf32, #tpu.memory_space<vmem>>, %arg15: memref<6x1x128xf32, #tpu.memory_space<vmem>>, %arg16: memref<6x2xf32, #tpu.memory_space<vmem>>, %arg17: memref<6x10x32xf32, #tpu.memory_space<vmem>>, %arg18: memref<6x6x128xf32, #tpu.memory_space<vmem>>, %arg19: memref<6x5x128xf32, #tpu.memory_space<vmem>>, %arg20: memref<6x5x128xf32, #tpu.memory_space<vmem>>, %arg21: memref<6x3x128xf32, #tpu.memory_space<vmem>>) attributes {dimension_semantics = [#tpu.dimension_semantics<arbitrary>], iteration_bounds = array<i64: 1>, scalar_prefetch = 0 : i64, scratch_operands = 5 : i64, tpu.core_type = #tpu.core_type<tc>, window_params = [{pipeline_mode = #tpu.pipeline_mode<synchronous>, transform_indices = @transform_0, window_bounds = array<i64: 6, 6, 32>}, {pipeline_mode = #tpu.pipeline_mode<synchronous>, transform_indices = @transform_1, window_bounds = array<i64: 5, 32, 128>}, {pipeline_mode = #tpu.pipeline_mode<synchronous>, transform_indices = @transform_2, window_bounds = array<i64: 1, 128>}, {pipeline_mode = #tpu.pipeline_mode<synchronous>, transform_indices = @transform_3, window_bounds = array<i64: 5, 128, 128>}, {pipeline_mode = #tpu.pipeline_mode<synchronous>, transform_indices = @transform_4, window_bounds = array<i64: 1, 128>}, {pipeline_mode = #tpu.pipeline_mode<synchronous>, transform_indices = @transform_5, window_bounds = array<i64: 5, 128, 128>}, {pipeline_mode = #tpu.pipeline_mode<synchronous>, transform_indices = @transform_6, window_bounds = array<i64: 1, 128>}, {pipeline_mode = #tpu.pipeline_mode<synchronous>, transform_indices = @transform_7, window_bounds = array<i64: 5, 128, 128>}, {pipeline_mode = #tpu.pipeline_mode<synchronous>, transform_indices = @transform_8, window_bounds = array<i64: 1, 128>}, {pipeline_mode = #tpu.pipeline_mode<synchronous>, transform_indices = @transform_9, window_bounds = array<i64: 2, 128>}, {transform_indices = @transform_10, window_bounds = array<i64: 1>}, {pipeline_mode = #tpu.pipeline_mode<synchronous>, transform_indices = @transform_11, window_bounds = array<i64: 6, 2, 128>}, {pipeline_mode = #tpu.pipeline_mode<synchronous>, transform_indices = @transform_12, window_bounds = array<i64: 6, 1, 128>}, {pipeline_mode = #tpu.pipeline_mode<synchronous>, transform_indices = @transform_13, window_bounds = array<i64: 6, 1, 128>}, {pipeline_mode = #tpu.pipeline_mode<synchronous>, transform_indices = @transform_14, window_bounds = array<i64: 6, 1, 128>}, {pipeline_mode = #tpu.pipeline_mode<synchronous>, transform_indices = @transform_15, window_bounds = array<i64: 6, 2>}]} {
    %cst = arith.constant 0.000000e+00 : f32
    %0 = vector.broadcast %cst : f32 to vector<6x2x32xf32>
    %c0 = arith.constant 0 : index
    %c0_0 = arith.constant 0 : index
    %c0_1 = arith.constant 0 : index
    %1 = vector.load %arg17[%c0, %c0_0, %c0_1] : memref<6x10x32xf32, #tpu.memory_space<vmem>>, vector<6x2x32xf32>
    tpu.vector_store %arg17[%c0, %c0_0, %c0_1], %0 {strides = array<i32>} : memref<6x10x32xf32, #tpu.memory_space<vmem>>, vector<6x2x32xf32>,
    %cst_2 = arith.constant 0.000000e+00 : f32
    %2 = vector.broadcast %cst_2 : f32 to vector<6x2x32xf32>
    %c0_3 = arith.constant 0 : index
    %c8 = arith.constant 8 : index
    %c0_4 = arith.constant 0 : index
    %3 = vector.load %arg17[%c0_3, %c8, %c0_4] : memref<6x10x32xf32, #tpu.memory_space<vmem>>, vector<6x2x32xf32>
    tpu.vector_store %arg17[%c0_3, %c8, %c0_4], %2 {strides = array<i32>} : memref<6x10x32xf32, #tpu.memory_space<vmem>>, vector<6x2x32xf32>,
    %c0_5 = arith.constant 0 : index
    %c0_6 = arith.constant 0 : index
    %c0_7 = arith.constant 0 : index
    %4 = vector.load %arg1[%c0_5, %c0_6, %c0_7] : memref<6x6x32xbf16, #tpu.memory_space<vmem>>, vector<6x6x32xbf16>
    %5 = arith.extf %4 : vector<6x6x32xbf16> to vector<6x6x32xf32>
    %c0_8 = arith.constant 0 : index
    %c2 = arith.constant 2 : index
    %c0_9 = arith.constant 0 : index
    %6 = vector.load %arg17[%c0_8, %c2, %c0_9] : memref<6x10x32xf32, #tpu.memory_space<vmem>>, vector<6x6x32xf32>
    tpu.vector_store %arg17[%c0_8, %c2, %c0_9], %5 {strides = array<i32>} : memref<6x10x32xf32, #tpu.memory_space<vmem>>, vector<6x6x32xf32>,
    %cst_10 = arith.constant 0.000000e+00 : f32
    %7 = vector.broadcast %cst_10 : f32 to vector<12x128xf32>
    %c0_11 = arith.constant 0 : index
    %c0_12 = arith.constant 0 : index
    %c0_13 = arith.constant 0 : index
    %8 = tpu.strided_load %arg17[%c0_11, %c0_12, %c0_13] {strides = array<i32: 1, 3, 1>} : memref<6x10x32xf32, #tpu.memory_space<vmem>>, vector<6x2x32xf32>
    %9 = vector.shape_cast %8 : vector<6x2x32xf32> to vector<12x32xf32>
    %10 = arith.truncf %9 : vector<12x32xf32> to vector<12x32xbf16>
    %c0_14 = arith.constant 0 : index
    %c0_15 = arith.constant 0 : index
    %c0_16 = arith.constant 0 : index
    %11 = vector.load %arg2[%c0_14, %c0_15, %c0_16] : memref<5x32x128xbf16, #tpu.memory_space<vmem>>, vector<1x32x128xbf16>
    %12 = vector.shape_cast %11 : vector<1x32x128xbf16> to vector<32x128xbf16>
    %cst_17 = arith.constant dense<0.000000e+00> : vector<12x128xf32>
    %13 = tpu.matmul %10, %12, %cst_17 {dimension_numbers = #tpu.dot_dimension_numbers<[1], [0], [0], [1], [0, 0, 1, 1], [], []>} : vector<12x32xbf16>, vector<32x128xbf16>, vector<12x128xf32> -> vector<12x128xf32>
    %14 = arith.addf %7, %13 : vector<12x128xf32>
    %c0_18 = arith.constant 0 : index
    %c1 = arith.constant 1 : index
    %c0_19 = arith.constant 0 : index
    %15 = tpu.strided_load %arg17[%c0_18, %c1, %c0_19] {strides = array<i32: 1, 3, 1>} : memref<6x10x32xf32, #tpu.memory_space<vmem>>, vector<6x2x32xf32>
    %16 = vector.shape_cast %15 : vector<6x2x32xf32> to vector<12x32xf32>
    %17 = arith.truncf %16 : vector<12x32xf32> to vector<12x32xbf16>
    %c1_20 = arith.constant 1 : index
    %c0_21 = arith.constant 0 : index
    %c0_22 = arith.constant 0 : index
    %18 = vector.load %arg2[%c1_20, %c0_21, %c0_22] : memref<5x32x128xbf16, #tpu.memory_space<vmem>>, vector<1x32x128xbf16>
    %19 = vector.shape_cast %18 : vector<1x32x128xbf16> to vector<32x128xbf16>
    %cst_23 = arith.constant dense<0.000000e+00> : vector<12x128xf32>
    %20 = tpu.matmul %17, %19, %cst_23 {dimension_numbers = #tpu.dot_dimension_numbers<[1], [0], [0], [1], [0, 0, 1, 1], [], []>} : vector<12x32xbf16>, vector<32x128xbf16>, vector<12x128xf32> -> vector<12x128xf32>
    %21 = arith.addf %14, %20 : vector<12x128xf32>
    %c0_24 = arith.constant 0 : index
    %c2_25 = arith.constant 2 : index
    %c0_26 = arith.constant 0 : index
    %22 = tpu.strided_load %arg17[%c0_24, %c2_25, %c0_26] {strides = array<i32: 1, 3, 1>} : memref<6x10x32xf32, #tpu.memory_space<vmem>>, vector<6x2x32xf32>
    %23 = vector.shape_cast %22 : vector<6x2x32xf32> to vector<12x32xf32>
    %24 = arith.truncf %23 : vector<12x32xf32> to vector<12x32xbf16>
    %c2_27 = arith.constant 2 : index
    %c0_28 = arith.constant 0 : index
    %c0_29 = arith.constant 0 : index
    %25 = vector.load %arg2[%c2_27, %c0_28, %c0_29] : memref<5x32x128xbf16, #tpu.memory_space<vmem>>, vector<1x32x128xbf16>
    %26 = vector.shape_cast %25 : vector<1x32x128xbf16> to vector<32x128xbf16>
    %cst_30 = arith.constant dense<0.000000e+00> : vector<12x128xf32>
    %27 = tpu.matmul %24, %26, %cst_30 {dimension_numbers = #tpu.dot_dimension_numbers<[1], [0], [0], [1], [0, 0, 1, 1], [], []>} : vector<12x32xbf16>, vector<32x128xbf16>, vector<12x128xf32> -> vector<12x128xf32>
    %28 = arith.addf %21, %27 : vector<12x128xf32>
    %c0_31 = arith.constant 0 : index
    %c3 = arith.constant 3 : index
    %c0_32 = arith.constant 0 : index
    %29 = tpu.strided_load %arg17[%c0_31, %c3, %c0_32] {strides = array<i32: 1, 3, 1>} : memref<6x10x32xf32, #tpu.memory_space<vmem>>, vector<6x2x32xf32>
    %30 = vector.shape_cast %29 : vector<6x2x32xf32> to vector<12x32xf32>
    %31 = arith.truncf %30 : vector<12x32xf32> to vector<12x32xbf16>
    %c3_33 = arith.constant 3 : index
    %c0_34 = arith.constant 0 : index
    %c0_35 = arith.constant 0 : index
    %32 = vector.load %arg2[%c3_33, %c0_34, %c0_35] : memref<5x32x128xbf16, #tpu.memory_space<vmem>>, vector<1x32x128xbf16>
    %33 = vector.shape_cast %32 : vector<1x32x128xbf16> to vector<32x128xbf16>
    %cst_36 = arith.constant dense<0.000000e+00> : vector<12x128xf32>
    %34 = tpu.matmul %31, %33, %cst_36 {dimension_numbers = #tpu.dot_dimension_numbers<[1], [0], [0], [1], [0, 0, 1, 1], [], []>} : vector<12x32xbf16>, vector<32x128xbf16>, vector<12x128xf32> -> vector<12x128xf32>
    %35 = arith.addf %28, %34 : vector<12x128xf32>
    %c0_37 = arith.constant 0 : index
    %c4 = arith.constant 4 : index
    %c0_38 = arith.constant 0 : index
    %36 = tpu.strided_load %arg17[%c0_37, %c4, %c0_38] {strides = array<i32: 1, 3, 1>} : memref<6x10x32xf32, #tpu.memory_space<vmem>>, vector<6x2x32xf32>
    %37 = vector.shape_cast %36 : vector<6x2x32xf32> to vector<12x32xf32>
    %38 = arith.truncf %37 : vector<12x32xf32> to vector<12x32xbf16>
    %c4_39 = arith.constant 4 : index
    %c0_40 = arith.constant 0 : index
    %c0_41 = arith.constant 0 : index
    %39 = vector.load %arg2[%c4_39, %c0_40, %c0_41] : memref<5x32x128xbf16, #tpu.memory_space<vmem>>, vector<1x32x128xbf16>
    %40 = vector.shape_cast %39 : vector<1x32x128xbf16> to vector<32x128xbf16>
    %cst_42 = arith.constant dense<0.000000e+00> : vector<12x128xf32>
    %41 = tpu.matmul %38, %40, %cst_42 {dimension_numbers = #tpu.dot_dimension_numbers<[1], [0], [0], [1], [0, 0, 1, 1], [], []>} : vector<12x32xbf16>, vector<32x128xbf16>, vector<12x128xf32> -> vector<12x128xf32>
    %42 = arith.addf %35, %41 : vector<12x128xf32>
    %c0_43 = arith.constant 0 : index
    %c0_44 = arith.constant 0 : index
    %43 = vector.load %arg3[%c0_43, %c0_44] : memref<1x128xf32, #tpu.memory_space<vmem>>, vector<1x128xf32>
    %44 = vector.broadcast %43 : vector<1x128xf32> to vector<12x128xf32>
    %45 = arith.addf %42, %44 : vector<12x128xf32>
    %cst_45 = arith.constant 0.000000e+00 : f32
    %46 = vector.broadcast %cst_45 : f32 to vector<12x128xf32>
    %47 = arith.cmpf oge, %45, %46 : vector<12x128xf32>
    %cst_46 = arith.constant 1.000000e-01 : f32
    %48 = vector.broadcast %cst_46 : f32 to vector<12x128xf32>
    %49 = arith.mulf %48, %45 : vector<12x128xf32>
    %50 = arith.select %47, %45, %49 : vector<12x128xi1>, vector<12x128xf32>
    %51 = vector.shape_cast %50 : vector<12x128xf32> to vector<6x2x128xf32>
    %c0_47 = arith.constant 0 : index
    %c0_48 = arith.constant 0 : index
    %c0_49 = arith.constant 0 : index
    %52 = vector.load %arg12[%c0_47, %c0_48, %c0_49] : memref<6x2x128xf32, #tpu.memory_space<vmem>>, vector<6x2x128xf32>
    tpu.vector_store %arg12[%c0_47, %c0_48, %c0_49], %51 {strides = array<i32>} : memref<6x2x128xf32, #tpu.memory_space<vmem>>, vector<6x2x128xf32>,
    %cst_50 = arith.constant 0.000000e+00 : f32
    %53 = vector.broadcast %cst_50 : f32 to vector<6x2x128xf32>
    %c0_51 = arith.constant 0 : index
    %c0_52 = arith.constant 0 : index
    %c0_53 = arith.constant 0 : index
    %54 = vector.load %arg18[%c0_51, %c0_52, %c0_53] : memref<6x6x128xf32, #tpu.memory_space<vmem>>, vector<6x2x128xf32>
    tpu.vector_store %arg18[%c0_51, %c0_52, %c0_53], %53 {strides = array<i32>} : memref<6x6x128xf32, #tpu.memory_space<vmem>>, vector<6x2x128xf32>,
    %cst_54 = arith.constant 0.000000e+00 : f32
    %55 = vector.broadcast %cst_54 : f32 to vector<6x2x128xf32>
    %c0_55 = arith.constant 0 : index
    %c4_56 = arith.constant 4 : index
    %c0_57 = arith.constant 0 : index
    %56 = vector.load %arg18[%c0_55, %c4_56, %c0_57] : memref<6x6x128xf32, #tpu.memory_space<vmem>>, vector<6x2x128xf32>
    tpu.vector_store %arg18[%c0_55, %c4_56, %c0_57], %55 {strides = array<i32>} : memref<6x6x128xf32, #tpu.memory_space<vmem>>, vector<6x2x128xf32>,
    %c0_58 = arith.constant 0 : index
    %c0_59 = arith.constant 0 : index
    %c0_60 = arith.constant 0 : index
    %57 = vector.load %arg12[%c0_58, %c0_59, %c0_60] : memref<6x2x128xf32, #tpu.memory_space<vmem>>, vector<6x2x128xf32>
    %c0_61 = arith.constant 0 : index
    %c2_62 = arith.constant 2 : index
    %c0_63 = arith.constant 0 : index
    %58 = vector.load %arg18[%c0_61, %c2_62, %c0_63] : memref<6x6x128xf32, #tpu.memory_space<vmem>>, vector<6x2x128xf32>
    tpu.vector_store %arg18[%c0_61, %c2_62, %c0_63], %57 {strides = array<i32>} : memref<6x6x128xf32, #tpu.memory_space<vmem>>, vector<6x2x128xf32>,
    %cst_64 = arith.constant 0.000000e+00 : f32
    %59 = vector.broadcast %cst_64 : f32 to vector<6x128xf32>
    %c0_65 = arith.constant 0 : index
    %c0_66 = arith.constant 0 : index
    %c0_67 = arith.constant 0 : index
    %60 = vector.load %arg18[%c0_65, %c0_66, %c0_67] : memref<6x6x128xf32, #tpu.memory_space<vmem>>, vector<6x1x128xf32>
    %61 = vector.shape_cast %60 : vector<6x1x128xf32> to vector<6x128xf32>
    %62 = arith.truncf %61 : vector<6x128xf32> to vector<6x128xbf16>
    %c0_68 = arith.constant 0 : index
    %c0_69 = arith.constant 0 : index
    %c0_70 = arith.constant 0 : index
    %63 = vector.load %arg4[%c0_68, %c0_69, %c0_70] : memref<5x128x128xbf16, #tpu.memory_space<vmem>>, vector<1x128x128xbf16>
    %64 = vector.shape_cast %63 : vector<1x128x128xbf16> to vector<128x128xbf16>
    %cst_71 = arith.constant dense<0.000000e+00> : vector<6x128xf32>
    %65 = tpu.matmul %62, %64, %cst_71 {dimension_numbers = #tpu.dot_dimension_numbers<[1], [0], [0], [1], [0, 0, 1, 1], [], []>} : vector<6x128xbf16>, vector<128x128xbf16>, vector<6x128xf32> -> vector<6x128xf32>
    %66 = arith.addf %59, %65 : vector<6x128xf32>
    %c0_72 = arith.constant 0 : index
    %c1_73 = arith.constant 1 : index
    %c0_74 = arith.constant 0 : index
    %67 = vector.load %arg18[%c0_72, %c1_73, %c0_74] : memref<6x6x128xf32, #tpu.memory_space<vmem>>, vector<6x1x128xf32>
    %68 = vector.shape_cast %67 : vector<6x1x128xf32> to vector<6x128xf32>
    %69 = arith.truncf %68 : vector<6x128xf32> to vector<6x128xbf16>
    %c1_75 = arith.constant 1 : index
    %c0_76 = arith.constant 0 : index
    %c0_77 = arith.constant 0 : index
    %70 = vector.load %arg4[%c1_75, %c0_76, %c0_77] : memref<5x128x128xbf16, #tpu.memory_space<vmem>>, vector<1x128x128xbf16>
    %71 = vector.shape_cast %70 : vector<1x128x128xbf16> to vector<128x128xbf16>
    %cst_78 = arith.constant dense<0.000000e+00> : vector<6x128xf32>
    %72 = tpu.matmul %69, %71, %cst_78 {dimension_numbers = #tpu.dot_dimension_numbers<[1], [0], [0], [1], [0, 0, 1, 1], [], []>} : vector<6x128xbf16>, vector<128x128xbf16>, vector<6x128xf32> -> vector<6x128xf32>
    %73 = arith.addf %66, %72 : vector<6x128xf32>
    %c0_79 = arith.constant 0 : index
    %c2_80 = arith.constant 2 : index
    %c0_81 = arith.constant 0 : index
    %74 = vector.load %arg18[%c0_79, %c2_80, %c0_81] : memref<6x6x128xf32, #tpu.memory_space<vmem>>, vector<6x1x128xf32>
    %75 = vector.shape_cast %74 : vector<6x1x128xf32> to vector<6x128xf32>
    %76 = arith.truncf %75 : vector<6x128xf32> to vector<6x128xbf16>
    %c2_82 = arith.constant 2 : index
    %c0_83 = arith.constant 0 : index
    %c0_84 = arith.constant 0 : index
    %77 = vector.load %arg4[%c2_82, %c0_83, %c0_84] : memref<5x128x128xbf16, #tpu.memory_space<vmem>>, vector<1x128x128xbf16>
    %78 = vector.shape_cast %77 : vector<1x128x128xbf16> to vector<128x128xbf16>
    %cst_85 = arith.constant dense<0.000000e+00> : vector<6x128xf32>
    %79 = tpu.matmul %76, %78, %cst_85 {dimension_numbers = #tpu.dot_dimension_numbers<[1], [0], [0], [1], [0, 0, 1, 1], [], []>} : vector<6x128xbf16>, vector<128x128xbf16>, vector<6x128xf32> -> vector<6x128xf32>
    %80 = arith.addf %73, %79 : vector<6x128xf32>
    %c0_86 = arith.constant 0 : index
    %c3_87 = arith.constant 3 : index
    %c0_88 = arith.constant 0 : index
    %81 = vector.load %arg18[%c0_86, %c3_87, %c0_88] : memref<6x6x128xf32, #tpu.memory_space<vmem>>, vector<6x1x128xf32>
    %82 = vector.shape_cast %81 : vector<6x1x128xf32> to vector<6x128xf32>
    %83 = arith.truncf %82 : vector<6x128xf32> to vector<6x128xbf16>
    %c3_89 = arith.constant 3 : index
    %c0_90 = arith.constant 0 : index
    %c0_91 = arith.constant 0 : index
    %84 = vector.load %arg4[%c3_89, %c0_90, %c0_91] : memref<5x128x128xbf16, #tpu.memory_space<vmem>>, vector<1x128x128xbf16>
    %85 = vector.shape_cast %84 : vector<1x128x128xbf16> to vector<128x128xbf16>
    %cst_92 = arith.constant dense<0.000000e+00> : vector<6x128xf32>
    %86 = tpu.matmul %83, %85, %cst_92 {dimension_numbers = #tpu.dot_dimension_numbers<[1], [0], [0], [1], [0, 0, 1, 1], [], []>} : vector<6x128xbf16>, vector<128x128xbf16>, vector<6x128xf32> -> vector<6x128xf32>
    %87 = arith.addf %80, %86 : vector<6x128xf32>
    %c0_93 = arith.constant 0 : index
    %c4_94 = arith.constant 4 : index
    %c0_95 = arith.constant 0 : index
    %88 = vector.load %arg18[%c0_93, %c4_94, %c0_95] : memref<6x6x128xf32, #tpu.memory_space<vmem>>, vector<6x1x128xf32>
    %89 = vector.shape_cast %88 : vector<6x1x128xf32> to vector<6x128xf32>
    %90 = arith.truncf %89 : vector<6x128xf32> to vector<6x128xbf16>
    %c4_96 = arith.constant 4 : index
    %c0_97 = arith.constant 0 : index
    %c0_98 = arith.constant 0 : index
    %91 = vector.load %arg4[%c4_96, %c0_97, %c0_98] : memref<5x128x128xbf16, #tpu.memory_space<vmem>>, vector<1x128x128xbf16>
    %92 = vector.shape_cast %91 : vector<1x128x128xbf16> to vector<128x128xbf16>
    %cst_99 = arith.constant dense<0.000000e+00> : vector<6x128xf32>
    %93 = tpu.matmul %90, %92, %cst_99 {dimension_numbers = #tpu.dot_dimension_numbers<[1], [0], [0], [1], [0, 0, 1, 1], [], []>} : vector<6x128xbf16>, vector<128x128xbf16>, vector<6x128xf32> -> vector<6x128xf32>
    %94 = arith.addf %87, %93 : vector<6x128xf32>
    %c0_100 = arith.constant 0 : index
    %c0_101 = arith.constant 0 : index
    %95 = vector.load %arg5[%c0_100, %c0_101] : memref<1x128xf32, #tpu.memory_space<vmem>>, vector<1x128xf32>
    %96 = vector.broadcast %95 : vector<1x128xf32> to vector<6x128xf32>
    %97 = arith.addf %94, %96 : vector<6x128xf32>
    %cst_102 = arith.constant 0.000000e+00 : f32
    %98 = vector.broadcast %cst_102 : f32 to vector<6x128xf32>
    %99 = arith.cmpf oge, %97, %98 : vector<6x128xf32>
    %cst_103 = arith.constant 1.000000e-01 : f32
    %100 = vector.broadcast %cst_103 : f32 to vector<6x128xf32>
    %101 = arith.mulf %100, %97 : vector<6x128xf32>
    %102 = arith.select %99, %97, %101 : vector<6x128xi1>, vector<6x128xf32>
    %103 = vector.shape_cast %102 : vector<6x128xf32> to vector<6x1x128xf32>
    %c0_104 = arith.constant 0 : index
    %c0_105 = arith.constant 0 : index
    %c0_106 = arith.constant 0 : index
    %104 = vector.load %arg13[%c0_104, %c0_105, %c0_106] : memref<6x1x128xf32, #tpu.memory_space<vmem>>, vector<6x1x128xf32>
    tpu.vector_store %arg13[%c0_104, %c0_105, %c0_106], %103 {strides = array<i32>} : memref<6x1x128xf32, #tpu.memory_space<vmem>>, vector<6x1x128xf32>,
    %cst_107 = arith.constant 0.000000e+00 : f32
    %105 = vector.broadcast %cst_107 : f32 to vector<6x2x128xf32>
    %c0_108 = arith.constant 0 : index
    %c0_109 = arith.constant 0 : index
    %c0_110 = arith.constant 0 : index
    %106 = vector.load %arg19[%c0_108, %c0_109, %c0_110] : memref<6x5x128xf32, #tpu.memory_space<vmem>>, vector<6x2x128xf32>
    tpu.vector_store %arg19[%c0_108, %c0_109, %c0_110], %105 {strides = array<i32>} : memref<6x5x128xf32, #tpu.memory_space<vmem>>, vector<6x2x128xf32>,
    %cst_111 = arith.constant 0.000000e+00 : f32
    %107 = vector.broadcast %cst_111 : f32 to vector<6x2x128xf32>
    %c0_112 = arith.constant 0 : index
    %c3_113 = arith.constant 3 : index
    %c0_114 = arith.constant 0 : index
    %108 = vector.load %arg19[%c0_112, %c3_113, %c0_114] : memref<6x5x128xf32, #tpu.memory_space<vmem>>, vector<6x2x128xf32>
    tpu.vector_store %arg19[%c0_112, %c3_113, %c0_114], %107 {strides = array<i32>} : memref<6x5x128xf32, #tpu.memory_space<vmem>>, vector<6x2x128xf32>,
    %c0_115 = arith.constant 0 : index
    %c0_116 = arith.constant 0 : index
    %c0_117 = arith.constant 0 : index
    %109 = vector.load %arg13[%c0_115, %c0_116, %c0_117] : memref<6x1x128xf32, #tpu.memory_space<vmem>>, vector<6x1x128xf32>
    %c0_118 = arith.constant 0 : index
    %c2_119 = arith.constant 2 : index
    %c0_120 = arith.constant 0 : index
    %110 = vector.load %arg19[%c0_118, %c2_119, %c0_120] : memref<6x5x128xf32, #tpu.memory_space<vmem>>, vector<6x1x128xf32>
    tpu.vector_store %arg19[%c0_118, %c2_119, %c0_120], %109 {strides = array<i32>} : memref<6x5x128xf32, #tpu.memory_space<vmem>>, vector<6x1x128xf32>,
    %cst_121 = arith.constant 0.000000e+00 : f32
    %111 = vector.broadcast %cst_121 : f32 to vector<6x128xf32>
    %c0_122 = arith.constant 0 : index
    %c0_123 = arith.constant 0 : index
    %c0_124 = arith.constant 0 : index
    %112 = vector.load %arg19[%c0_122, %c0_123, %c0_124] : memref<6x5x128xf32, #tpu.memory_space<vmem>>, vector<6x1x128xf32>
    %113 = vector.shape_cast %112 : vector<6x1x128xf32> to vector<6x128xf32>
    %114 = arith.truncf %113 : vector<6x128xf32> to vector<6x128xbf16>
    %c0_125 = arith.constant 0 : index
    %c0_126 = arith.constant 0 : index
    %c0_127 = arith.constant 0 : index
    %115 = vector.load %arg6[%c0_125, %c0_126, %c0_127] : memref<5x128x128xbf16, #tpu.memory_space<vmem>>, vector<1x128x128xbf16>
    %116 = vector.shape_cast %115 : vector<1x128x128xbf16> to vector<128x128xbf16>
    %cst_128 = arith.constant dense<0.000000e+00> : vector<6x128xf32>
    %117 = tpu.matmul %114, %116, %cst_128 {dimension_numbers = #tpu.dot_dimension_numbers<[1], [0], [0], [1], [0, 0, 1, 1], [], []>} : vector<6x128xbf16>, vector<128x128xbf16>, vector<6x128xf32> -> vector<6x128xf32>
    %118 = arith.addf %111, %117 : vector<6x128xf32>
    %c0_129 = arith.constant 0 : index
    %c1_130 = arith.constant 1 : index
    %c0_131 = arith.constant 0 : index
    %119 = vector.load %arg19[%c0_129, %c1_130, %c0_131] : memref<6x5x128xf32, #tpu.memory_space<vmem>>, vector<6x1x128xf32>
    %120 = vector.shape_cast %119 : vector<6x1x128xf32> to vector<6x128xf32>
    %121 = arith.truncf %120 : vector<6x128xf32> to vector<6x128xbf16>
    %c1_132 = arith.constant 1 : index
    %c0_133 = arith.constant 0 : index
    %c0_134 = arith.constant 0 : index
    %122 = vector.load %arg6[%c1_132, %c0_133, %c0_134] : memref<5x128x128xbf16, #tpu.memory_space<vmem>>, vector<1x128x128xbf16>
    %123 = vector.shape_cast %122 : vector<1x128x128xbf16> to vector<128x128xbf16>
    %cst_135 = arith.constant dense<0.000000e+00> : vector<6x128xf32>
    %124 = tpu.matmul %121, %123, %cst_135 {dimension_numbers = #tpu.dot_dimension_numbers<[1], [0], [0], [1], [0, 0, 1, 1], [], []>} : vector<6x128xbf16>, vector<128x128xbf16>, vector<6x128xf32> -> vector<6x128xf32>
    %125 = arith.addf %118, %124 : vector<6x128xf32>
    %c0_136 = arith.constant 0 : index
    %c2_137 = arith.constant 2 : index
    %c0_138 = arith.constant 0 : index
    %126 = vector.load %arg19[%c0_136, %c2_137, %c0_138] : memref<6x5x128xf32, #tpu.memory_space<vmem>>, vector<6x1x128xf32>
    %127 = vector.shape_cast %126 : vector<6x1x128xf32> to vector<6x128xf32>
    %128 = arith.truncf %127 : vector<6x128xf32> to vector<6x128xbf16>
    %c2_139 = arith.constant 2 : index
    %c0_140 = arith.constant 0 : index
    %c0_141 = arith.constant 0 : index
    %129 = vector.load %arg6[%c2_139, %c0_140, %c0_141] : memref<5x128x128xbf16, #tpu.memory_space<vmem>>, vector<1x128x128xbf16>
    %130 = vector.shape_cast %129 : vector<1x128x128xbf16> to vector<128x128xbf16>
    %cst_142 = arith.constant dense<0.000000e+00> : vector<6x128xf32>
    %131 = tpu.matmul %128, %130, %cst_142 {dimension_numbers = #tpu.dot_dimension_numbers<[1], [0], [0], [1], [0, 0, 1, 1], [], []>} : vector<6x128xbf16>, vector<128x128xbf16>, vector<6x128xf32> -> vector<6x128xf32>
    %132 = arith.addf %125, %131 : vector<6x128xf32>
    %c0_143 = arith.constant 0 : index
    %c3_144 = arith.constant 3 : index
    %c0_145 = arith.constant 0 : index
    %133 = vector.load %arg19[%c0_143, %c3_144, %c0_145] : memref<6x5x128xf32, #tpu.memory_space<vmem>>, vector<6x1x128xf32>
    %134 = vector.shape_cast %133 : vector<6x1x128xf32> to vector<6x128xf32>
    %135 = arith.truncf %134 : vector<6x128xf32> to vector<6x128xbf16>
    %c3_146 = arith.constant 3 : index
    %c0_147 = arith.constant 0 : index
    %c0_148 = arith.constant 0 : index
    %136 = vector.load %arg6[%c3_146, %c0_147, %c0_148] : memref<5x128x128xbf16, #tpu.memory_space<vmem>>, vector<1x128x128xbf16>
    %137 = vector.shape_cast %136 : vector<1x128x128xbf16> to vector<128x128xbf16>
    %cst_149 = arith.constant dense<0.000000e+00> : vector<6x128xf32>
    %138 = tpu.matmul %135, %137, %cst_149 {dimension_numbers = #tpu.dot_dimension_numbers<[1], [0], [0], [1], [0, 0, 1, 1], [], []>} : vector<6x128xbf16>, vector<128x128xbf16>, vector<6x128xf32> -> vector<6x128xf32>
    %139 = arith.addf %132, %138 : vector<6x128xf32>
    %c0_150 = arith.constant 0 : index
    %c4_151 = arith.constant 4 : index
    %c0_152 = arith.constant 0 : index
    %140 = vector.load %arg19[%c0_150, %c4_151, %c0_152] : memref<6x5x128xf32, #tpu.memory_space<vmem>>, vector<6x1x128xf32>
    %141 = vector.shape_cast %140 : vector<6x1x128xf32> to vector<6x128xf32>
    %142 = arith.truncf %141 : vector<6x128xf32> to vector<6x128xbf16>
    %c4_153 = arith.constant 4 : index
    %c0_154 = arith.constant 0 : index
    %c0_155 = arith.constant 0 : index
    %143 = vector.load %arg6[%c4_153, %c0_154, %c0_155] : memref<5x128x128xbf16, #tpu.memory_space<vmem>>, vector<1x128x128xbf16>
    %144 = vector.shape_cast %143 : vector<1x128x128xbf16> to vector<128x128xbf16>
    %cst_156 = arith.constant dense<0.000000e+00> : vector<6x128xf32>
    %145 = tpu.matmul %142, %144, %cst_156 {dimension_numbers = #tpu.dot_dimension_numbers<[1], [0], [0], [1], [0, 0, 1, 1], [], []>} : vector<6x128xbf16>, vector<128x128xbf16>, vector<6x128xf32> -> vector<6x128xf32>
    %146 = arith.addf %139, %145 : vector<6x128xf32>
    %c0_157 = arith.constant 0 : index
    %c0_158 = arith.constant 0 : index
    %147 = vector.load %arg7[%c0_157, %c0_158] : memref<1x128xf32, #tpu.memory_space<vmem>>, vector<1x128xf32>
    %148 = vector.broadcast %147 : vector<1x128xf32> to vector<6x128xf32>
    %149 = arith.addf %146, %148 : vector<6x128xf32>
    %cst_159 = arith.constant 0.000000e+00 : f32
    %150 = vector.broadcast %cst_159 : f32 to vector<6x128xf32>
    %151 = arith.cmpf oge, %149, %150 : vector<6x128xf32>
    %cst_160 = arith.constant 1.000000e-01 : f32
    %152 = vector.broadcast %cst_160 : f32 to vector<6x128xf32>
    %153 = arith.mulf %152, %149 : vector<6x128xf32>
    %154 = arith.select %151, %149, %153 : vector<6x128xi1>, vector<6x128xf32>
    %155 = vector.shape_cast %154 : vector<6x128xf32> to vector<6x1x128xf32>
    %c0_161 = arith.constant 0 : index
    %c0_162 = arith.constant 0 : index
    %c0_163 = arith.constant 0 : index
    %156 = vector.load %arg14[%c0_161, %c0_162, %c0_163] : memref<6x1x128xf32, #tpu.memory_space<vmem>>, vector<6x1x128xf32>
    tpu.vector_store %arg14[%c0_161, %c0_162, %c0_163], %155 {strides = array<i32>} : memref<6x1x128xf32, #tpu.memory_space<vmem>>, vector<6x1x128xf32>,
    %cst_164 = arith.constant 0.000000e+00 : f32
    %157 = vector.broadcast %cst_164 : f32 to vector<6x2x128xf32>
    %c0_165 = arith.constant 0 : index
    %c0_166 = arith.constant 0 : index
    %c0_167 = arith.constant 0 : index
    %158 = vector.load %arg20[%c0_165, %c0_166, %c0_167] : memref<6x5x128xf32, #tpu.memory_space<vmem>>, vector<6x2x128xf32>
    tpu.vector_store %arg20[%c0_165, %c0_166, %c0_167], %157 {strides = array<i32>} : memref<6x5x128xf32, #tpu.memory_space<vmem>>, vector<6x2x128xf32>,
    %cst_168 = arith.constant 0.000000e+00 : f32
    %159 = vector.broadcast %cst_168 : f32 to vector<6x2x128xf32>
    %c0_169 = arith.constant 0 : index
    %c3_170 = arith.constant 3 : index
    %c0_171 = arith.constant 0 : index
    %160 = vector.load %arg20[%c0_169, %c3_170, %c0_171] : memref<6x5x128xf32, #tpu.memory_space<vmem>>, vector<6x2x128xf32>
    tpu.vector_store %arg20[%c0_169, %c3_170, %c0_171], %159 {strides = array<i32>} : memref<6x5x128xf32, #tpu.memory_space<vmem>>, vector<6x2x128xf32>,
    %c0_172 = arith.constant 0 : index
    %c0_173 = arith.constant 0 : index
    %c0_174 = arith.constant 0 : index
    %161 = vector.load %arg14[%c0_172, %c0_173, %c0_174] : memref<6x1x128xf32, #tpu.memory_space<vmem>>, vector<6x1x128xf32>
    %c0_175 = arith.constant 0 : index
    %c2_176 = arith.constant 2 : index
    %c0_177 = arith.constant 0 : index
    %162 = vector.load %arg20[%c0_175, %c2_176, %c0_177] : memref<6x5x128xf32, #tpu.memory_space<vmem>>, vector<6x1x128xf32>
    tpu.vector_store %arg20[%c0_175, %c2_176, %c0_177], %161 {strides = array<i32>} : memref<6x5x128xf32, #tpu.memory_space<vmem>>, vector<6x1x128xf32>,
    %cst_178 = arith.constant 0.000000e+00 : f32
    %163 = vector.broadcast %cst_178 : f32 to vector<6x128xf32>
    %c0_179 = arith.constant 0 : index
    %c0_180 = arith.constant 0 : index
    %c0_181 = arith.constant 0 : index
    %164 = vector.load %arg20[%c0_179, %c0_180, %c0_181] : memref<6x5x128xf32, #tpu.memory_space<vmem>>, vector<6x1x128xf32>
    %165 = vector.shape_cast %164 : vector<6x1x128xf32> to vector<6x128xf32>
    %166 = arith.truncf %165 : vector<6x128xf32> to vector<6x128xbf16>
    %c0_182 = arith.constant 0 : index
    %c0_183 = arith.constant 0 : index
    %c0_184 = arith.constant 0 : index
    %167 = vector.load %arg8[%c0_182, %c0_183, %c0_184] : memref<5x128x128xbf16, #tpu.memory_space<vmem>>, vector<1x128x128xbf16>
    %168 = vector.shape_cast %167 : vector<1x128x128xbf16> to vector<128x128xbf16>
    %cst_185 = arith.constant dense<0.000000e+00> : vector<6x128xf32>
    %169 = tpu.matmul %166, %168, %cst_185 {dimension_numbers = #tpu.dot_dimension_numbers<[1], [0], [0], [1], [0, 0, 1, 1], [], []>} : vector<6x128xbf16>, vector<128x128xbf16>, vector<6x128xf32> -> vector<6x128xf32>
    %170 = arith.addf %163, %169 : vector<6x128xf32>
    %c0_186 = arith.constant 0 : index
    %c1_187 = arith.constant 1 : index
    %c0_188 = arith.constant 0 : index
    %171 = vector.load %arg20[%c0_186, %c1_187, %c0_188] : memref<6x5x128xf32, #tpu.memory_space<vmem>>, vector<6x1x128xf32>
    %172 = vector.shape_cast %171 : vector<6x1x128xf32> to vector<6x128xf32>
    %173 = arith.truncf %172 : vector<6x128xf32> to vector<6x128xbf16>
    %c1_189 = arith.constant 1 : index
    %c0_190 = arith.constant 0 : index
    %c0_191 = arith.constant 0 : index
    %174 = vector.load %arg8[%c1_189, %c0_190, %c0_191] : memref<5x128x128xbf16, #tpu.memory_space<vmem>>, vector<1x128x128xbf16>
    %175 = vector.shape_cast %174 : vector<1x128x128xbf16> to vector<128x128xbf16>
    %cst_192 = arith.constant dense<0.000000e+00> : vector<6x128xf32>
    %176 = tpu.matmul %173, %175, %cst_192 {dimension_numbers = #tpu.dot_dimension_numbers<[1], [0], [0], [1], [0, 0, 1, 1], [], []>} : vector<6x128xbf16>, vector<128x128xbf16>, vector<6x128xf32> -> vector<6x128xf32>
    %177 = arith.addf %170, %176 : vector<6x128xf32>
    %c0_193 = arith.constant 0 : index
    %c2_194 = arith.constant 2 : index
    %c0_195 = arith.constant 0 : index
    %178 = vector.load %arg20[%c0_193, %c2_194, %c0_195] : memref<6x5x128xf32, #tpu.memory_space<vmem>>, vector<6x1x128xf32>
    %179 = vector.shape_cast %178 : vector<6x1x128xf32> to vector<6x128xf32>
    %180 = arith.truncf %179 : vector<6x128xf32> to vector<6x128xbf16>
    %c2_196 = arith.constant 2 : index
    %c0_197 = arith.constant 0 : index
    %c0_198 = arith.constant 0 : index
    %181 = vector.load %arg8[%c2_196, %c0_197, %c0_198] : memref<5x128x128xbf16, #tpu.memory_space<vmem>>, vector<1x128x128xbf16>
    %182 = vector.shape_cast %181 : vector<1x128x128xbf16> to vector<128x128xbf16>
    %cst_199 = arith.constant dense<0.000000e+00> : vector<6x128xf32>
    %183 = tpu.matmul %180, %182, %cst_199 {dimension_numbers = #tpu.dot_dimension_numbers<[1], [0], [0], [1], [0, 0, 1, 1], [], []>} : vector<6x128xbf16>, vector<128x128xbf16>, vector<6x128xf32> -> vector<6x128xf32>
    %184 = arith.addf %177, %183 : vector<6x128xf32>
    %c0_200 = arith.constant 0 : index
    %c3_201 = arith.constant 3 : index
    %c0_202 = arith.constant 0 : index
    %185 = vector.load %arg20[%c0_200, %c3_201, %c0_202] : memref<6x5x128xf32, #tpu.memory_space<vmem>>, vector<6x1x128xf32>
    %186 = vector.shape_cast %185 : vector<6x1x128xf32> to vector<6x128xf32>
    %187 = arith.truncf %186 : vector<6x128xf32> to vector<6x128xbf16>
    %c3_203 = arith.constant 3 : index
    %c0_204 = arith.constant 0 : index
    %c0_205 = arith.constant 0 : index
    %188 = vector.load %arg8[%c3_203, %c0_204, %c0_205] : memref<5x128x128xbf16, #tpu.memory_space<vmem>>, vector<1x128x128xbf16>
    %189 = vector.shape_cast %188 : vector<1x128x128xbf16> to vector<128x128xbf16>
    %cst_206 = arith.constant dense<0.000000e+00> : vector<6x128xf32>
    %190 = tpu.matmul %187, %189, %cst_206 {dimension_numbers = #tpu.dot_dimension_numbers<[1], [0], [0], [1], [0, 0, 1, 1], [], []>} : vector<6x128xbf16>, vector<128x128xbf16>, vector<6x128xf32> -> vector<6x128xf32>
    %191 = arith.addf %184, %190 : vector<6x128xf32>
    %c0_207 = arith.constant 0 : index
    %c4_208 = arith.constant 4 : index
    %c0_209 = arith.constant 0 : index
    %192 = vector.load %arg20[%c0_207, %c4_208, %c0_209] : memref<6x5x128xf32, #tpu.memory_space<vmem>>, vector<6x1x128xf32>
    %193 = vector.shape_cast %192 : vector<6x1x128xf32> to vector<6x128xf32>
    %194 = arith.truncf %193 : vector<6x128xf32> to vector<6x128xbf16>
    %c4_210 = arith.constant 4 : index
    %c0_211 = arith.constant 0 : index
    %c0_212 = arith.constant 0 : index
    %195 = vector.load %arg8[%c4_210, %c0_211, %c0_212] : memref<5x128x128xbf16, #tpu.memory_space<vmem>>, vector<1x128x128xbf16>
    %196 = vector.shape_cast %195 : vector<1x128x128xbf16> to vector<128x128xbf16>
    %cst_213 = arith.constant dense<0.000000e+00> : vector<6x128xf32>
    %197 = tpu.matmul %194, %196, %cst_213 {dimension_numbers = #tpu.dot_dimension_numbers<[1], [0], [0], [1], [0, 0, 1, 1], [], []>} : vector<6x128xbf16>, vector<128x128xbf16>, vector<6x128xf32> -> vector<6x128xf32>
    %198 = arith.addf %191, %197 : vector<6x128xf32>
    %c0_214 = arith.constant 0 : index
    %c0_215 = arith.constant 0 : index
    %199 = vector.load %arg9[%c0_214, %c0_215] : memref<1x128xf32, #tpu.memory_space<vmem>>, vector<1x128xf32>
    %200 = vector.broadcast %199 : vector<1x128xf32> to vector<6x128xf32>
    %201 = arith.addf %198, %200 : vector<6x128xf32>
    %cst_216 = arith.constant 0.000000e+00 : f32
    %202 = vector.broadcast %cst_216 : f32 to vector<6x128xf32>
    %203 = arith.cmpf oge, %201, %202 : vector<6x128xf32>
    %cst_217 = arith.constant 1.000000e-01 : f32
    %204 = vector.broadcast %cst_217 : f32 to vector<6x128xf32>
    %205 = arith.mulf %204, %201 : vector<6x128xf32>
    %206 = arith.select %203, %201, %205 : vector<6x128xi1>, vector<6x128xf32>
    %207 = vector.shape_cast %206 : vector<6x128xf32> to vector<6x1x128xf32>
    %c0_218 = arith.constant 0 : index
    %c0_219 = arith.constant 0 : index
    %c0_220 = arith.constant 0 : index
    %208 = vector.load %arg15[%c0_218, %c0_219, %c0_220] : memref<6x1x128xf32, #tpu.memory_space<vmem>>, vector<6x1x128xf32>
    tpu.vector_store %arg15[%c0_218, %c0_219, %c0_220], %207 {strides = array<i32>} : memref<6x1x128xf32, #tpu.memory_space<vmem>>, vector<6x1x128xf32>,
    %cst_221 = arith.constant 0.000000e+00 : f32
    %209 = vector.broadcast %cst_221 : f32 to vector<6x1x128xf32>
    %c0_222 = arith.constant 0 : index
    %c0_223 = arith.constant 0 : index
    %c0_224 = arith.constant 0 : index
    %210 = vector.load %arg21[%c0_222, %c0_223, %c0_224] : memref<6x3x128xf32, #tpu.memory_space<vmem>>, vector<6x1x128xf32>
    tpu.vector_store %arg21[%c0_222, %c0_223, %c0_224], %209 {strides = array<i32>} : memref<6x3x128xf32, #tpu.memory_space<vmem>>, vector<6x1x128xf32>,
    %cst_225 = arith.constant 0.000000e+00 : f32
    %211 = vector.broadcast %cst_225 : f32 to vector<6x1x128xf32>
    %c0_226 = arith.constant 0 : index
    %c2_227 = arith.constant 2 : index
    %c0_228 = arith.constant 0 : index
    %212 = vector.load %arg21[%c0_226, %c2_227, %c0_228] : memref<6x3x128xf32, #tpu.memory_space<vmem>>, vector<6x1x128xf32>
    tpu.vector_store %arg21[%c0_226, %c2_227, %c0_228], %211 {strides = array<i32>} : memref<6x3x128xf32, #tpu.memory_space<vmem>>, vector<6x1x128xf32>,
    %c0_229 = arith.constant 0 : index
    %c0_230 = arith.constant 0 : index
    %c0_231 = arith.constant 0 : index
    %213 = vector.load %arg15[%c0_229, %c0_230, %c0_231] : memref<6x1x128xf32, #tpu.memory_space<vmem>>, vector<6x1x128xf32>
    %c0_232 = arith.constant 0 : index
    %c1_233 = arith.constant 1 : index
    %c0_234 = arith.constant 0 : index
    %214 = vector.load %arg21[%c0_232, %c1_233, %c0_234] : memref<6x3x128xf32, #tpu.memory_space<vmem>>, vector<6x1x128xf32>
    tpu.vector_store %arg21[%c0_232, %c1_233, %c0_234], %213 {strides = array<i32>} : memref<6x3x128xf32, #tpu.memory_space<vmem>>, vector<6x1x128xf32>,
    %c0_235 = arith.constant 0 : index
    %c0_236 = arith.constant 0 : index
    %215 = vector.load %arg10[%c0_235, %c0_236] : memref<2x128xf32, #tpu.memory_space<vmem>>, vector<2x128xf32>
    %cst_237 = arith.constant 0.000000e+00 : f32
    %216 = vector.broadcast %cst_237 : f32 to vector<6x2x128xf32>
    %c0_238 = arith.constant 0 : index
    %c0_239 = arith.constant 0 : index
    %c0_240 = arith.constant 0 : index
    %217 = vector.load %arg21[%c0_238, %c0_239, %c0_240] : memref<6x3x128xf32, #tpu.memory_space<vmem>>, vector<6x2x128xf32>
    %218 = vector.extract_strided_slice %215 {offsets = [0, 0], sizes = [1, 128], strides = [1, 1]} : vector<2x128xf32> to vector<1x128xf32>
    %219 = vector.shape_cast %218 : vector<1x128xf32> to vector<128xf32>
    %220 = vector.shape_cast %219 : vector<128xf32> to vector<1x1x128xf32>
    %221 = vector.broadcast %220 : vector<1x1x128xf32> to vector<6x2x128xf32>
    %222 = arith.mulf %217, %221 : vector<6x2x128xf32>
    %223 = arith.addf %216, %222 : vector<6x2x128xf32>
    %c0_241 = arith.constant 0 : index
    %c1_242 = arith.constant 1 : index
    %c0_243 = arith.constant 0 : index
    %224 = vector.load %arg21[%c0_241, %c1_242, %c0_243] : memref<6x3x128xf32, #tpu.memory_space<vmem>>, vector<6x2x128xf32>
    %225 = vector.extract_strided_slice %215 {offsets = [1, 0], sizes = [1, 128], strides = [1, 1]} : vector<2x128xf32> to vector<1x128xf32>
    %226 = vector.shape_cast %225 : vector<1x128xf32> to vector<128xf32>
    %227 = vector.shape_cast %226 : vector<128xf32> to vector<1x1x128xf32>
    %228 = vector.broadcast %227 : vector<1x1x128xf32> to vector<6x2x128xf32>
    %229 = arith.mulf %224, %228 : vector<6x2x128xf32>
    %230 = arith.addf %223, %229 : vector<6x2x128xf32>
    %cst_244 = arith.constant dense<0.000000e+00> : vector<6x2xf32>
    %231 = vector.multi_reduction <add>, %230, %cst_244 [2] : vector<6x2x128xf32> to vector<6x2xf32>
    %c0_245 = arith.constant 0 : index
    %232 = memref.load %arg11[%c0_245] : memref<1xf32, #tpu.memory_space<smem>>
    %233 = vector.broadcast %232 : f32 to vector<6x2xf32>
    %234 = arith.addf %231, %233 : vector<6x2xf32>
    %c0_246 = arith.constant 0 : index
    %c0_247 = arith.constant 0 : index
    %235 = vector.load %arg16[%c0_246, %c0_247] : memref<6x2xf32, #tpu.memory_space<vmem>>, vector<6x2xf32>
    tpu.vector_store %arg16[%c0_246, %c0_247], %234 {strides = array<i32>} : memref<6x2xf32, #tpu.memory_space<vmem>>, vector<6x2xf32>,
    return
  }
  func.func @transform_0(%arg0: i32) -> (i32, i32, i32) {
    %c0_i32 = arith.constant 0 : i32
    %c0_i32_0 = arith.constant 0 : i32
    %c0_i32_1 = arith.constant 0 : i32
    %c0_i32_2 = arith.constant 0 : i32
    return %c0_i32, %c0_i32_0, %c0_i32_1 : i32, i32, i32
  }
  func.func @transform_1(%arg0: i32) -> (i32, i32, i32) {
    %c0_i32 = arith.constant 0 : i32
    %c0_i32_0 = arith.constant 0 : i32
    %c0_i32_1 = arith.constant 0 : i32
    %c0_i32_2 = arith.constant 0 : i32
    return %c0_i32, %c0_i32_0, %c0_i32_1 : i32, i32, i32
  }
  func.func @transform_2(%arg0: i32) -> (i32, i32) {
    %c0_i32 = arith.constant 0 : i32
    %c0_i32_0 = arith.constant 0 : i32
    %c0_i32_1 = arith.constant 0 : i32
    return %c0_i32, %c0_i32_0 : i32, i32
  }
  func.func @transform_3(%arg0: i32) -> (i32, i32, i32) {
    %c0_i32 = arith.constant 0 : i32
    %c0_i32_0 = arith.constant 0 : i32
    %c0_i32_1 = arith.constant 0 : i32
    %c0_i32_2 = arith.constant 0 : i32
    return %c0_i32, %c0_i32_0, %c0_i32_1 : i32, i32, i32
  }
  func.func @transform_4(%arg0: i32) -> (i32, i32) {
    %c0_i32 = arith.constant 0 : i32
    %c0_i32_0 = arith.constant 0 : i32
    %c0_i32_1 = arith.constant 0 : i32
    return %c0_i32, %c0_i32_0 : i32, i32
  }
  func.func @transform_5(%arg0: i32) -> (i32, i32, i32) {
    %c0_i32 = arith.constant 0 : i32
    %c0_i32_0 = arith.constant 0 : i32
    %c0_i32_1 = arith.constant 0 : i32
    %c0_i32_2 = arith.constant 0 : i32
    return %c0_i32, %c0_i32_0, %c0_i32_1 : i32, i32, i32
  }
  func.func @transform_6(%arg0: i32) -> (i32, i32) {
    %c0_i32 = arith.constant 0 : i32
    %c0_i32_0 = arith.constant 0 : i32
    %c0_i32_1 = arith.constant 0 : i32
    return %c0_i32, %c0_i32_0 : i32, i32
  }
  func.func @transform_7(%arg0: i32) -> (i32, i32, i32) {
    %c0_i32 = arith.constant 0 : i32
    %c0_i32_0 = arith.constant 0 : i32
    %c0_i32_1 = arith.constant 0 : i32
    %c0_i32_2 = arith.constant 0 : i32
    return %c0_i32, %c0_i32_0, %c0_i32_1 : i32, i32, i32
  }
  func.func @transform_8(%arg0: i32) -> (i32, i32) {
    %c0_i32 = arith.constant 0 : i32
    %c0_i32_0 = arith.constant 0 : i32
    %c0_i32_1 = arith.constant 0 : i32
    return %c0_i32, %c0_i32_0 : i32, i32
  }
  func.func @transform_9(%arg0: i32) -> (i32, i32) {
    %c0_i32 = arith.constant 0 : i32
    %c0_i32_0 = arith.constant 0 : i32
    %c0_i32_1 = arith.constant 0 : i32
    return %c0_i32, %c0_i32_0 : i32, i32
  }
  func.func @transform_10(%arg0: i32) -> i32 {
    %c0_i32 = arith.constant 0 : i32
    %c0_i32_0 = arith.constant 0 : i32
    return %c0_i32 : i32
  }
  func.func @transform_11(%arg0: i32) -> (i32, i32, i32) {
    %c0_i32 = arith.constant 0 : i32
    %c0_i32_0 = arith.constant 0 : i32
    %c0_i32_1 = arith.constant 0 : i32
    %c0_i32_2 = arith.constant 0 : i32
    return %c0_i32, %c0_i32_0, %c0_i32_1 : i32, i32, i32
  }
  func.func @transform_12(%arg0: i32) -> (i32, i32, i32) {
    %c0_i32 = arith.constant 0 : i32
    %c0_i32_0 = arith.constant 0 : i32
    %c0_i32_1 = arith.constant 0 : i32
    %c0_i32_2 = arith.constant 0 : i32
    return %c0_i32, %c0_i32_0, %c0_i32_1 : i32, i32, i32
  }
  func.func @transform_13(%arg0: i32) -> (i32, i32, i32) {
    %c0_i32 = arith.constant 0 : i32
    %c0_i32_0 = arith.constant 0 : i32
    %c0_i32_1 = arith.constant 0 : i32
    %c0_i32_2 = arith.constant 0 : i32
    return %c0_i32, %c0_i32_0, %c0_i32_1 : i32, i32, i32
  }
  func.func @transform_14(%arg0: i32) -> (i32, i32, i32) {
    %c0_i32 = arith.constant 0 : i32
    %c0_i32_0 = arith.constant 0 : i32
    %c0_i32_1 = arith.constant 0 : i32
    %c0_i32_2 = arith.constant 0 : i32
    return %c0_i32, %c0_i32_0, %c0_i32_1 : i32, i32, i32
  }
  func.func @transform_15(%arg0: i32) -> (i32, i32) {
    %c0_i32 = arith.constant 0 : i32
    %c0_i32_0 = arith.constant 0 : i32
    %c0_i32_1 = arith.constant 0 : i32
    return %c0_i32, %c0_i32_0 : i32, i32
  }
}

</mosaic_0001>

<llo_original>
// kernel: _lambda_.1
$region0: #{_lambda_.1}
  #allocation0 [shape = 'u32[]', space=smem, size = 0x4, offset = 0x4, fixed_abs, tag = 'smem constant byte address 0x4 - core index']
  #allocation1 [shape = 'u32[144,128]{1,0:T(1,128)}', space=vmem, size = 0x12000, scoped, tag = 'internal scratch']
  #allocation2 [shape = 'f32[6,10,32]{2,1,0:T(8,128)}', space=vmem, size = 0xc000, scoped, tag = 'scratch operand']
  #allocation3 [shape = 'f32[6,6,128]{2,1,0:T(8,128)}', space=vmem, size = 0x6000, scoped, tag = 'scratch operand']
  #allocation4 [shape = 'f32[6,5,128]{2,1,0:T(8,128)}', space=vmem, size = 0x6000, scoped, tag = 'scratch operand']
  #allocation5 [shape = 'f32[6,5,128]{2,1,0:T(8,128)}', space=vmem, size = 0x6000, scoped, tag = 'scratch operand']
  #allocation6 [shape = 'f32[6,3,128]{2,1,0:T(4,128)}', space=vmem, size = 0x3000, scoped, tag = 'scratch operand']
  #allocation7 [shape = 'f32[1]{0:T(128)S(6)}', space=smem, size = 0x200, scoped, tag = 'scoped memory for _lambda_.1']
  %s0 = inlined_call_operand.vmem [shape: bf16[6,6,32], index: 0, kind: input, shape index: {}]
  %s1 = inlined_call_operand.hbm [shape: bf16[5,32,128], index: 1, kind: input, shape index: {}]
  %s2 = inlined_call_operand.vmem [shape: f32[1,128], index: 2, kind: input, shape index: {}]
  %s3 = inlined_call_operand.hbm [shape: bf16[5,128,128], index: 3, kind: input, shape index: {}]
  %s4 = inlined_call_operand.vmem [shape: f32[1,128], index: 4, kind: input, shape index: {}]
  %s5 = inlined_call_operand.hbm [shape: bf16[5,128,128], index: 5, kind: input, shape index: {}]
  %s6 = inlined_call_operand.vmem [shape: f32[1,128], index: 6, kind: input, shape index: {}]
  %s7 = inlined_call_operand.vmem [shape: bf16[5,128,128], index: 7, kind: input, shape index: {}]
  %s8 = inlined_call_operand.vmem [shape: f32[1,128], index: 8, kind: input, shape index: {}]
  %s9 = inlined_call_operand.vmem [shape: f32[2,128], index: 9, kind: input, shape index: {}]
  %s10 = inlined_call_operand.<no memory space> [shape: f32[1], index: 10, kind: input, shape index: {}]
  %s11 = inlined_call_operand.hbm [shape: f32[6,2,128], index: 11, kind: output, shape index: {0}]
  %s12 = inlined_call_operand.hbm [shape: f32[6,1,128], index: 12, kind: output, shape index: {1}]
  %s13 = inlined_call_operand.hbm [shape: f32[6,1,128], index: 13, kind: output, shape index: {2}]
  %s14 = inlined_call_operand.hbm [shape: f32[6,1,128], index: 14, kind: output, shape index: {3}]
  %s15 = inlined_call_operand.vmem [shape: f32[6,2], index: 15, kind: output, shape index: {4}]
  %16 = xla_tuple %s11, %s12, %s13, %s14, %s15
  %s17 = sld [smem:[#allocation0]]
  $region98: #{_lambda_.1} parent=0
    _
  %s19 = ssub.s32 1, %s17
  %s20 = scalar_select 0, %s19, %s17
  %21 = sst [smem:[#allocation7]] %s10
  $region1: #{_lambda_.1} parent=0
    #allocation8 [shape = 'u8[40960]{0}', space=vmem, size = 0xa000, scoped, tag = 'input window, operand 1, single buffered']
    #allocation9 [shape = 's32[1]{0}', space=sflag, size = 0x4, scoped, tag = 'scoped memory for _lambda_.1']
    #allocation10 [shape = 's32[1]{0}', space=sflag, size = 0x4, scoped, tag = 'scoped memory for _lambda_.1']
    #allocation11 [shape = 'u8[163840]{0}', space=vmem, size = 0x28000, scoped, tag = 'input window, operand 3, single buffered']
    #allocation12 [shape = 's32[1]{0}', space=sflag, size = 0x4, scoped, tag = 'scoped memory for _lambda_.1']
    #allocation13 [shape = 'u8[163840]{0}', space=vmem, size = 0x28000, scoped, tag = 'input window, operand 5, single buffered']
    #allocation14 [shape = 'u8[6144]{0}', space=vmem, size = 0x1800, scoped, tag = 'output window, operand 0, single buffered']
    #allocation15 [shape = 'u8[3072]{0}', space=vmem, size = 0xc00, scoped, tag = 'output window, operand 1, single buffered']
    #allocation16 [shape = 's32[1]{0}', space=sflag, size = 0x4, scoped, tag = 'scoped memory for _lambda_.1']
    #allocation17 [shape = 'u8[3072]{0}', space=vmem, size = 0xc00, scoped, tag = 'output window, operand 2, single buffered']
    #allocation18 [shape = 'u8[3072]{0}', space=vmem, size = 0xc00, scoped, tag = 'output window, operand 3, single buffered']
    #allocation19 [shape = 's32[1]{0}', space=sflag, size = 0x4, scoped, tag = 'scoped memory for _lambda_.1']
    %22 = vsyncpa [#allocation9], 0
    %23 = vsyncpa [#allocation12], 0
    %24 = vsyncpa [#allocation10], 0
    %25 = vsyncpa [#allocation16], 0
    %26 = vsyncpa [#allocation19], 0
    // Predicated region
    $region2: #{_lambda_.1} parent=1 // pred_check
      _
    $region3: #{_lambda_.1} parent=1 // pred_check_branch
      %28 = sbr.rel (0) target = $region5
    $region4: #{_lambda_.1} parent=1 // pred_region
      _
    $region5: #{_lambda_.1} parent=1 // pred_fallthru
      _
    // Predicated region
    $region6: #{_lambda_.1} parent=1 // pred_check
      _
    $region7: #{_lambda_.1} parent=1 // pred_check_branch
      %30 = sbr.rel (0) target = $region9
    $region8: #{_lambda_.1} parent=1 // pred_region
      %s32 = ssub.s32 1280, 1280
      %33 = vsyncadd [#allocation9], %s32
      %s34 = sshll.u32 [#allocation8], 4
      %s35 = int_to_ptr.vmem [resolvable:$true] %s34
      %40 = dma.hbm_to_vmem [thread:$0]  %s1, 1280, %s35, [#allocation9], 64, 64, 4
    $region9: #{_lambda_.1} parent=1 // pred_fallthru
      _
    // Predicated region
    $region10: #{_lambda_.1} parent=1 // pred_check
      _
    $region11: #{_lambda_.1} parent=1 // pred_check_branch
      %42 = sbr.rel (0) target = $region13
    $region12: #{_lambda_.1} parent=1 // pred_region
      _
    $region13: #{_lambda_.1} parent=1 // pred_fallthru
      _
    // Predicated region
    $region14: #{_lambda_.1} parent=1 // pred_check
      _
    $region15: #{_lambda_.1} parent=1 // pred_check_branch
      %44 = sbr.rel (0) target = $region17
    $region16: #{_lambda_.1} parent=1 // pred_region
      %s46 = ssub.s32 5120, 5120
      %47 = vsyncadd [#allocation12], %s46
      %s48 = sshll.u32 [#allocation11], 4
      %s49 = int_to_ptr.vmem [resolvable:$true] %s48
      %54 = dma.hbm_to_vmem [thread:$0]  %s3, 5120, %s49, [#allocation12], 64, 64, 4
    $region17: #{_lambda_.1} parent=1 // pred_fallthru
      _
    // Predicated region
    $region18: #{_lambda_.1} parent=1 // pred_check
      _
    $region19: #{_lambda_.1} parent=1 // pred_check_branch
      %56 = sbr.rel (0) target = $region21
    $region20: #{_lambda_.1} parent=1 // pred_region
      _
    $region21: #{_lambda_.1} parent=1 // pred_fallthru
      _
    // Predicated region
    $region22: #{_lambda_.1} parent=1 // pred_check
      _
    $region23: #{_lambda_.1} parent=1 // pred_check_branch
      %58 = sbr.rel (0) target = $region25
    $region24: #{_lambda_.1} parent=1 // pred_region
      %s60 = ssub.s32 5120, 5120
      %61 = vsyncadd [#allocation12], %s60
      %s62 = sshll.u32 [#allocation13], 4
      %s63 = int_to_ptr.vmem [resolvable:$true] %s62
      %68 = dma.hbm_to_vmem [thread:$0]  %s5, 5120, %s63, [#allocation12], 64, 64, 4
    $region25: #{_lambda_.1} parent=1 // pred_fallthru
      _
    // Predicated region
    $region26: #{_lambda_.1} parent=1 // pred_check
      _
    $region27: #{_lambda_.1} parent=1 // pred_check_branch
      %70 = sbr.rel (0) target = $region29
    $region28: #{_lambda_.1} parent=1 // pred_region
      _
    $region29: #{_lambda_.1} parent=1 // pred_fallthru
      _
    // Predicated region
    $region30: #{_lambda_.1} parent=1 // pred_check
      _
    $region31: #{_lambda_.1} parent=1 // pred_check_branch
      %72 = sbr.rel (0) target = $region33
    $region32: #{_lambda_.1} parent=1 // pred_region
      _
    $region33: #{_lambda_.1} parent=1 // pred_fallthru
      _
    // Predicated region
    $region34: #{_lambda_.1} parent=1 // pred_check
      _
    $region35: #{_lambda_.1} parent=1 // pred_check_branch
      %74 = sbr.rel (0) target = $region37
    $region36: #{_lambda_.1} parent=1 // pred_region
      _
    $region37: #{_lambda_.1} parent=1 // pred_fallthru
      _
    // Predicated region
    $region38: #{_lambda_.1} parent=1 // pred_check
      _
    $region39: #{_lambda_.1} parent=1 // pred_check_branch
      %76 = sbr.rel (0) target = $region41
    $region40: #{_lambda_.1} parent=1 // pred_region
      _
    $region41: #{_lambda_.1} parent=1 // pred_fallthru
      _
    // Predicated region
    $region42: #{_lambda_.1} parent=1 // pred_check
      _
    $region43: #{_lambda_.1} parent=1 // pred_check_branch
      %78 = sbr.rel (0) target = $region45
    $region44: #{_lambda_.1} parent=1 // pred_region
      _
    $region45: #{_lambda_.1} parent=1 // pred_fallthru
      _
    // Predicated region
    $region46: #{_lambda_.1} parent=1 // pred_check
      _
    $region47: #{_lambda_.1} parent=1 // pred_check_branch
      %80 = sbr.rel (0) target = $region49
    $region48: #{_lambda_.1} parent=1 // pred_region
      %81 = dma.done [#allocation9], 1280
    $region49: #{_lambda_.1} parent=1 // pred_fallthru
      _
    // Predicated region
    $region50: #{_lambda_.1} parent=1 // pred_check
      _
    $region51: #{_lambda_.1} parent=1 // pred_check_branch
      %83 = sbr.rel (0) target = $region53
    $region52: #{_lambda_.1} parent=1 // pred_region
      %84 = dma.done [#allocation12], 5120
    $region53: #{_lambda_.1} parent=1 // pred_fallthru
      _
    // Predicated region
    $region54: #{_lambda_.1} parent=1 // pred_check
      _
    $region55: #{_lambda_.1} parent=1 // pred_check_branch
      %86 = sbr.rel (0) target = $region57
    $region56: #{_lambda_.1} parent=1 // pred_region
      %87 = dma.done [#allocation12], 5120
    $region57: #{_lambda_.1} parent=1 // pred_fallthru
      _
    %vm89 = vcmask 254976
    %90 = vst.msk [vmem:[#allocation2] sm:$0x3] %vm89, 0.0
    %91 = vst.msk [vmem:[#allocation2 + $0x10] sm:$0x3] %vm89, 0.0
    %92 = vst.msk [vmem:[#allocation2 + $0x20] sm:$0x3] %vm89, 0.0
    %93 = vst.msk [vmem:[#allocation2 + $0x30] sm:$0x3] %vm89, 0.0
    %94 = vst.msk [vmem:[#allocation2 + $0x40] sm:$0x3] %vm89, 0.0
    %95 = vst.msk [vmem:[#allocation2 + $0x50] sm:$0x3] %vm89, 0.0
    %96 = vst.msk [vmem:[#allocation2 + $0x8] sm:$0x3] %vm89, 0.0
    %97 = vst.msk [vmem:[#allocation2 + $0x18] sm:$0x3] %vm89, 0.0
    %98 = vst.msk [vmem:[#allocation2 + $0x28] sm:$0x3] %vm89, 0.0
    %99 = vst.msk [vmem:[#allocation2 + $0x38] sm:$0x3] %vm89, 0.0
    %100 = vst.msk [vmem:[#allocation2 + $0x48] sm:$0x3] %vm89, 0.0
    %101 = vst.msk [vmem:[#allocation2 + $0x58] sm:$0x3] %vm89, 0.0
    %v102 = vld [vmem:[%s0] sm:$0x7]
    %v103 = vld [vmem:[%s0 + $0x4] sm:$0x7]
    %v104 = vld [vmem:[%s0 + $0x8] sm:$0x7]
    %v105 = vld [vmem:[%s0 + $0xc] sm:$0x7]
    %v106 = vld [vmem:[%s0 + $0x10] sm:$0x7]
    %v107 = vld [vmem:[%s0 + $0x14] sm:$0x7]
    %v108 = vunpack.c.l.bf16 %v102
    %v109 = vunpack.c.l.bf16 %v103
    %v110 = vunpack.c.l.bf16 %v104
    %v111 = vunpack.c.l.bf16 %v105
    %v112 = vunpack.c.l.bf16 %v106
    %v113 = vunpack.c.l.bf16 %v107
    %vm114 = vcmask 259072
    %115 = vst.msk [vmem:[#allocation2 + $0x2] sm:$0x3f] %vm114, %v108
    %116 = vst.msk [vmem:[#allocation2 + $0x12] sm:$0x3f] %vm114, %v109
    %117 = vst.msk [vmem:[#allocation2 + $0x22] sm:$0x3f] %vm114, %v110
    %118 = vst.msk [vmem:[#allocation2 + $0x32] sm:$0x3f] %vm114, %v111
    %119 = vst.msk [vmem:[#allocation2 + $0x42] sm:$0x3f] %vm114, %v112
    %120 = vst.msk [vmem:[#allocation2 + $0x52] sm:$0x3f] %vm114, %v113
    %v121 = vld [vmem:[#allocation2] ss:$3 sm:$0x3]
    %s122 = scalar_lea.vmem [#allocation2], 16
    %v123 = vld [vmem:[%s122] ss:$3 sm:$0x3]
    %s124 = scalar_lea.vmem [#allocation2], 32
    %v125 = vld [vmem:[%s124] ss:$3 sm:$0x3]
    %s126 = scalar_lea.vmem [#allocation2], 48
    %v127 = vld [vmem:[%s126] ss:$3 sm:$0x3]
    %s128 = scalar_lea.vmem [#allocation2], 64
    %v129 = vld [vmem:[%s128] ss:$3 sm:$0x3]
    %s130 = scalar_lea.vmem [#allocation2], 80
    %v131 = vld [vmem:[%s130] ss:$3 sm:$0x3]
    %v138 = vcombine.low %v121, %v123
    %v139 = vcombine.low %v125, %v127
    %v141 = vunpack.c.l.s4 1983009808
    %v142 = vunpack.c.0.s8 %v141
    %v143 = vlaneseq
    %v144 = vshrl.u32 %v143, 7
    %v145 = vsub.s32 %v142, %v144
    %v146 = vrot.slane %v138, %v145
    %v148 = vunpack.c.l.s4 1983009808
    %v149 = vunpack.c.0.s8 %v148
    %v150 = vlaneseq
    %v151 = vshrl.u32 %v150, 7
    %v152 = vsub.s32 %v149, %v151
    %v153 = vrot.slane %v139, %v152
    %v154 = vcombine.low %v146, %v153
    %v155 = vcombine.low %v129, %v131
    %v157 = vunpack.c.l.s4 1983009808
    %v158 = vunpack.c.0.s8 %v157
    %v159 = vlaneseq
    %v160 = vshrl.u32 %v159, 7
    %v161 = vsub.s32 %v158, %v160
    %v162 = vrot.slane %v155, %v161
    %v165 = vpack.c.bf16 %v162, %v154
    %v166 = vld [vmem:[#allocation8] sm:$0xf]
    %v167 = vld [vmem:[#allocation8 + $0x4] sm:$0xf]
    %v168 = vld [vmem:[#allocation8 + $0x8] sm:$0xf]
    %v169 = vld [vmem:[#allocation8 + $0xc] sm:$0xf]
    %s170 = scalar_lea.vmem [#allocation2], 1
    %v171 = vld [vmem:[%s170] ss:$3 sm:$0x3]
    %s172 = scalar_lea.vmem [#allocation2], 17
    %v173 = vld [vmem:[%s172] ss:$3 sm:$0x3]
    %s174 = scalar_lea.vmem [#allocation2], 33
    %v175 = vld [vmem:[%s174] ss:$3 sm:$0x3]
    %s176 = scalar_lea.vmem [#allocation2], 49
    %v177 = vld [vmem:[%s176] ss:$3 sm:$0x3]
    %s178 = scalar_lea.vmem [#allocation2], 65
    %v179 = vld [vmem:[%s178] ss:$3 sm:$0x3]
    %s180 = scalar_lea.vmem [#allocation2], 81
    %v181 = vld [vmem:[%s180] ss:$3 sm:$0x3]
    %v188 = vcombine.low %v171, %v173
    %v189 = vcombine.low %v175, %v177
    %v191 = vunpack.c.l.s4 1983009808
    %v192 = vunpack.c.0.s8 %v191
    %v193 = vlaneseq
    %v194 = vshrl.u32 %v193, 7
    %v195 = vsub.s32 %v192, %v194
    %v196 = vrot.slane %v188, %v195
    %v198 = vunpack.c.l.s4 1983009808
    %v199 = vunpack.c.0.s8 %v198
    %v200 = vlaneseq
    %v201 = vshrl.u32 %v200, 7
    %v202 = vsub.s32 %v199, %v201
    %v203 = vrot.slane %v189, %v202
    %v204 = vcombine.low %v196, %v203
    %v205 = vcombine.low %v179, %v181
    %v207 = vunpack.c.l.s4 1983009808
    %v208 = vunpack.c.0.s8 %v207
    %v209 = vlaneseq
    %v210 = vshrl.u32 %v209, 7
    %v211 = vsub.s32 %v208, %v210
    %v212 = vrot.slane %v205, %v211
    %v215 = vpack.c.bf16 %v212, %v204
    %s216 = scalar_lea.vmem [#allocation8], 16
    %v217 = vld [vmem:[%s216] sm:$0xf]
    %v218 = vld [vmem:[%s216 + $0x4] sm:$0xf]
    %v219 = vld [vmem:[%s216 + $0x8] sm:$0xf]
    %v220 = vld [vmem:[%s216 + $0xc] sm:$0xf]
    %v225 = vunpack.c.l.b16 %v217
    %v226 = vunpack.c.l.b16 %v218
    %v227 = vunpack.c.l.b16 %v219
    %v228 = vunpack.c.l.b16 %v220
    %v229 = vpack.c.b16 %v226, %v225
    %v230 = vpack.c.b16 %v228, %v227
    %vm233 = vcmask 261120
    %v235 = vsel %vm233, %v215, 0
    %237 = vmatprep.subr.bf16.mxu0 0
    %238 = vmatpush1.bf16.msra.mxu0 0
    %239 = vmatprep.subr.bf16.mxu0 0
    %240 = vmatpush1.bf16.msra.mxu0 0
    %241 = vmatprep.subr.bf16.mxu0 0
    %242 = vmatpush1.bf16.msra.mxu0 0
    %243 = vmatprep.subr.bf16.mxu0 0
    %244 = vmatpush1.bf16.msra.mxu0 0
    %245 = vmatprep.subr.bf16.mxu0 0
    %246 = vmatpush1.bf16.msra.mxu0 0
    %247 = vmatprep.subr.bf16.mxu0 0
    %248 = vmatpush1.bf16.msra.mxu0 0
    %249 = vmatprep.subr.bf16.mxu0 0
    %250 = vmatpush1.bf16.msra.mxu0 %v230
    %251 = vmatprep.subr.bf16.mxu0 0
    %252 = vmatpush1.bf16.msra.mxu0 %v229
    %253 = vmatprep.subr.bf16.mxu0 0
    %254 = vmatpush2.bf16.msra.mxu0 0
    %255 = vmatprep.subr.bf16.mxu0 0
    %256 = vmatpush2.bf16.msra.mxu0 0
    %257 = vmatprep.subr.bf16.mxu0 0
    %258 = vmatpush2.bf16.msra.mxu0 0
    %259 = vmatprep.subr.bf16.mxu0 0
    %260 = vmatpush2.bf16.msra.mxu0 0
    %261 = vmatprep.subr.bf16.mxu0 0
    %262 = vmatpush2.bf16.msra.mxu0 0
    %263 = vmatprep.subr.bf16.mxu0 0
    %264 = vmatpush2.bf16.msra.mxu0 0
    %265 = vmatprep.subr.bf16.mxu0 0
    %266 = vmatpush2.bf16.msra.mxu0 0
    %267 = vmatprep.subr.bf16.mxu0 0
    %268 = vmatpush2.bf16.msra.mxu0 0
    %269 = vmatprep.mubr.bf16.mxu0 0
    %270 = vmatmul.mubr.bf16.gmra.mxu0 %v235
    %v271 = vpop.f32.mrf.mxu0
    %v272 = vadd.f32 0.0, %v271
    %v273 = vpop.f32.mrf.mxu0
    %v274 = vpop.f32.mrf.mxu0
    %v275 = vadd.f32 0.0, %v274
    %v276 = vpop.f32.mrf.mxu0
    %277 = vdwg.mxu0
    %v282 = vunpack.c.l.b16 %v166
    %v283 = vunpack.c.l.b16 %v167
    %v284 = vunpack.c.l.b16 %v168
    %v285 = vunpack.c.l.b16 %v169
    %v286 = vpack.c.b16 %v283, %v282
    %v287 = vpack.c.b16 %v285, %v284
    %v291 = vsel %vm233, %v165, 0
    %293 = vmatprep.subr.bf16.mxu0 0
    %294 = vmatpush1.bf16.msra.mxu0 0
    %295 = vmatprep.subr.bf16.mxu0 0
    %296 = vmatpush1.bf16.msra.mxu0 0
    %297 = vmatprep.subr.bf16.mxu0 0
    %298 = vmatpush1.bf16.msra.mxu0 0
    %299 = vmatprep.subr.bf16.mxu0 0
    %300 = vmatpush1.bf16.msra.mxu0 0
    %301 = vmatprep.subr.bf16.mxu0 0
    %302 = vmatpush1.bf16.msra.mxu0 0
    %303 = vmatprep.subr.bf16.mxu0 0
    %304 = vmatpush1.bf16.msra.mxu0 0
    %305 = vmatprep.subr.bf16.mxu0 0
    %306 = vmatpush1.bf16.msra.mxu0 %v287
    %307 = vmatprep.subr.bf16.mxu0 0
    %308 = vmatpush1.bf16.msra.mxu0 %v286
    %309 = vmatprep.subr.bf16.mxu0 0
    %310 = vmatpush2.bf16.msra.mxu0 0
    %311 = vmatprep.subr.bf16.mxu0 0
    %312 = vmatpush2.bf16.msra.mxu0 0
    %313 = vmatprep.subr.bf16.mxu0 0
    %314 = vmatpush2.bf16.msra.mxu0 0
    %315 = vmatprep.subr.bf16.mxu0 0
    %316 = vmatpush2.bf16.msra.mxu0 0
    %317 = vmatprep.subr.bf16.mxu0 0
    %318 = vmatpush2.bf16.msra.mxu0 0
    %319 = vmatprep.subr.bf16.mxu0 0
    %320 = vmatpush2.bf16.msra.mxu0 0
    %321 = vmatprep.subr.bf16.mxu0 0
    %322 = vmatpush2.bf16.msra.mxu0 0
    %323 = vmatprep.subr.bf16.mxu0 0
    %324 = vmatpush2.bf16.msra.mxu0 0
    %325 = vmatprep.mubr.bf16.mxu0 0
    %326 = vmatmul.mubr.bf16.gmra.mxu0 %v291
    %v327 = vpop.f32.mrf.mxu0
    %v328 = vadd.f32 %v272, %v327
    %v329 = vpop.f32.mrf.mxu0
    %v330 = vpop.f32.mrf.mxu0
    %v331 = vadd.f32 %v275, %v330
    %v332 = vpop.f32.mrf.mxu0
    %333 = vdwg.mxu0
    %s334 = scalar_lea.vmem [#allocation2], 2
    %v335 = vld [vmem:[%s334] ss:$3 sm:$0x3]
    %s336 = scalar_lea.vmem [#allocation2], 18
    %v337 = vld [vmem:[%s336] ss:$3 sm:$0x3]
    %s338 = scalar_lea.vmem [#allocation2], 34
    %v339 = vld [vmem:[%s338] ss:$3 sm:$0x3]
    %s340 = scalar_lea.vmem [#allocation2], 50
    %v341 = vld [vmem:[%s340] ss:$3 sm:$0x3]
    %s342 = scalar_lea.vmem [#allocation2], 66
    %v343 = vld [vmem:[%s342] ss:$3 sm:$0x3]
    %s344 = scalar_lea.vmem [#allocation2], 82
    %v345 = vld [vmem:[%s344] ss:$3 sm:$0x3]
    %v352 = vcombine.low %v335, %v337
    %v353 = vcombine.low %v339, %v341
    %v355 = vunpack.c.l.s4 1983009808
    %v356 = vunpack.c.0.s8 %v355
    %v357 = vlaneseq
    %v358 = vshrl.u32 %v357, 7
    %v359 = vsub.s32 %v356, %v358
    %v360 = vrot.slane %v352, %v359
    %v362 = vunpack.c.l.s4 1983009808
    %v363 = vunpack.c.0.s8 %v362
    %v364 = vlaneseq
    %v365 = vshrl.u32 %v364, 7
    %v366 = vsub.s32 %v363, %v365
    %v367 = vrot.slane %v353, %v366
    %v368 = vcombine.low %v360, %v367
    %v369 = vcombine.low %v343, %v345
    %v371 = vunpack.c.l.s4 1983009808
    %v372 = vunpack.c.0.s8 %v371
    %v373 = vlaneseq
    %v374 = vshrl.u32 %v373, 7
    %v375 = vsub.s32 %v372, %v374
    %v376 = vrot.slane %v369, %v375
    %v379 = vpack.c.bf16 %v376, %v368
    %s380 = scalar_lea.vmem [#allocation8], 32
    %v381 = vld [vmem:[%s380] sm:$0xf]
    %v382 = vld [vmem:[%s380 + $0x4] sm:$0xf]
    %v383 = vld [vmem:[%s380 + $0x8] sm:$0xf]
    %v384 = vld [vmem:[%s380 + $0xc] sm:$0xf]
    %v389 = vunpack.c.l.b16 %v381
    %v390 = vunpack.c.l.b16 %v382
    %v391 = vunpack.c.l.b16 %v383
    %v392 = vunpack.c.l.b16 %v384
    %v393 = vpack.c.b16 %v390, %v389
    %v394 = vpack.c.b16 %v392, %v391
    %v398 = vsel %vm233, %v379, 0
    %400 = vmatprep.subr.bf16.mxu0 0
    %401 = vmatpush1.bf16.msra.mxu0 0
    %402 = vmatprep.subr.bf16.mxu0 0
    %403 = vmatpush1.bf16.msra.mxu0 0
    %404 = vmatprep.subr.bf16.mxu0 0
    %405 = vmatpush1.bf16.msra.mxu0 0
    %406 = vmatprep.subr.bf16.mxu0 0
    %407 = vmatpush1.bf16.msra.mxu0 0
    %408 = vmatprep.subr.bf16.mxu0 0
    %409 = vmatpush1.bf16.msra.mxu0 0
    %410 = vmatprep.subr.bf16.mxu0 0
    %411 = vmatpush1.bf16.msra.mxu0 0
    %412 = vmatprep.subr.bf16.mxu0 0
    %413 = vmatpush1.bf16.msra.mxu0 %v394
    %414 = vmatprep.subr.bf16.mxu0 0
    %415 = vmatpush1.bf16.msra.mxu0 %v393
    %416 = vmatprep.subr.bf16.mxu0 0
    %417 = vmatpush2.bf16.msra.mxu0 0
    %418 = vmatprep.subr.bf16.mxu0 0
    %419 = vmatpush2.bf16.msra.mxu0 0
    %420 = vmatprep.subr.bf16.mxu0 0
    %421 = vmatpush2.bf16.msra.mxu0 0
    %422 = vmatprep.subr.bf16.mxu0 0
    %423 = vmatpush2.bf16.msra.mxu0 0
    %424 = vmatprep.subr.bf16.mxu0 0
    %425 = vmatpush2.bf16.msra.mxu0 0
    %426 = vmatprep.subr.bf16.mxu0 0
    %427 = vmatpush2.bf16.msra.mxu0 0
    %428 = vmatprep.subr.bf16.mxu0 0
    %429 = vmatpush2.bf16.msra.mxu0 0
    %430 = vmatprep.subr.bf16.mxu0 0
    %431 = vmatpush2.bf16.msra.mxu0 0
    %432 = vmatprep.mubr.bf16.mxu0 0
    %433 = vmatmul.mubr.bf16.gmra.mxu0 %v398
    %v434 = vpop.f32.mrf.mxu0
    %v435 = vadd.f32 0.0, %v434
    %v436 = vpop.f32.mrf.mxu0
    %v437 = vpop.f32.mrf.mxu0
    %v438 = vadd.f32 0.0, %v437
    %v439 = vpop.f32.mrf.mxu0
    %440 = vdwg.mxu0
    %v441 = vadd.f32 %v328, %v435
    %v442 = vadd.f32 %v331, %v438
    %s443 = scalar_lea.vmem [#allocation2], 3
    %v444 = vld [vmem:[%s443] ss:$3 sm:$0x3]
    %s445 = scalar_lea.vmem [#allocation2], 19
    %v446 = vld [vmem:[%s445] ss:$3 sm:$0x3]
    %s447 = scalar_lea.vmem [#allocation2], 35
    %v448 = vld [vmem:[%s447] ss:$3 sm:$0x3]
    %s449 = scalar_lea.vmem [#allocation2], 51
    %v450 = vld [vmem:[%s449] ss:$3 sm:$0x3]
    %s451 = scalar_lea.vmem [#allocation2], 67
    %v452 = vld [vmem:[%s451] ss:$3 sm:$0x3]
    %s453 = scalar_lea.vmem [#allocation2], 83
    %v454 = vld [vmem:[%s453] ss:$3 sm:$0x3]
    %v461 = vcombine.low %v444, %v446
    %v462 = vcombine.low %v448, %v450
    %v464 = vunpack.c.l.s4 1983009808
    %v465 = vunpack.c.0.s8 %v464
    %v466 = vlaneseq
    %v467 = vshrl.u32 %v466, 7
    %v468 = vsub.s32 %v465, %v467
    %v469 = vrot.slane %v461, %v468
    %v471 = vunpack.c.l.s4 1983009808
    %v472 = vunpack.c.0.s8 %v471
    %v473 = vlaneseq
    %v474 = vshrl.u32 %v473, 7
    %v475 = vsub.s32 %v472, %v474
    %v476 = vrot.slane %v462, %v475
    %v477 = vcombine.low %v469, %v476
    %v478 = vcombine.low %v452, %v454
    %v480 = vunpack.c.l.s4 1983009808
    %v481 = vunpack.c.0.s8 %v480
    %v482 = vlaneseq
    %v483 = vshrl.u32 %v482, 7
    %v484 = vsub.s32 %v481, %v483
    %v485 = vrot.slane %v478, %v484
    %v488 = vpack.c.bf16 %v485, %v477
    %s489 = scalar_lea.vmem [#allocation8], 48
    %v490 = vld [vmem:[%s489] sm:$0xf]
    %v491 = vld [vmem:[%s489 + $0x4] sm:$0xf]
    %v492 = vld [vmem:[%s489 + $0x8] sm:$0xf]
    %v493 = vld [vmem:[%s489 + $0xc] sm:$0xf]
    %v498 = vunpack.c.l.b16 %v490
    %v499 = vunpack.c.l.b16 %v491
    %v500 = vunpack.c.l.b16 %v492
    %v501 = vunpack.c.l.b16 %v493
    %v502 = vpack.c.b16 %v499, %v498
    %v503 = vpack.c.b16 %v501, %v500
    %v507 = vsel %vm233, %v488, 0
    %509 = vmatprep.subr.bf16.mxu0 0
    %510 = vmatpush1.bf16.msra.mxu0 0
    %511 = vmatprep.subr.bf16.mxu0 0
    %512 = vmatpush1.bf16.msra.mxu0 0
    %513 = vmatprep.subr.bf16.mxu0 0
    %514 = vmatpush1.bf16.msra.mxu0 0
    %515 = vmatprep.subr.bf16.mxu0 0
    %516 = vmatpush1.bf16.msra.mxu0 0
    %517 = vmatprep.subr.bf16.mxu0 0
    %518 = vmatpush1.bf16.msra.mxu0 0
    %519 = vmatprep.subr.bf16.mxu0 0
    %520 = vmatpush1.bf16.msra.mxu0 0
    %521 = vmatprep.subr.bf16.mxu0 0
    %522 = vmatpush1.bf16.msra.mxu0 %v503
    %523 = vmatprep.subr.bf16.mxu0 0
    %524 = vmatpush1.bf16.msra.mxu0 %v502
    %525 = vmatprep.subr.bf16.mxu0 0
    %526 = vmatpush2.bf16.msra.mxu0 0
    %527 = vmatprep.subr.bf16.mxu0 0
    %528 = vmatpush2.bf16.msra.mxu0 0
    %529 = vmatprep.subr.bf16.mxu0 0
    %530 = vmatpush2.bf16.msra.mxu0 0
    %531 = vmatprep.subr.bf16.mxu0 0
    %532 = vmatpush2.bf16.msra.mxu0 0
    %533 = vmatprep.subr.bf16.mxu0 0
    %534 = vmatpush2.bf16.msra.mxu0 0
    %535 = vmatprep.subr.bf16.mxu0 0
    %536 = vmatpush2.bf16.msra.mxu0 0
    %537 = vmatprep.subr.bf16.mxu0 0
    %538 = vmatpush2.bf16.msra.mxu0 0
    %539 = vmatprep.subr.bf16.mxu0 0
    %540 = vmatpush2.bf16.msra.mxu0 0
    %541 = vmatprep.mubr.bf16.mxu0 0
    %542 = vmatmul.mubr.bf16.gmra.mxu0 %v507
    %v543 = vpop.f32.mrf.mxu0
    %v544 = vadd.f32 0.0, %v543
    %v545 = vpop.f32.mrf.mxu0
    %v546 = vpop.f32.mrf.mxu0
    %v547 = vadd.f32 0.0, %v546
    %v548 = vpop.f32.mrf.mxu0
    %549 = vdwg.mxu0
    %v550 = vadd.f32 %v441, %v544
    %v551 = vadd.f32 %v442, %v547
    %s552 = scalar_lea.vmem [#allocation2], 4
    %v553 = vld [vmem:[%s552] ss:$3 sm:$0x3]
    %s554 = scalar_lea.vmem [#allocation2], 20
    %v555 = vld [vmem:[%s554] ss:$3 sm:$0x3]
    %s556 = scalar_lea.vmem [#allocation2], 36
    %v557 = vld [vmem:[%s556] ss:$3 sm:$0x3]
    %s558 = scalar_lea.vmem [#allocation2], 52
    %v559 = vld [vmem:[%s558] ss:$3 sm:$0x3]
    %s560 = scalar_lea.vmem [#allocation2], 68
    %v561 = vld [vmem:[%s560] ss:$3 sm:$0x3]
    %s562 = scalar_lea.vmem [#allocation2], 84
    %v563 = vld [vmem:[%s562] ss:$3 sm:$0x3]
    %v570 = vcombine.low %v553, %v555
    %v571 = vcombine.low %v557, %v559
    %v573 = vunpack.c.l.s4 1983009808
    %v574 = vunpack.c.0.s8 %v573
    %v575 = vlaneseq
    %v576 = vshrl.u32 %v575, 7
    %v577 = vsub.s32 %v574, %v576
    %v578 = vrot.slane %v570, %v577
    %v580 = vunpack.c.l.s4 1983009808
    %v581 = vunpack.c.0.s8 %v580
    %v582 = vlaneseq
    %v583 = vshrl.u32 %v582, 7
    %v584 = vsub.s32 %v581, %v583
    %v585 = vrot.slane %v571, %v584
    %v586 = vcombine.low %v578, %v585
    %v587 = vcombine.low %v561, %v563
    %v589 = vunpack.c.l.s4 1983009808
    %v590 = vunpack.c.0.s8 %v589
    %v591 = vlaneseq
    %v592 = vshrl.u32 %v591, 7
    %v593 = vsub.s32 %v590, %v592
    %v594 = vrot.slane %v587, %v593
    %v597 = vpack.c.bf16 %v594, %v586
    %s598 = scalar_lea.vmem [#allocation8], 64
    %v599 = vld [vmem:[%s598] sm:$0xf]
    %v600 = vld [vmem:[%s598 + $0x4] sm:$0xf]
    %v601 = vld [vmem:[%s598 + $0x8] sm:$0xf]
    %v602 = vld [vmem:[%s598 + $0xc] sm:$0xf]
    %v607 = vunpack.c.l.b16 %v599
    %v608 = vunpack.c.l.b16 %v600
    %v609 = vunpack.c.l.b16 %v601
    %v610 = vunpack.c.l.b16 %v602
    %v611 = vpack.c.b16 %v608, %v607
    %v612 = vpack.c.b16 %v610, %v609
    %v616 = vsel %vm233, %v597, 0
    %618 = vmatprep.subr.bf16.mxu0 0
    %619 = vmatpush1.bf16.msra.mxu0 0
    %620 = vmatprep.subr.bf16.mxu0 0
    %621 = vmatpush1.bf16.msra.mxu0 0
    %622 = vmatprep.subr.bf16.mxu0 0
    %623 = vmatpush1.bf16.msra.mxu0 0
    %624 = vmatprep.subr.bf16.mxu0 0
    %625 = vmatpush1.bf16.msra.mxu0 0
    %626 = vmatprep.subr.bf16.mxu0 0
    %627 = vmatpush1.bf16.msra.mxu0 0
    %628 = vmatprep.subr.bf16.mxu0 0
    %629 = vmatpush1.bf16.msra.mxu0 0
    %630 = vmatprep.subr.bf16.mxu0 0
    %631 = vmatpush1.bf16.msra.mxu0 %v612
    %632 = vmatprep.subr.bf16.mxu0 0
    %633 = vmatpush1.bf16.msra.mxu0 %v611
    %634 = vmatprep.subr.bf16.mxu0 0
    %635 = vmatpush2.bf16.msra.mxu0 0
    %636 = vmatprep.subr.bf16.mxu0 0
    %637 = vmatpush2.bf16.msra.mxu0 0
    %638 = vmatprep.subr.bf16.mxu0 0
    %639 = vmatpush2.bf16.msra.mxu0 0
    %640 = vmatprep.subr.bf16.mxu0 0
    %641 = vmatpush2.bf16.msra.mxu0 0
    %642 = vmatprep.subr.bf16.mxu0 0
    %643 = vmatpush2.bf16.msra.mxu0 0
    %644 = vmatprep.subr.bf16.mxu0 0
    %645 = vmatpush2.bf16.msra.mxu0 0
    %646 = vmatprep.subr.bf16.mxu0 0
    %647 = vmatpush2.bf16.msra.mxu0 0
    %648 = vmatprep.subr.bf16.mxu0 0
    %649 = vmatpush2.bf16.msra.mxu0 0
    %650 = vmatprep.mubr.bf16.mxu0 0
    %651 = vmatmul.mubr.bf16.gmra.mxu0 %v616
    %v652 = vpop.f32.mrf.mxu0
    %v653 = vadd.f32 0.0, %v652
    %v654 = vpop.f32.mrf.mxu0
    %v655 = vpop.f32.mrf.mxu0
    %v656 = vadd.f32 0.0, %v655
    %v657 = vpop.f32.mrf.mxu0
    %658 = vdwg.mxu0
    %v659 = vadd.f32 %v550, %v653
    %v660 = vadd.f32 %v551, %v656
    %v661 = vld [vmem:[%s2] sm:$0x1]
    %v663 = vlaneseq
    %v664 = vshrl.u32 %v663, 7
    %v665 = vsub.s32 0, %v664
    %v666 = vrot.slane %v661, %v665
    %v668 = vadd.f32 %v659, %v666
    %v669 = vadd.f32 %v660, %v666
    %vm670 = vcmp.ge.f32.partialorder %v668, 0.0
    %vm671 = vcmp.ge.f32.partialorder %v669, 0.0
    %v672 = vmul.f32 %v668, 0.1
    %v673 = vmul.f32 %v669, 0.1
    %v674 = vsel %vm670, %v668, %v672
    %v675 = vsel %vm671, %v669, %v673
    %v678 = vcombine.high %v674, %v674
    %v680 = vunpack.c.l.s4 1983009808
    %v681 = vunpack.c.0.s8 %v680
    %v682 = vlaneseq
    %v683 = vshrl.u32 %v682, 7
    %v684 = vsub.s32 %v681, %v683
    %v685 = vrot.slane %v674, %v684
    %v687 = vunpack.c.l.s4 1983009808
    %v688 = vunpack.c.0.s8 %v687
    %v689 = vlaneseq
    %v690 = vshrl.u32 %v689, 7
    %v691 = vsub.s32 %v688, %v690
    %v692 = vrot.slane %v678, %v691
    %v693 = vcombine.high %v685, %v685
    %v694 = vcombine.high %v692, %v692
    %v696 = vunpack.c.l.s4 1983009808
    %v697 = vunpack.c.0.s8 %v696
    %v698 = vlaneseq
    %v699 = vshrl.u32 %v698, 7
    %v700 = vsub.s32 %v697, %v699
    %v701 = vrot.slane %v675, %v700
    %v702 = vcombine.high %v701, %v701
    %709 = vst [vmem:[#allocation14] sm:$0x3] %v685
    %710 = vst [vmem:[#allocation14 + $0x2] sm:$0x3] %v693
    %711 = vst [vmem:[#allocation14 + $0x4] sm:$0x3] %v692
    %712 = vst [vmem:[#allocation14 + $0x6] sm:$0x3] %v694
    %713 = vst [vmem:[#allocation14 + $0x8] sm:$0x3] %v701
    %714 = vst [vmem:[#allocation14 + $0xa] sm:$0x3] %v702
    %715 = vst [vmem:[#allocation3] sm:$0x3] 0.0
    %716 = vst [vmem:[#allocation3 + $0x8] sm:$0x3] 0.0
    %717 = vst [vmem:[#allocation3 + $0x10] sm:$0x3] 0.0
    %718 = vst [vmem:[#allocation3 + $0x18] sm:$0x3] 0.0
    %719 = vst [vmem:[#allocation3 + $0x20] sm:$0x3] 0.0
    %720 = vst [vmem:[#allocation3 + $0x28] sm:$0x3] 0.0
    %721 = vst [vmem:[#allocation3 + $0x4] sm:$0x3] 0.0
    %722 = vst [vmem:[#allocation3 + $0xc] sm:$0x3] 0.0
    %723 = vst [vmem:[#allocation3 + $0x14] sm:$0x3] 0.0
    %724 = vst [vmem:[#allocation3 + $0x1c] sm:$0x3] 0.0
    %725 = vst [vmem:[#allocation3 + $0x24] sm:$0x3] 0.0
    %726 = vst [vmem:[#allocation3 + $0x2c] sm:$0x3] 0.0
    %v727 = vld [vmem:[#allocation14] sm:$0x3]
    %v728 = vld [vmem:[#allocation14 + $0x2] sm:$0x3]
    %v729 = vld [vmem:[#allocation14 + $0x4] sm:$0x3]
    %v730 = vld [vmem:[#allocation14 + $0x6] sm:$0x3]
    %v731 = vld [vmem:[#allocation14 + $0x8] sm:$0x3]
    %v732 = vld [vmem:[#allocation14 + $0xa] sm:$0x3]
    %733 = vst [vmem:[#allocation3 + $0x2] sm:$0x3] %v727
    %734 = vst [vmem:[#allocation3 + $0xa] sm:$0x3] %v728
    %735 = vst [vmem:[#allocation3 + $0x12] sm:$0x3] %v729
    %736 = vst [vmem:[#allocation3 + $0x1a] sm:$0x3] %v730
    %737 = vst [vmem:[#allocation3 + $0x22] sm:$0x3] %v731
    %738 = vst [vmem:[#allocation3 + $0x2a] sm:$0x3] %v732
    %v739 = vld [vmem:[#allocation3] sm:$0x1]
    %v740 = vld [vmem:[#allocation3 + $0x8] sm:$0x1]
    %v741 = vld [vmem:[#allocation3 + $0x10] sm:$0x1]
    %v742 = vld [vmem:[#allocation3 + $0x18] sm:$0x1]
    %v743 = vld [vmem:[#allocation3 + $0x20] sm:$0x1]
    %v744 = vld [vmem:[#allocation3 + $0x28] sm:$0x1]
    %v745 = vpack.c.bf16 %v739, %v739
    %v746 = vpack.c.bf16 %v740, %v740
    %v747 = vpack.c.bf16 %v741, %v741
    %v748 = vpack.c.bf16 %v742, %v742
    %v749 = vpack.c.bf16 %v743, %v743
    %v750 = vpack.c.bf16 %v744, %v744
    %v751 = vld [vmem:[#allocation11] sm:$0xf]
    %v752 = vld [vmem:[#allocation11 + $0x4] sm:$0xf]
    %v753 = vld [vmem:[#allocation11 + $0x8] sm:$0xf]
    %v754 = vld [vmem:[#allocation11 + $0xc] sm:$0xf]
    %v755 = vld [vmem:[#allocation11 + $0x10] sm:$0xf]
    %v756 = vld [vmem:[#allocation11 + $0x14] sm:$0xf]
    %v757 = vld [vmem:[#allocation11 + $0x18] sm:$0xf]
    %v758 = vld [vmem:[#allocation11 + $0x1c] sm:$0xf]
    %v759 = vld [vmem:[#allocation11 + $0x20] sm:$0xf]
    %v760 = vld [vmem:[#allocation11 + $0x24] sm:$0xf]
    %v761 = vld [vmem:[#allocation11 + $0x28] sm:$0xf]
    %v762 = vld [vmem:[#allocation11 + $0x2c] sm:$0xf]
    %v763 = vld [vmem:[#allocation11 + $0x30] sm:$0xf]
    %v764 = vld [vmem:[#allocation11 + $0x34] sm:$0xf]
    %v765 = vld [vmem:[#allocation11 + $0x38] sm:$0xf]
    %v766 = vld [vmem:[#allocation11 + $0x3c] sm:$0xf]
    %v767 = vld [vmem:[#allocation3 + $0x1] sm:$0x1]
    %v768 = vld [vmem:[#allocation3 + $0x9] sm:$0x1]
    %v769 = vld [vmem:[#allocation3 + $0x11] sm:$0x1]
    %v770 = vld [vmem:[#allocation3 + $0x19] sm:$0x1]
    %v771 = vld [vmem:[#allocation3 + $0x21] sm:$0x1]
    %v772 = vld [vmem:[#allocation3 + $0x29] sm:$0x1]
    %v773 = vpack.c.bf16 %v767, %v767
    %v774 = vpack.c.bf16 %v768, %v768
    %v775 = vpack.c.bf16 %v769, %v769
    %v776 = vpack.c.bf16 %v770, %v770
    %v777 = vpack.c.bf16 %v771, %v771
    %v778 = vpack.c.bf16 %v772, %v772
    %s779 = scalar_lea.vmem [#allocation11], 64
    %v780 = vld [vmem:[%s779] sm:$0xf]
    %v781 = vld [vmem:[%s779 + $0x4] sm:$0xf]
    %v782 = vld [vmem:[%s779 + $0x8] sm:$0xf]
    %v783 = vld [vmem:[%s779 + $0xc] sm:$0xf]
    %v784 = vld [vmem:[%s779 + $0x10] sm:$0xf]
    %v785 = vld [vmem:[%s779 + $0x14] sm:$0xf]
    %v786 = vld [vmem:[%s779 + $0x18] sm:$0xf]
    %v787 = vld [vmem:[%s779 + $0x1c] sm:$0xf]
    %v788 = vld [vmem:[%s779 + $0x20] sm:$0xf]
    %v789 = vld [vmem:[%s779 + $0x24] sm:$0xf]
    %v790 = vld [vmem:[%s779 + $0x28] sm:$0xf]
    %v791 = vld [vmem:[%s779 + $0x2c] sm:$0xf]
    %v792 = vld [vmem:[%s779 + $0x30] sm:$0xf]
    %v793 = vld [vmem:[%s779 + $0x34] sm:$0xf]
    %v794 = vld [vmem:[%s779 + $0x38] sm:$0xf]
    %v795 = vld [vmem:[%s779 + $0x3c] sm:$0xf]
    %v802 = vunpack.c.l.b16 %v773
    %v803 = vunpack.c.l.b16 %v774
    %v804 = vunpack.c.l.b16 %v775
    %v805 = vunpack.c.l.b16 %v776
    %v806 = vunpack.c.l.b16 %v777
    %v807 = vunpack.c.l.b16 %v778
    %v808 = vrot.slane %v803, 7
    %vm809 = vcmask 1041409
    %v810 = vsel %vm809, %v808, %v802
    %v811 = vrot.slane %v804, 6
    %vm812 = vcmask 1042434
    %v813 = vsel %vm812, %v811, %v810
    %v814 = vrot.slane %v805, 5
    %vm815 = vcmask 1043459
    %v816 = vsel %vm815, %v814, %v813
    %v817 = vrot.slane %v806, 4
    %vm818 = vcmask 1044484
    %v819 = vsel %vm818, %v817, %v816
    %v820 = vrot.slane %v807, 3
    %vm821 = vcmask 1045509
    %v822 = vsel %vm821, %v820, %v819
    %v823 = vpack.c.b16 %v822, %v822
    %v841 = vunpack.c.l.b16 %v780
    %v842 = vunpack.c.l.b16 %v781
    %v843 = vunpack.c.l.b16 %v782
    %v844 = vunpack.c.l.b16 %v783
    %v845 = vunpack.c.l.b16 %v784
    %v846 = vunpack.c.l.b16 %v785
    %v847 = vunpack.c.l.b16 %v786
    %v848 = vunpack.c.l.b16 %v787
    %v849 = vunpack.c.l.b16 %v788
    %v850 = vunpack.c.l.b16 %v789
    %v851 = vunpack.c.l.b16 %v790
    %v852 = vunpack.c.l.b16 %v791
    %v853 = vunpack.c.l.b16 %v792
    %v854 = vunpack.c.l.b16 %v793
    %v855 = vunpack.c.l.b16 %v794
    %v856 = vunpack.c.l.b16 %v795
    %v857 = vpack.c.b16 %v842, %v841
    %v858 = vpack.c.b16 %v844, %v843
    %v859 = vpack.c.b16 %v846, %v845
    %v860 = vpack.c.b16 %v848, %v847
    %v861 = vpack.c.b16 %v850, %v849
    %v862 = vpack.c.b16 %v852, %v851
    %v863 = vpack.c.b16 %v854, %v853
    %v864 = vpack.c.b16 %v856, %v855
    %873 = vmatprep.subr.bf16.mxu0 0
    %874 = vmatpush1.bf16.msra.mxu0 %v864
    %875 = vmatprep.subr.bf16.mxu0 0
    %876 = vmatpush1.bf16.msra.mxu0 %v863
    %877 = vmatprep.subr.bf16.mxu0 0
    %878 = vmatpush1.bf16.msra.mxu0 %v862
    %879 = vmatprep.subr.bf16.mxu0 0
    %880 = vmatpush1.bf16.msra.mxu0 %v861
    %881 = vmatprep.subr.bf16.mxu0 0
    %882 = vmatpush1.bf16.msra.mxu0 %v860
    %883 = vmatprep.subr.bf16.mxu0 0
    %884 = vmatpush1.bf16.msra.mxu0 %v859
    %885 = vmatprep.subr.bf16.mxu0 0
    %886 = vmatpush1.bf16.msra.mxu0 %v858
    %887 = vmatprep.subr.bf16.mxu0 0
    %888 = vmatpush1.bf16.msra.mxu0 %v857
    %889 = vmatprep.subr.bf16.mxu0 0
    %890 = vmatpush2.bf16.msra.mxu0 0
    %891 = vmatprep.subr.bf16.mxu0 0
    %892 = vmatpush2.bf16.msra.mxu0 0
    %893 = vmatprep.subr.bf16.mxu0 0
    %894 = vmatpush2.bf16.msra.mxu0 0
    %895 = vmatprep.subr.bf16.mxu0 0
    %896 = vmatpush2.bf16.msra.mxu0 0
    %897 = vmatprep.subr.bf16.mxu0 0
    %898 = vmatpush2.bf16.msra.mxu0 0
    %899 = vmatprep.subr.bf16.mxu0 0
    %900 = vmatpush2.bf16.msra.mxu0 0
    %901 = vmatprep.subr.bf16.mxu0 0
    %902 = vmatpush2.bf16.msra.mxu0 0
    %903 = vmatprep.subr.bf16.mxu0 0
    %904 = vmatpush2.bf16.msra.mxu0 0
    %905 = vmatprep.mubr.bf16.mxu0 0
    %906 = vmatmul.mubr.bf16.gmra.mxu0 %v823
    %v907 = vpop.f32.mrf.mxu0
    %v908 = vadd.f32 0.0, %v907
    %v909 = vpop.f32.mrf.mxu0
    %v910 = vpop.f32.mrf.mxu0
    %v911 = vpop.f32.mrf.mxu0
    %912 = vdwg.mxu0
    %v919 = vunpack.c.l.b16 %v745
    %v920 = vunpack.c.l.b16 %v746
    %v921 = vunpack.c.l.b16 %v747
    %v922 = vunpack.c.l.b16 %v748
    %v923 = vunpack.c.l.b16 %v749
    %v924 = vunpack.c.l.b16 %v750
    %v925 = vrot.slane %v920, 7
    %v926 = vsel %vm809, %v925, %v919
    %v927 = vrot.slane %v921, 6
    %v928 = vsel %vm812, %v927, %v926
    %v929 = vrot.slane %v922, 5
    %v930 = vsel %vm815, %v929, %v928
    %v931 = vrot.slane %v923, 4
    %v932 = vsel %vm818, %v931, %v930
    %v933 = vrot.slane %v924, 3
    %v934 = vsel %vm821, %v933, %v932
    %v935 = vpack.c.b16 %v934, %v934
    %v953 = vunpack.c.l.b16 %v751
    %v954 = vunpack.c.l.b16 %v752
    %v955 = vunpack.c.l.b16 %v753
    %v956 = vunpack.c.l.b16 %v754
    %v957 = vunpack.c.l.b16 %v755
    %v958 = vunpack.c.l.b16 %v756
    %v959 = vunpack.c.l.b16 %v757
    %v960 = vunpack.c.l.b16 %v758
    %v961 = vunpack.c.l.b16 %v759
    %v962 = vunpack.c.l.b16 %v760
    %v963 = vunpack.c.l.b16 %v761
    %v964 = vunpack.c.l.b16 %v762
    %v965 = vunpack.c.l.b16 %v763
    %v966 = vunpack.c.l.b16 %v764
    %v967 = vunpack.c.l.b16 %v765
    %v968 = vunpack.c.l.b16 %v766
    %v969 = vpack.c.b16 %v954, %v953
    %v970 = vpack.c.b16 %v956, %v955
    %v971 = vpack.c.b16 %v958, %v957
    %v972 = vpack.c.b16 %v960, %v959
    %v973 = vpack.c.b16 %v962, %v961
    %v974 = vpack.c.b16 %v964, %v963
    %v975 = vpack.c.b16 %v966, %v965
    %v976 = vpack.c.b16 %v968, %v967
    %985 = vmatprep.subr.bf16.mxu0 0
    %986 = vmatpush1.bf16.msra.mxu0 %v976
    %987 = vmatprep.subr.bf16.mxu0 0
    %988 = vmatpush1.bf16.msra.mxu0 %v975
    %989 = vmatprep.subr.bf16.mxu0 0
    %990 = vmatpush1.bf16.msra.mxu0 %v974
    %991 = vmatprep.subr.bf16.mxu0 0
    %992 = vmatpush1.bf16.msra.mxu0 %v973
    %993 = vmatprep.subr.bf16.mxu0 0
    %994 = vmatpush1.bf16.msra.mxu0 %v972
    %995 = vmatprep.subr.bf16.mxu0 0
    %996 = vmatpush1.bf16.msra.mxu0 %v971
    %997 = vmatprep.subr.bf16.mxu0 0
    %998 = vmatpush1.bf16.msra.mxu0 %v970
    %999 = vmatprep.subr.bf16.mxu0 0
    %1000 = vmatpush1.bf16.msra.mxu0 %v969
    %1001 = vmatprep.subr.bf16.mxu0 0
    %1002 = vmatpush2.bf16.msra.mxu0 0
    %1003 = vmatprep.subr.bf16.mxu0 0
    %1004 = vmatpush2.bf16.msra.mxu0 0
    %1005 = vmatprep.subr.bf16.mxu0 0
    %1006 = vmatpush2.bf16.msra.mxu0 0
    %1007 = vmatprep.subr.bf16.mxu0 0
    %1008 = vmatpush2.bf16.msra.mxu0 0
    %1009 = vmatprep.subr.bf16.mxu0 0
    %1010 = vmatpush2.bf16.msra.mxu0 0
    %1011 = vmatprep.subr.bf16.mxu0 0
    %1012 = vmatpush2.bf16.msra.mxu0 0
    %1013 = vmatprep.subr.bf16.mxu0 0
    %1014 = vmatpush2.bf16.msra.mxu0 0
    %1015 = vmatprep.subr.bf16.mxu0 0
    %1016 = vmatpush2.bf16.msra.mxu0 0
    %1017 = vmatprep.mubr.bf16.mxu0 0
    %1018 = vmatmul.mubr.bf16.gmra.mxu0 %v935
    %v1019 = vpop.f32.mrf.mxu0
    %v1020 = vadd.f32 %v908, %v1019
    %v1021 = vpop.f32.mrf.mxu0
    %v1022 = vpop.f32.mrf.mxu0
    %v1023 = vpop.f32.mrf.mxu0
    %1024 = vdwg.mxu0
    %v1025 = vld [vmem:[#allocation3 + $0x2] sm:$0x1]
    %v1026 = vld [vmem:[#allocation3 + $0xa] sm:$0x1]
    %v1027 = vld [vmem:[#allocation3 + $0x12] sm:$0x1]
    %v1028 = vld [vmem:[#allocation3 + $0x1a] sm:$0x1]
    %v1029 = vld [vmem:[#allocation3 + $0x22] sm:$0x1]
    %v1030 = vld [vmem:[#allocation3 + $0x2a] sm:$0x1]
    %v1031 = vpack.c.bf16 %v1025, %v1025
    %v1032 = vpack.c.bf16 %v1026, %v1026
    %v1033 = vpack.c.bf16 %v1027, %v1027
    %v1034 = vpack.c.bf16 %v1028, %v1028
    %v1035 = vpack.c.bf16 %v1029, %v1029
    %v1036 = vpack.c.bf16 %v1030, %v1030
    %s1037 = scalar_lea.vmem [#allocation11], 128
    %v1038 = vld [vmem:[%s1037] sm:$0xf]
    %v1039 = vld [vmem:[%s1037 + $0x4] sm:$0xf]
    %v1040 = vld [vmem:[%s1037 + $0x8] sm:$0xf]
    %v1041 = vld [vmem:[%s1037 + $0xc] sm:$0xf]
    %v1042 = vld [vmem:[%s1037 + $0x10] sm:$0xf]
    %v1043 = vld [vmem:[%s1037 + $0x14] sm:$0xf]
    %v1044 = vld [vmem:[%s1037 + $0x18] sm:$0xf]
    %v1045 = vld [vmem:[%s1037 + $0x1c] sm:$0xf]
    %v1046 = vld [vmem:[%s1037 + $0x20] sm:$0xf]
    %v1047 = vld [vmem:[%s1037 + $0x24] sm:$0xf]
    %v1048 = vld [vmem:[%s1037 + $0x28] sm:$0xf]
    %v1049 = vld [vmem:[%s1037 + $0x2c] sm:$0xf]
    %v1050 = vld [vmem:[%s1037 + $0x30] sm:$0xf]
    %v1051 = vld [vmem:[%s1037 + $0x34] sm:$0xf]
    %v1052 = vld [vmem:[%s1037 + $0x38] sm:$0xf]
    %v1053 = vld [vmem:[%s1037 + $0x3c] sm:$0xf]
    %v1060 = vunpack.c.l.b16 %v1031
    %v1061 = vunpack.c.l.b16 %v1032
    %v1062 = vunpack.c.l.b16 %v1033
    %v1063 = vunpack.c.l.b16 %v1034
    %v1064 = vunpack.c.l.b16 %v1035
    %v1065 = vunpack.c.l.b16 %v1036
    %v1066 = vrot.slane %v1061, 7
    %v1067 = vsel %vm809, %v1066, %v1060
    %v1068 = vrot.slane %v1062, 6
    %v1069 = vsel %vm812, %v1068, %v1067
    %v1070 = vrot.slane %v1063, 5
    %v1071 = vsel %vm815, %v1070, %v1069
    %v1072 = vrot.slane %v1064, 4
    %v1073 = vsel %vm818, %v1072, %v1071
    %v1074 = vrot.slane %v1065, 3
    %v1075 = vsel %vm821, %v1074, %v1073
    %v1076 = vpack.c.b16 %v1075, %v1075
    %v1094 = vunpack.c.l.b16 %v1038
    %v1095 = vunpack.c.l.b16 %v1039
    %v1096 = vunpack.c.l.b16 %v1040
    %v1097 = vunpack.c.l.b16 %v1041
    %v1098 = vunpack.c.l.b16 %v1042
    %v1099 = vunpack.c.l.b16 %v1043
    %v1100 = vunpack.c.l.b16 %v1044
    %v1101 = vunpack.c.l.b16 %v1045
    %v1102 = vunpack.c.l.b16 %v1046
    %v1103 = vunpack.c.l.b16 %v1047
    %v1104 = vunpack.c.l.b16 %v1048
    %v1105 = vunpack.c.l.b16 %v1049
    %v1106 = vunpack.c.l.b16 %v1050
    %v1107 = vunpack.c.l.b16 %v1051
    %v1108 = vunpack.c.l.b16 %v1052
    %v1109 = vunpack.c.l.b16 %v1053
    %v1110 = vpack.c.b16 %v1095, %v1094
    %v1111 = vpack.c.b16 %v1097, %v1096
    %v1112 = vpack.c.b16 %v1099, %v1098
    %v1113 = vpack.c.b16 %v1101, %v1100
    %v1114 = vpack.c.b16 %v1103, %v1102
    %v1115 = vpack.c.b16 %v1105, %v1104
    %v1116 = vpack.c.b16 %v1107, %v1106
    %v1117 = vpack.c.b16 %v1109, %v1108
    %1126 = vmatprep.subr.bf16.mxu0 0
    %1127 = vmatpush1.bf16.msra.mxu0 %v1117
    %1128 = vmatprep.subr.bf16.mxu0 0
    %1129 = vmatpush1.bf16.msra.mxu0 %v1116
    %1130 = vmatprep.subr.bf16.mxu0 0
    %1131 = vmatpush1.bf16.msra.mxu0 %v1115
    %1132 = vmatprep.subr.bf16.mxu0 0
    %1133 = vmatpush1.bf16.msra.mxu0 %v1114
    %1134 = vmatprep.subr.bf16.mxu0 0
    %1135 = vmatpush1.bf16.msra.mxu0 %v1113
    %1136 = vmatprep.subr.bf16.mxu0 0
    %1137 = vmatpush1.bf16.msra.mxu0 %v1112
    %1138 = vmatprep.subr.bf16.mxu0 0
    %1139 = vmatpush1.bf16.msra.mxu0 %v1111
    %1140 = vmatprep.subr.bf16.mxu0 0
    %1141 = vmatpush1.bf16.msra.mxu0 %v1110
    %1142 = vmatprep.subr.bf16.mxu0 0
    %1143 = vmatpush2.bf16.msra.mxu0 0
    %1144 = vmatprep.subr.bf16.mxu0 0
    %1145 = vmatpush2.bf16.msra.mxu0 0
    %1146 = vmatprep.subr.bf16.mxu0 0
    %1147 = vmatpush2.bf16.msra.mxu0 0
    %1148 = vmatprep.subr.bf16.mxu0 0
    %1149 = vmatpush2.bf16.msra.mxu0 0
    %1150 = vmatprep.subr.bf16.mxu0 0
    %1151 = vmatpush2.bf16.msra.mxu0 0
    %1152 = vmatprep.subr.bf16.mxu0 0
    %1153 = vmatpush2.bf16.msra.mxu0 0
    %1154 = vmatprep.subr.bf16.mxu0 0
    %1155 = vmatpush2.bf16.msra.mxu0 0
    %1156 = vmatprep.subr.bf16.mxu0 0
    %1157 = vmatpush2.bf16.msra.mxu0 0
    %1158 = vmatprep.mubr.bf16.mxu0 0
    %1159 = vmatmul.mubr.bf16.gmra.mxu0 %v1076
    %v1160 = vpop.f32.mrf.mxu0
    %v1161 = vadd.f32 0.0, %v1160
    %v1162 = vpop.f32.mrf.mxu0
    %v1163 = vpop.f32.mrf.mxu0
    %v1164 = vpop.f32.mrf.mxu0
    %1165 = vdwg.mxu0
    %v1166 = vadd.f32 %v1020, %v1161
    %v1167 = vld [vmem:[#allocation3 + $0x3] sm:$0x1]
    %v1168 = vld [vmem:[#allocation3 + $0xb] sm:$0x1]
    %v1169 = vld [vmem:[#allocation3 + $0x13] sm:$0x1]
    %v1170 = vld [vmem:[#allocation3 + $0x1b] sm:$0x1]
    %v1171 = vld [vmem:[#allocation3 + $0x23] sm:$0x1]
    %v1172 = vld [vmem:[#allocation3 + $0x2b] sm:$0x1]
    %v1173 = vpack.c.bf16 %v1167, %v1167
    %v1174 = vpack.c.bf16 %v1168, %v1168
    %v1175 = vpack.c.bf16 %v1169, %v1169
    %v1176 = vpack.c.bf16 %v1170, %v1170
    %v1177 = vpack.c.bf16 %v1171, %v1171
    %v1178 = vpack.c.bf16 %v1172, %v1172
    %s1179 = scalar_lea.vmem [#allocation11], 192
    %v1180 = vld [vmem:[%s1179] sm:$0xf]
    %v1181 = vld [vmem:[%s1179 + $0x4] sm:$0xf]
    %v1182 = vld [vmem:[%s1179 + $0x8] sm:$0xf]
    %v1183 = vld [vmem:[%s1179 + $0xc] sm:$0xf]
    %v1184 = vld [vmem:[%s1179 + $0x10] sm:$0xf]
    %v1185 = vld [vmem:[%s1179 + $0x14] sm:$0xf]
    %v1186 = vld [vmem:[%s1179 + $0x18] sm:$0xf]
    %v1187 = vld [vmem:[%s1179 + $0x1c] sm:$0xf]
    %v1188 = vld [vmem:[%s1179 + $0x20] sm:$0xf]
    %v1189 = vld [vmem:[%s1179 + $0x24] sm:$0xf]
    %v1190 = vld [vmem:[%s1179 + $0x28] sm:$0xf]
    %v1191 = vld [vmem:[%s1179 + $0x2c] sm:$0xf]
    %v1192 = vld [vmem:[%s1179 + $0x30] sm:$0xf]
    %v1193 = vld [vmem:[%s1179 + $0x34] sm:$0xf]
    %v1194 = vld [vmem:[%s1179 + $0x38] sm:$0xf]
    %v1195 = vld [vmem:[%s1179 + $0x3c] sm:$0xf]
    %v1202 = vunpack.c.l.b16 %v1173
    %v1203 = vunpack.c.l.b16 %v1174
    %v1204 = vunpack.c.l.b16 %v1175
    %v1205 = vunpack.c.l.b16 %v1176
    %v1206 = vunpack.c.l.b16 %v1177
    %v1207 = vunpack.c.l.b16 %v1178
    %v1208 = vrot.slane %v1203, 7
    %v1209 = vsel %vm809, %v1208, %v1202
    %v1210 = vrot.slane %v1204, 6
    %v1211 = vsel %vm812, %v1210, %v1209
    %v1212 = vrot.slane %v1205, 5
    %v1213 = vsel %vm815, %v1212, %v1211
    %v1214 = vrot.slane %v1206, 4
    %v1215 = vsel %vm818, %v1214, %v1213
    %v1216 = vrot.slane %v1207, 3
    %v1217 = vsel %vm821, %v1216, %v1215
    %v1218 = vpack.c.b16 %v1217, %v1217
    %v1236 = vunpack.c.l.b16 %v1180
    %v1237 = vunpack.c.l.b16 %v1181
    %v1238 = vunpack.c.l.b16 %v1182
    %v1239 = vunpack.c.l.b16 %v1183
    %v1240 = vunpack.c.l.b16 %v1184
    %v1241 = vunpack.c.l.b16 %v1185
    %v1242 = vunpack.c.l.b16 %v1186
    %v1243 = vunpack.c.l.b16 %v1187
    %v1244 = vunpack.c.l.b16 %v1188
    %v1245 = vunpack.c.l.b16 %v1189
    %v1246 = vunpack.c.l.b16 %v1190
    %v1247 = vunpack.c.l.b16 %v1191
    %v1248 = vunpack.c.l.b16 %v1192
    %v1249 = vunpack.c.l.b16 %v1193
    %v1250 = vunpack.c.l.b16 %v1194
    %v1251 = vunpack.c.l.b16 %v1195
    %v1252 = vpack.c.b16 %v1237, %v1236
    %v1253 = vpack.c.b16 %v1239, %v1238
    %v1254 = vpack.c.b16 %v1241, %v1240
    %v1255 = vpack.c.b16 %v1243, %v1242
    %v1256 = vpack.c.b16 %v1245, %v1244
    %v1257 = vpack.c.b16 %v1247, %v1246
    %v1258 = vpack.c.b16 %v1249, %v1248
    %v1259 = vpack.c.b16 %v1251, %v1250
    %1268 = vmatprep.subr.bf16.mxu0 0
    %1269 = vmatpush1.bf16.msra.mxu0 %v1259
    %1270 = vmatprep.subr.bf16.mxu0 0
    %1271 = vmatpush1.bf16.msra.mxu0 %v1258
    %1272 = vmatprep.subr.bf16.mxu0 0
    %1273 = vmatpush1.bf16.msra.mxu0 %v1257
    %1274 = vmatprep.subr.bf16.mxu0 0
    %1275 = vmatpush1.bf16.msra.mxu0 %v1256
    %1276 = vmatprep.subr.bf16.mxu0 0
    %1277 = vmatpush1.bf16.msra.mxu0 %v1255
    %1278 = vmatprep.subr.bf16.mxu0 0
    %1279 = vmatpush1.bf16.msra.mxu0 %v1254
    %1280 = vmatprep.subr.bf16.mxu0 0
    %1281 = vmatpush1.bf16.msra.mxu0 %v1253
    %1282 = vmatprep.subr.bf16.mxu0 0
    %1283 = vmatpush1.bf16.msra.mxu0 %v1252
    %1284 = vmatprep.subr.bf16.mxu0 0
    %1285 = vmatpush2.bf16.msra.mxu0 0
    %1286 = vmatprep.subr.bf16.mxu0 0
    %1287 = vmatpush2.bf16.msra.mxu0 0
    %1288 = vmatprep.subr.bf16.mxu0 0
    %1289 = vmatpush2.bf16.msra.mxu0 0
    %1290 = vmatprep.subr.bf16.mxu0 0
    %1291 = vmatpush2.bf16.msra.mxu0 0
    %1292 = vmatprep.subr.bf16.mxu0 0
    %1293 = vmatpush2.bf16.msra.mxu0 0
    %1294 = vmatprep.subr.bf16.mxu0 0
    %1295 = vmatpush2.bf16.msra.mxu0 0
    %1296 = vmatprep.subr.bf16.mxu0 0
    %1297 = vmatpush2.bf16.msra.mxu0 0
    %1298 = vmatprep.subr.bf16.mxu0 0
    %1299 = vmatpush2.bf16.msra.mxu0 0
    %1300 = vmatprep.mubr.bf16.mxu0 0
    %1301 = vmatmul.mubr.bf16.gmra.mxu0 %v1218
    %v1302 = vpop.f32.mrf.mxu0
    %v1303 = vadd.f32 0.0, %v1302
    %v1304 = vpop.f32.mrf.mxu0
    %v1305 = vpop.f32.mrf.mxu0
    %v1306 = vpop.f32.mrf.mxu0
    %1307 = vdwg.mxu0
    %v1308 = vadd.f32 %v1166, %v1303
    %v1309 = vld [vmem:[#allocation3 + $0x4] sm:$0x1]
    %v1310 = vld [vmem:[#allocation3 + $0xc] sm:$0x1]
    %v1311 = vld [vmem:[#allocation3 + $0x14] sm:$0x1]
    %v1312 = vld [vmem:[#allocation3 + $0x1c] sm:$0x1]
    %v1313 = vld [vmem:[#allocation3 + $0x24] sm:$0x1]
    %v1314 = vld [vmem:[#allocation3 + $0x2c] sm:$0x1]
    %v1315 = vpack.c.bf16 %v1309, %v1309
    %v1316 = vpack.c.bf16 %v1310, %v1310
    %v1317 = vpack.c.bf16 %v1311, %v1311
    %v1318 = vpack.c.bf16 %v1312, %v1312
    %v1319 = vpack.c.bf16 %v1313, %v1313
    %v1320 = vpack.c.bf16 %v1314, %v1314
    %s1321 = scalar_lea.vmem [#allocation11], 256
    %v1322 = vld [vmem:[%s1321] sm:$0xf]
    %v1323 = vld [vmem:[%s1321 + $0x4] sm:$0xf]
    %v1324 = vld [vmem:[%s1321 + $0x8] sm:$0xf]
    %v1325 = vld [vmem:[%s1321 + $0xc] sm:$0xf]
    %v1326 = vld [vmem:[%s1321 + $0x10] sm:$0xf]
    %v1327 = vld [vmem:[%s1321 + $0x14] sm:$0xf]
    %v1328 = vld [vmem:[%s1321 + $0x18] sm:$0xf]
    %v1329 = vld [vmem:[%s1321 + $0x1c] sm:$0xf]
    %v1330 = vld [vmem:[%s1321 + $0x20] sm:$0xf]
    %v1331 = vld [vmem:[%s1321 + $0x24] sm:$0xf]
    %v1332 = vld [vmem:[%s1321 + $0x28] sm:$0xf]
    %v1333 = vld [vmem:[%s1321 + $0x2c] sm:$0xf]
    %v1334 = vld [vmem:[%s1321 + $0x30] sm:$0xf]
    %v1335 = vld [vmem:[%s1321 + $0x34] sm:$0xf]
    %v1336 = vld [vmem:[%s1321 + $0x38] sm:$0xf]
    %v1337 = vld [vmem:[%s1321 + $0x3c] sm:$0xf]
    %v1344 = vunpack.c.l.b16 %v1315
    %v1345 = vunpack.c.l.b16 %v1316
    %v1346 = vunpack.c.l.b16 %v1317
    %v1347 = vunpack.c.l.b16 %v1318
    %v1348 = vunpack.c.l.b16 %v1319
    %v1349 = vunpack.c.l.b16 %v1320
    %v1350 = vrot.slane %v1345, 7
    %v1351 = vsel %vm809, %v1350, %v1344
    %v1352 = vrot.slane %v1346, 6
    %v1353 = vsel %vm812, %v1352, %v1351
    %v1354 = vrot.slane %v1347, 5
    %v1355 = vsel %vm815, %v1354, %v1353
    %v1356 = vrot.slane %v1348, 4
    %v1357 = vsel %vm818, %v1356, %v1355
    %v1358 = vrot.slane %v1349, 3
    %v1359 = vsel %vm821, %v1358, %v1357
    %v1360 = vpack.c.b16 %v1359, %v1359
    %v1378 = vunpack.c.l.b16 %v1322
    %v1379 = vunpack.c.l.b16 %v1323
    %v1380 = vunpack.c.l.b16 %v1324
    %v1381 = vunpack.c.l.b16 %v1325
    %v1382 = vunpack.c.l.b16 %v1326
    %v1383 = vunpack.c.l.b16 %v1327
    %v1384 = vunpack.c.l.b16 %v1328
    %v1385 = vunpack.c.l.b16 %v1329
    %v1386 = vunpack.c.l.b16 %v1330
    %v1387 = vunpack.c.l.b16 %v1331
    %v1388 = vunpack.c.l.b16 %v1332
    %v1389 = vunpack.c.l.b16 %v1333
    %v1390 = vunpack.c.l.b16 %v1334
    %v1391 = vunpack.c.l.b16 %v1335
    %v1392 = vunpack.c.l.b16 %v1336
    %v1393 = vunpack.c.l.b16 %v1337
    %v1394 = vpack.c.b16 %v1379, %v1378
    %v1395 = vpack.c.b16 %v1381, %v1380
    %v1396 = vpack.c.b16 %v1383, %v1382
    %v1397 = vpack.c.b16 %v1385, %v1384
    %v1398 = vpack.c.b16 %v1387, %v1386
    %v1399 = vpack.c.b16 %v1389, %v1388
    %v1400 = vpack.c.b16 %v1391, %v1390
    %v1401 = vpack.c.b16 %v1393, %v1392
    %1410 = vmatprep.subr.bf16.mxu0 0
    %1411 = vmatpush1.bf16.msra.mxu0 %v1401
    %1412 = vmatprep.subr.bf16.mxu0 0
    %1413 = vmatpush1.bf16.msra.mxu0 %v1400
    %1414 = vmatprep.subr.bf16.mxu0 0
    %1415 = vmatpush1.bf16.msra.mxu0 %v1399
    %1416 = vmatprep.subr.bf16.mxu0 0
    %1417 = vmatpush1.bf16.msra.mxu0 %v1398
    %1418 = vmatprep.subr.bf16.mxu0 0
    %1419 = vmatpush1.bf16.msra.mxu0 %v1397
    %1420 = vmatprep.subr.bf16.mxu0 0
    %1421 = vmatpush1.bf16.msra.mxu0 %v1396
    %1422 = vmatprep.subr.bf16.mxu0 0
    %1423 = vmatpush1.bf16.msra.mxu0 %v1395
    %1424 = vmatprep.subr.bf16.mxu0 0
    %1425 = vmatpush1.bf16.msra.mxu0 %v1394
    %1426 = vmatprep.subr.bf16.mxu0 0
    %1427 = vmatpush2.bf16.msra.mxu0 0
    %1428 = vmatprep.subr.bf16.mxu0 0
    %1429 = vmatpush2.bf16.msra.mxu0 0
    %1430 = vmatprep.subr.bf16.mxu0 0
    %1431 = vmatpush2.bf16.msra.mxu0 0
    %1432 = vmatprep.subr.bf16.mxu0 0
    %1433 = vmatpush2.bf16.msra.mxu0 0
    %1434 = vmatprep.subr.bf16.mxu0 0
    %1435 = vmatpush2.bf16.msra.mxu0 0
    %1436 = vmatprep.subr.bf16.mxu0 0
    %1437 = vmatpush2.bf16.msra.mxu0 0
    %1438 = vmatprep.subr.bf16.mxu0 0
    %1439 = vmatpush2.bf16.msra.mxu0 0
    %1440 = vmatprep.subr.bf16.mxu0 0
    %1441 = vmatpush2.bf16.msra.mxu0 0
    %1442 = vmatprep.mubr.bf16.mxu0 0
    %1443 = vmatmul.mubr.bf16.gmra.mxu0 %v1360
    %v1444 = vpop.f32.mrf.mxu0
    %v1445 = vadd.f32 0.0, %v1444
    %v1446 = vpop.f32.mrf.mxu0
    %v1447 = vpop.f32.mrf.mxu0
    %v1448 = vpop.f32.mrf.mxu0
    %1449 = vdwg.mxu0
    %v1450 = vadd.f32 %v1308, %v1445
    %v1451 = vld [vmem:[%s4] sm:$0x1]
    %v1453 = vlaneseq
    %v1454 = vshrl.u32 %v1453, 7
    %v1455 = vsub.s32 0, %v1454
    %v1456 = vrot.slane %v1451, %v1455
    %v1458 = vadd.f32 %v1450, %v1456
    %vm1459 = vcmp.ge.f32.partialorder %v1458, 0.0
    %v1460 = vmul.f32 %v1458, 0.1
    %v1461 = vsel %vm1459, %v1458, %v1460
    %v1463 = vcombine.high %v1461, %v1461
    %v1465 = vunpack.c.l.s4 1966171168
    %v1466 = vunpack.c.0.s8 %v1465
    %v1467 = vlaneseq
    %v1468 = vshrl.u32 %v1467, 7
    %v1469 = vsub.s32 %v1466, %v1468
    %v1470 = vrot.slane %v1461, %v1469
    %v1472 = vunpack.c.l.s4 1966171168
    %v1473 = vunpack.c.0.s8 %v1472
    %v1474 = vlaneseq
    %v1475 = vshrl.u32 %v1474, 7
    %v1476 = vsub.s32 %v1473, %v1475
    %v1477 = vrot.slane %v1463, %v1476
    %v1478 = vcombine.high %v1470, %v1470
    %v1479 = vcombine.high %v1477, %v1477
    %v1481 = vunpack.c.l.s4 1966171168
    %v1482 = vunpack.c.0.s8 %v1481
    %v1483 = vlaneseq
    %v1484 = vshrl.u32 %v1483, 7
    %v1485 = vsub.s32 %v1482, %v1484
    %v1486 = vrot.slane %v1470, %v1485
    %v1488 = vunpack.c.l.s4 1966171168
    %v1489 = vunpack.c.0.s8 %v1488
    %v1490 = vlaneseq
    %v1491 = vshrl.u32 %v1490, 7
    %v1492 = vsub.s32 %v1489, %v1491
    %v1493 = vrot.slane %v1477, %v1492
    %v1495 = vunpack.c.l.s4 1966171168
    %v1496 = vunpack.c.0.s8 %v1495
    %v1497 = vlaneseq
    %v1498 = vshrl.u32 %v1497, 7
    %v1499 = vsub.s32 %v1496, %v1498
    %v1500 = vrot.slane %v1478, %v1499
    %v1502 = vunpack.c.l.s4 1966171168
    %v1503 = vunpack.c.0.s8 %v1502
    %v1504 = vlaneseq
    %v1505 = vshrl.u32 %v1504, 7
    %v1506 = vsub.s32 %v1503, %v1505
    %v1507 = vrot.slane %v1479, %v1506
    %v1508 = vcombine.high %v1486, %v1486
    %v1509 = vcombine.high %v1500, %v1500
    %1516 = vst [vmem:[#allocation15] sm:$0x1] %v1486
    %1517 = vst [vmem:[#allocation15 + $0x1] sm:$0x1] %v1500
    %1518 = vst [vmem:[#allocation15 + $0x2] sm:$0x1] %v1508
    %1519 = vst [vmem:[#allocation15 + $0x3] sm:$0x1] %v1509
    %1520 = vst [vmem:[#allocation15 + $0x4] sm:$0x1] %v1493
    %1521 = vst [vmem:[#allocation15 + $0x5] sm:$0x1] %v1507
    %1522 = vst [vmem:[#allocation4] sm:$0x3] 0.0
    %1523 = vst [vmem:[#allocation4 + $0x8] sm:$0x3] 0.0
    %1524 = vst [vmem:[#allocation4 + $0x10] sm:$0x3] 0.0
    %1525 = vst [vmem:[#allocation4 + $0x18] sm:$0x3] 0.0
    %1526 = vst [vmem:[#allocation4 + $0x20] sm:$0x3] 0.0
    %1527 = vst [vmem:[#allocation4 + $0x28] sm:$0x3] 0.0
    %1528 = vst [vmem:[#allocation4 + $0x3] sm:$0x3] 0.0
    %1529 = vst [vmem:[#allocation4 + $0xb] sm:$0x3] 0.0
    %1530 = vst [vmem:[#allocation4 + $0x13] sm:$0x3] 0.0
    %1531 = vst [vmem:[#allocation4 + $0x1b] sm:$0x3] 0.0
    %1532 = vst [vmem:[#allocation4 + $0x23] sm:$0x3] 0.0
    %1533 = vst [vmem:[#allocation4 + $0x2b] sm:$0x3] 0.0
    %v1534 = vld [vmem:[#allocation15] sm:$0x1]
    %v1535 = vld [vmem:[#allocation15 + $0x1] sm:$0x1]
    %v1536 = vld [vmem:[#allocation15 + $0x2] sm:$0x1]
    %v1537 = vld [vmem:[#allocation15 + $0x3] sm:$0x1]
    %v1538 = vld [vmem:[#allocation15 + $0x4] sm:$0x1]
    %v1539 = vld [vmem:[#allocation15 + $0x5] sm:$0x1]
    %1540 = vst [vmem:[#allocation4 + $0x2] sm:$0x1] %v1534
    %1541 = vst [vmem:[#allocation4 + $0xa] sm:$0x1] %v1535
    %1542 = vst [vmem:[#allocation4 + $0x12] sm:$0x1] %v1536
    %1543 = vst [vmem:[#allocation4 + $0x1a] sm:$0x1] %v1537
    %1544 = vst [vmem:[#allocation4 + $0x22] sm:$0x1] %v1538
    %1545 = vst [vmem:[#allocation4 + $0x2a] sm:$0x1] %v1539
    %v1546 = vld [vmem:[#allocation4] sm:$0x1]
    %v1547 = vld [vmem:[#allocation4 + $0x8] sm:$0x1]
    %v1548 = vld [vmem:[#allocation4 + $0x10] sm:$0x1]
    %v1549 = vld [vmem:[#allocation4 + $0x18] sm:$0x1]
    %v1550 = vld [vmem:[#allocation4 + $0x20] sm:$0x1]
    %v1551 = vld [vmem:[#allocation4 + $0x28] sm:$0x1]
    %v1552 = vpack.c.bf16 %v1546, %v1546
    %v1553 = vpack.c.bf16 %v1547, %v1547
    %v1554 = vpack.c.bf16 %v1548, %v1548
    %v1555 = vpack.c.bf16 %v1549, %v1549
    %v1556 = vpack.c.bf16 %v1550, %v1550
    %v1557 = vpack.c.bf16 %v1551, %v1551
    %v1558 = vld [vmem:[#allocation13] sm:$0xf]
    %v1559 = vld [vmem:[#allocation13 + $0x4] sm:$0xf]
    %v1560 = vld [vmem:[#allocation13 + $0x8] sm:$0xf]
    %v1561 = vld [vmem:[#allocation13 + $0xc] sm:$0xf]
    %v1562 = vld [vmem:[#allocation13 + $0x10] sm:$0xf]
    %v1563 = vld [vmem:[#allocation13 + $0x14] sm:$0xf]
    %v1564 = vld [vmem:[#allocation13 + $0x18] sm:$0xf]
    %v1565 = vld [vmem:[#allocation13 + $0x1c] sm:$0xf]
    %v1566 = vld [vmem:[#allocation13 + $0x20] sm:$0xf]
    %v1567 = vld [vmem:[#allocation13 + $0x24] sm:$0xf]
    %v1568 = vld [vmem:[#allocation13 + $0x28] sm:$0xf]
    %v1569 = vld [vmem:[#allocation13 + $0x2c] sm:$0xf]
    %v1570 = vld [vmem:[#allocation13 + $0x30] sm:$0xf]
    %v1571 = vld [vmem:[#allocation13 + $0x34] sm:$0xf]
    %v1572 = vld [vmem:[#allocation13 + $0x38] sm:$0xf]
    %v1573 = vld [vmem:[#allocation13 + $0x3c] sm:$0xf]
    %v1574 = vld [vmem:[#allocation4 + $0x1] sm:$0x1]
    %v1575 = vld [vmem:[#allocation4 + $0x9] sm:$0x1]
    %v1576 = vld [vmem:[#allocation4 + $0x11] sm:$0x1]
    %v1577 = vld [vmem:[#allocation4 + $0x19] sm:$0x1]
    %v1578 = vld [vmem:[#allocation4 + $0x21] sm:$0x1]
    %v1579 = vld [vmem:[#allocation4 + $0x29] sm:$0x1]
    %v1580 = vpack.c.bf16 %v1574, %v1574
    %v1581 = vpack.c.bf16 %v1575, %v1575
    %v1582 = vpack.c.bf16 %v1576, %v1576
    %v1583 = vpack.c.bf16 %v1577, %v1577
    %v1584 = vpack.c.bf16 %v1578, %v1578
    %v1585 = vpack.c.bf16 %v1579, %v1579
    %s1586 = scalar_lea.vmem [#allocation13], 64
    %v1587 = vld [vmem:[%s1586] sm:$0xf]
    %v1588 = vld [vmem:[%s1586 + $0x4] sm:$0xf]
    %v1589 = vld [vmem:[%s1586 + $0x8] sm:$0xf]
    %v1590 = vld [vmem:[%s1586 + $0xc] sm:$0xf]
    %v1591 = vld [vmem:[%s1586 + $0x10] sm:$0xf]
    %v1592 = vld [vmem:[%s1586 + $0x14] sm:$0xf]
    %v1593 = vld [vmem:[%s1586 + $0x18] sm:$0xf]
    %v1594 = vld [vmem:[%s1586 + $0x1c] sm:$0xf]
    %v1595 = vld [vmem:[%s1586 + $0x20] sm:$0xf]
    %v1596 = vld [vmem:[%s1586 + $0x24] sm:$0xf]
    %v1597 = vld [vmem:[%s1586 + $0x28] sm:$0xf]
    %v1598 = vld [vmem:[%s1586 + $0x2c] sm:$0xf]
    %v1599 = vld [vmem:[%s1586 + $0x30] sm:$0xf]
    %v1600 = vld [vmem:[%s1586 + $0x34] sm:$0xf]
    %v1601 = vld [vmem:[%s1586 + $0x38] sm:$0xf]
    %v1602 = vld [vmem:[%s1586 + $0x3c] sm:$0xf]
    %v1609 = vunpack.c.l.b16 %v1580
    %v1610 = vunpack.c.l.b16 %v1581
    %v1611 = vunpack.c.l.b16 %v1582
    %v1612 = vunpack.c.l.b16 %v1583
    %v1613 = vunpack.c.l.b16 %v1584
    %v1614 = vunpack.c.l.b16 %v1585
    %v1615 = vrot.slane %v1610, 7
    %v1616 = vsel %vm809, %v1615, %v1609
    %v1617 = vrot.slane %v1611, 6
    %v1618 = vsel %vm812, %v1617, %v1616
    %v1619 = vrot.slane %v1612, 5
    %v1620 = vsel %vm815, %v1619, %v1618
    %v1621 = vrot.slane %v1613, 4
    %v1622 = vsel %vm818, %v1621, %v1620
    %v1623 = vrot.slane %v1614, 3
    %v1624 = vsel %vm821, %v1623, %v1622
    %v1625 = vpack.c.b16 %v1624, %v1624
    %v1643 = vunpack.c.l.b16 %v1587
    %v1644 = vunpack.c.l.b16 %v1588
    %v1645 = vunpack.c.l.b16 %v1589
    %v1646 = vunpack.c.l.b16 %v1590
    %v1647 = vunpack.c.l.b16 %v1591
    %v1648 = vunpack.c.l.b16 %v1592
    %v1649 = vunpack.c.l.b16 %v1593
    %v1650 = vunpack.c.l.b16 %v1594
    %v1651 = vunpack.c.l.b16 %v1595
    %v1652 = vunpack.c.l.b16 %v1596
    %v1653 = vunpack.c.l.b16 %v1597
    %v1654 = vunpack.c.l.b16 %v1598
    %v1655 = vunpack.c.l.b16 %v1599
    %v1656 = vunpack.c.l.b16 %v1600
    %v1657 = vunpack.c.l.b16 %v1601
    %v1658 = vunpack.c.l.b16 %v1602
    %v1659 = vpack.c.b16 %v1644, %v1643
    %v1660 = vpack.c.b16 %v1646, %v1645
    %v1661 = vpack.c.b16 %v1648, %v1647
    %v1662 = vpack.c.b16 %v1650, %v1649
    %v1663 = vpack.c.b16 %v1652, %v1651
    %v1664 = vpack.c.b16 %v1654, %v1653
    %v1665 = vpack.c.b16 %v1656, %v1655
    %v1666 = vpack.c.b16 %v1658, %v1657
    %1675 = vmatprep.subr.bf16.mxu0 0
    %1676 = vmatpush1.bf16.msra.mxu0 %v1666
    %1677 = vmatprep.subr.bf16.mxu0 0
    %1678 = vmatpush1.bf16.msra.mxu0 %v1665
    %1679 = vmatprep.subr.bf16.mxu0 0
    %1680 = vmatpush1.bf16.msra.mxu0 %v1664
    %1681 = vmatprep.subr.bf16.mxu0 0
    %1682 = vmatpush1.bf16.msra.mxu0 %v1663
    %1683 = vmatprep.subr.bf16.mxu0 0
    %1684 = vmatpush1.bf16.msra.mxu0 %v1662
    %1685 = vmatprep.subr.bf16.mxu0 0
    %1686 = vmatpush1.bf16.msra.mxu0 %v1661
    %1687 = vmatprep.subr.bf16.mxu0 0
    %1688 = vmatpush1.bf16.msra.mxu0 %v1660
    %1689 = vmatprep.subr.bf16.mxu0 0
    %1690 = vmatpush1.bf16.msra.mxu0 %v1659
    %1691 = vmatprep.subr.bf16.mxu0 0
    %1692 = vmatpush2.bf16.msra.mxu0 0
    %1693 = vmatprep.subr.bf16.mxu0 0
    %1694 = vmatpush2.bf16.msra.mxu0 0
    %1695 = vmatprep.subr.bf16.mxu0 0
    %1696 = vmatpush2.bf16.msra.mxu0 0
    %1697 = vmatprep.subr.bf16.mxu0 0
    %1698 = vmatpush2.bf16.msra.mxu0 0
    %1699 = vmatprep.subr.bf16.mxu0 0
    %1700 = vmatpush2.bf16.msra.mxu0 0
    %1701 = vmatprep.subr.bf16.mxu0 0
    %1702 = vmatpush2.bf16.msra.mxu0 0
    %1703 = vmatprep.subr.bf16.mxu0 0
    %1704 = vmatpush2.bf16.msra.mxu0 0
    %1705 = vmatprep.subr.bf16.mxu0 0
    %1706 = vmatpush2.bf16.msra.mxu0 0
    %1707 = vmatprep.mubr.bf16.mxu0 0
    %1708 = vmatmul.mubr.bf16.gmra.mxu0 %v1625
    %v1709 = vpop.f32.mrf.mxu0
    %v1710 = vadd.f32 0.0, %v1709
    %v1711 = vpop.f32.mrf.mxu0
    %v1712 = vpop.f32.mrf.mxu0
    %v1713 = vpop.f32.mrf.mxu0
    %1714 = vdwg.mxu0
    %v1721 = vunpack.c.l.b16 %v1552
    %v1722 = vunpack.c.l.b16 %v1553
    %v1723 = vunpack.c.l.b16 %v1554
    %v1724 = vunpack.c.l.b16 %v1555
    %v1725 = vunpack.c.l.b16 %v1556
    %v1726 = vunpack.c.l.b16 %v1557
    %v1727 = vrot.slane %v1722, 7
    %v1728 = vsel %vm809, %v1727, %v1721
    %v1729 = vrot.slane %v1723, 6
    %v1730 = vsel %vm812, %v1729, %v1728
    %v1731 = vrot.slane %v1724, 5
    %v1732 = vsel %vm815, %v1731, %v1730
    %v1733 = vrot.slane %v1725, 4
    %v1734 = vsel %vm818, %v1733, %v1732
    %v1735 = vrot.slane %v1726, 3
    %v1736 = vsel %vm821, %v1735, %v1734
    %v1737 = vpack.c.b16 %v1736, %v1736
    %v1755 = vunpack.c.l.b16 %v1558
    %v1756 = vunpack.c.l.b16 %v1559
    %v1757 = vunpack.c.l.b16 %v1560
    %v1758 = vunpack.c.l.b16 %v1561
    %v1759 = vunpack.c.l.b16 %v1562
    %v1760 = vunpack.c.l.b16 %v1563
    %v1761 = vunpack.c.l.b16 %v1564
    %v1762 = vunpack.c.l.b16 %v1565
    %v1763 = vunpack.c.l.b16 %v1566
    %v1764 = vunpack.c.l.b16 %v1567
    %v1765 = vunpack.c.l.b16 %v1568
    %v1766 = vunpack.c.l.b16 %v1569
    %v1767 = vunpack.c.l.b16 %v1570
    %v1768 = vunpack.c.l.b16 %v1571
    %v1769 = vunpack.c.l.b16 %v1572
    %v1770 = vunpack.c.l.b16 %v1573
    %v1771 = vpack.c.b16 %v1756, %v1755
    %v1772 = vpack.c.b16 %v1758, %v1757
    %v1773 = vpack.c.b16 %v1760, %v1759
    %v1774 = vpack.c.b16 %v1762, %v1761
    %v1775 = vpack.c.b16 %v1764, %v1763
    %v1776 = vpack.c.b16 %v1766, %v1765
    %v1777 = vpack.c.b16 %v1768, %v1767
    %v1778 = vpack.c.b16 %v1770, %v1769
    %1787 = vmatprep.subr.bf16.mxu0 0
    %1788 = vmatpush1.bf16.msra.mxu0 %v1778
    %1789 = vmatprep.subr.bf16.mxu0 0
    %1790 = vmatpush1.bf16.msra.mxu0 %v1777
    %1791 = vmatprep.subr.bf16.mxu0 0
    %1792 = vmatpush1.bf16.msra.mxu0 %v1776
    %1793 = vmatprep.subr.bf16.mxu0 0
    %1794 = vmatpush1.bf16.msra.mxu0 %v1775
    %1795 = vmatprep.subr.bf16.mxu0 0
    %1796 = vmatpush1.bf16.msra.mxu0 %v1774
    %1797 = vmatprep.subr.bf16.mxu0 0
    %1798 = vmatpush1.bf16.msra.mxu0 %v1773
    %1799 = vmatprep.subr.bf16.mxu0 0
    %1800 = vmatpush1.bf16.msra.mxu0 %v1772
    %1801 = vmatprep.subr.bf16.mxu0 0
    %1802 = vmatpush1.bf16.msra.mxu0 %v1771
    %1803 = vmatprep.subr.bf16.mxu0 0
    %1804 = vmatpush2.bf16.msra.mxu0 0
    %1805 = vmatprep.subr.bf16.mxu0 0
    %1806 = vmatpush2.bf16.msra.mxu0 0
    %1807 = vmatprep.subr.bf16.mxu0 0
    %1808 = vmatpush2.bf16.msra.mxu0 0
    %1809 = vmatprep.subr.bf16.mxu0 0
    %1810 = vmatpush2.bf16.msra.mxu0 0
    %1811 = vmatprep.subr.bf16.mxu0 0
    %1812 = vmatpush2.bf16.msra.mxu0 0
    %1813 = vmatprep.subr.bf16.mxu0 0
    %1814 = vmatpush2.bf16.msra.mxu0 0
    %1815 = vmatprep.subr.bf16.mxu0 0
    %1816 = vmatpush2.bf16.msra.mxu0 0
    %1817 = vmatprep.subr.bf16.mxu0 0
    %1818 = vmatpush2.bf16.msra.mxu0 0
    %1819 = vmatprep.mubr.bf16.mxu0 0
    %1820 = vmatmul.mubr.bf16.gmra.mxu0 %v1737
    %v1821 = vpop.f32.mrf.mxu0
    %v1822 = vadd.f32 %v1710, %v1821
    %v1823 = vpop.f32.mrf.mxu0
    %v1824 = vpop.f32.mrf.mxu0
    %v1825 = vpop.f32.mrf.mxu0
    %1826 = vdwg.mxu0
    %v1827 = vld [vmem:[#allocation4 + $0x2] sm:$0x1]
    %v1828 = vld [vmem:[#allocation4 + $0xa] sm:$0x1]
    %v1829 = vld [vmem:[#allocation4 + $0x12] sm:$0x1]
    %v1830 = vld [vmem:[#allocation4 + $0x1a] sm:$0x1]
    %v1831 = vld [vmem:[#allocation4 + $0x22] sm:$0x1]
    %v1832 = vld [vmem:[#allocation4 + $0x2a] sm:$0x1]
    %v1833 = vpack.c.bf16 %v1827, %v1827
    %v1834 = vpack.c.bf16 %v1828, %v1828
    %v1835 = vpack.c.bf16 %v1829, %v1829
    %v1836 = vpack.c.bf16 %v1830, %v1830
    %v1837 = vpack.c.bf16 %v1831, %v1831
    %v1838 = vpack.c.bf16 %v1832, %v1832
    %s1839 = scalar_lea.vmem [#allocation13], 128
    %v1840 = vld [vmem:[%s1839] sm:$0xf]
    %v1841 = vld [vmem:[%s1839 + $0x4] sm:$0xf]
    %v1842 = vld [vmem:[%s1839 + $0x8] sm:$0xf]
    %v1843 = vld [vmem:[%s1839 + $0xc] sm:$0xf]
    %v1844 = vld [vmem:[%s1839 + $0x10] sm:$0xf]
    %v1845 = vld [vmem:[%s1839 + $0x14] sm:$0xf]
    %v1846 = vld [vmem:[%s1839 + $0x18] sm:$0xf]
    %v1847 = vld [vmem:[%s1839 + $0x1c] sm:$0xf]
    %v1848 = vld [vmem:[%s1839 + $0x20] sm:$0xf]
    %v1849 = vld [vmem:[%s1839 + $0x24] sm:$0xf]
    %v1850 = vld [vmem:[%s1839 + $0x28] sm:$0xf]
    %v1851 = vld [vmem:[%s1839 + $0x2c] sm:$0xf]
    %v1852 = vld [vmem:[%s1839 + $0x30] sm:$0xf]
    %v1853 = vld [vmem:[%s1839 + $0x34] sm:$0xf]
    %v1854 = vld [vmem:[%s1839 + $0x38] sm:$0xf]
    %v1855 = vld [vmem:[%s1839 + $0x3c] sm:$0xf]
    %v1862 = vunpack.c.l.b16 %v1833
    %v1863 = vunpack.c.l.b16 %v1834
    %v1864 = vunpack.c.l.b16 %v1835
    %v1865 = vunpack.c.l.b16 %v1836
    %v1866 = vunpack.c.l.b16 %v1837
    %v1867 = vunpack.c.l.b16 %v1838
    %v1868 = vrot.slane %v1863, 7
    %v1869 = vsel %vm809, %v1868, %v1862
    %v1870 = vrot.slane %v1864, 6
    %v1871 = vsel %vm812, %v1870, %v1869
    %v1872 = vrot.slane %v1865, 5
    %v1873 = vsel %vm815, %v1872, %v1871
    %v1874 = vrot.slane %v1866, 4
    %v1875 = vsel %vm818, %v1874, %v1873
    %v1876 = vrot.slane %v1867, 3
    %v1877 = vsel %vm821, %v1876, %v1875
    %v1878 = vpack.c.b16 %v1877, %v1877
    %v1896 = vunpack.c.l.b16 %v1840
    %v1897 = vunpack.c.l.b16 %v1841
    %v1898 = vunpack.c.l.b16 %v1842
    %v1899 = vunpack.c.l.b16 %v1843
    %v1900 = vunpack.c.l.b16 %v1844
    %v1901 = vunpack.c.l.b16 %v1845
    %v1902 = vunpack.c.l.b16 %v1846
    %v1903 = vunpack.c.l.b16 %v1847
    %v1904 = vunpack.c.l.b16 %v1848
    %v1905 = vunpack.c.l.b16 %v1849
    %v1906 = vunpack.c.l.b16 %v1850
    %v1907 = vunpack.c.l.b16 %v1851
    %v1908 = vunpack.c.l.b16 %v1852
    %v1909 = vunpack.c.l.b16 %v1853
    %v1910 = vunpack.c.l.b16 %v1854
    %v1911 = vunpack.c.l.b16 %v1855
    %v1912 = vpack.c.b16 %v1897, %v1896
    %v1913 = vpack.c.b16 %v1899, %v1898
    %v1914 = vpack.c.b16 %v1901, %v1900
    %v1915 = vpack.c.b16 %v1903, %v1902
    %v1916 = vpack.c.b16 %v1905, %v1904
    %v1917 = vpack.c.b16 %v1907, %v1906
    %v1918 = vpack.c.b16 %v1909, %v1908
    %v1919 = vpack.c.b16 %v1911, %v1910
    %1928 = vmatprep.subr.bf16.mxu0 0
    %1929 = vmatpush1.bf16.msra.mxu0 %v1919
    %1930 = vmatprep.subr.bf16.mxu0 0
    %1931 = vmatpush1.bf16.msra.mxu0 %v1918
    %1932 = vmatprep.subr.bf16.mxu0 0
    %1933 = vmatpush1.bf16.msra.mxu0 %v1917
    %1934 = vmatprep.subr.bf16.mxu0 0
    %1935 = vmatpush1.bf16.msra.mxu0 %v1916
    %1936 = vmatprep.subr.bf16.mxu0 0
    %1937 = vmatpush1.bf16.msra.mxu0 %v1915
    %1938 = vmatprep.subr.bf16.mxu0 0
    %1939 = vmatpush1.bf16.msra.mxu0 %v1914
    %1940 = vmatprep.subr.bf16.mxu0 0
    %1941 = vmatpush1.bf16.msra.mxu0 %v1913
    %1942 = vmatprep.subr.bf16.mxu0 0
    %1943 = vmatpush1.bf16.msra.mxu0 %v1912
    %1944 = vmatprep.subr.bf16.mxu0 0
    %1945 = vmatpush2.bf16.msra.mxu0 0
    %1946 = vmatprep.subr.bf16.mxu0 0
    %1947 = vmatpush2.bf16.msra.mxu0 0
    %1948 = vmatprep.subr.bf16.mxu0 0
    %1949 = vmatpush2.bf16.msra.mxu0 0
    %1950 = vmatprep.subr.bf16.mxu0 0
    %1951 = vmatpush2.bf16.msra.mxu0 0
    %1952 = vmatprep.subr.bf16.mxu0 0
    %1953 = vmatpush2.bf16.msra.mxu0 0
    %1954 = vmatprep.subr.bf16.mxu0 0
    %1955 = vmatpush2.bf16.msra.mxu0 0
    %1956 = vmatprep.subr.bf16.mxu0 0
    %1957 = vmatpush2.bf16.msra.mxu0 0
    %1958 = vmatprep.subr.bf16.mxu0 0
    %1959 = vmatpush2.bf16.msra.mxu0 0
    %1960 = vmatprep.mubr.bf16.mxu0 0
    %1961 = vmatmul.mubr.bf16.gmra.mxu0 %v1878
    %v1962 = vpop.f32.mrf.mxu0
    %v1963 = vadd.f32 0.0, %v1962
    %v1964 = vpop.f32.mrf.mxu0
    %v1965 = vpop.f32.mrf.mxu0
    %v1966 = vpop.f32.mrf.mxu0
    %1967 = vdwg.mxu0
    %v1968 = vadd.f32 %v1822, %v1963
    %v1969 = vld [vmem:[#allocation4 + $0x3] sm:$0x1]
    %v1970 = vld [vmem:[#allocation4 + $0xb] sm:$0x1]
    %v1971 = vld [vmem:[#allocation4 + $0x13] sm:$0x1]
    %v1972 = vld [vmem:[#allocation4 + $0x1b] sm:$0x1]
    %v1973 = vld [vmem:[#allocation4 + $0x23] sm:$0x1]
    %v1974 = vld [vmem:[#allocation4 + $0x2b] sm:$0x1]
    %v1975 = vpack.c.bf16 %v1969, %v1969
    %v1976 = vpack.c.bf16 %v1970, %v1970
    %v1977 = vpack.c.bf16 %v1971, %v1971
    %v1978 = vpack.c.bf16 %v1972, %v1972
    %v1979 = vpack.c.bf16 %v1973, %v1973
    %v1980 = vpack.c.bf16 %v1974, %v1974
    %s1981 = scalar_lea.vmem [#allocation13], 192
    %v1982 = vld [vmem:[%s1981] sm:$0xf]
    %v1983 = vld [vmem:[%s1981 + $0x4] sm:$0xf]
    %v1984 = vld [vmem:[%s1981 + $0x8] sm:$0xf]
    %v1985 = vld [vmem:[%s1981 + $0xc] sm:$0xf]
    %v1986 = vld [vmem:[%s1981 + $0x10] sm:$0xf]
    %v1987 = vld [vmem:[%s1981 + $0x14] sm:$0xf]
    %v1988 = vld [vmem:[%s1981 + $0x18] sm:$0xf]
    %v1989 = vld [vmem:[%s1981 + $0x1c] sm:$0xf]
    %v1990 = vld [vmem:[%s1981 + $0x20] sm:$0xf]
    %v1991 = vld [vmem:[%s1981 + $0x24] sm:$0xf]
    %v1992 = vld [vmem:[%s1981 + $0x28] sm:$0xf]
    %v1993 = vld [vmem:[%s1981 + $0x2c] sm:$0xf]
    %v1994 = vld [vmem:[%s1981 + $0x30] sm:$0xf]
    %v1995 = vld [vmem:[%s1981 + $0x34] sm:$0xf]
    %v1996 = vld [vmem:[%s1981 + $0x38] sm:$0xf]
    %v1997 = vld [vmem:[%s1981 + $0x3c] sm:$0xf]
    %v2004 = vunpack.c.l.b16 %v1975
    %v2005 = vunpack.c.l.b16 %v1976
    %v2006 = vunpack.c.l.b16 %v1977
    %v2007 = vunpack.c.l.b16 %v1978
    %v2008 = vunpack.c.l.b16 %v1979
    %v2009 = vunpack.c.l.b16 %v1980
    %v2010 = vrot.slane %v2005, 7
    %v2011 = vsel %vm809, %v2010, %v2004
    %v2012 = vrot.slane %v2006, 6
    %v2013 = vsel %vm812, %v2012, %v2011
    %v2014 = vrot.slane %v2007, 5
    %v2015 = vsel %vm815, %v2014, %v2013
    %v2016 = vrot.slane %v2008, 4
    %v2017 = vsel %vm818, %v2016, %v2015
    %v2018 = vrot.slane %v2009, 3
    %v2019 = vsel %vm821, %v2018, %v2017
    %v2020 = vpack.c.b16 %v2019, %v2019
    %v2038 = vunpack.c.l.b16 %v1982
    %v2039 = vunpack.c.l.b16 %v1983
    %v2040 = vunpack.c.l.b16 %v1984
    %v2041 = vunpack.c.l.b16 %v1985
    %v2042 = vunpack.c.l.b16 %v1986
    %v2043 = vunpack.c.l.b16 %v1987
    %v2044 = vunpack.c.l.b16 %v1988
    %v2045 = vunpack.c.l.b16 %v1989
    %v2046 = vunpack.c.l.b16 %v1990
    %v2047 = vunpack.c.l.b16 %v1991
    %v2048 = vunpack.c.l.b16 %v1992
    %v2049 = vunpack.c.l.b16 %v1993
    %v2050 = vunpack.c.l.b16 %v1994
    %v2051 = vunpack.c.l.b16 %v1995
    %v2052 = vunpack.c.l.b16 %v1996
    %v2053 = vunpack.c.l.b16 %v1997
    %v2054 = vpack.c.b16 %v2039, %v2038
    %v2055 = vpack.c.b16 %v2041, %v2040
    %v2056 = vpack.c.b16 %v2043, %v2042
    %v2057 = vpack.c.b16 %v2045, %v2044
    %v2058 = vpack.c.b16 %v2047, %v2046
    %v2059 = vpack.c.b16 %v2049, %v2048
    %v2060 = vpack.c.b16 %v2051, %v2050
    %v2061 = vpack.c.b16 %v2053, %v2052
    %2070 = vmatprep.subr.bf16.mxu0 0
    %2071 = vmatpush1.bf16.msra.mxu0 %v2061
    %2072 = vmatprep.subr.bf16.mxu0 0
    %2073 = vmatpush1.bf16.msra.mxu0 %v2060
    %2074 = vmatprep.subr.bf16.mxu0 0
    %2075 = vmatpush1.bf16.msra.mxu0 %v2059
    %2076 = vmatprep.subr.bf16.mxu0 0
    %2077 = vmatpush1.bf16.msra.mxu0 %v2058
    %2078 = vmatprep.subr.bf16.mxu0 0
    %2079 = vmatpush1.bf16.msra.mxu0 %v2057
    %2080 = vmatprep.subr.bf16.mxu0 0
    %2081 = vmatpush1.bf16.msra.mxu0 %v2056
    %2082 = vmatprep.subr.bf16.mxu0 0
    %2083 = vmatpush1.bf16.msra.mxu0 %v2055
    %2084 = vmatprep.subr.bf16.mxu0 0
    %2085 = vmatpush1.bf16.msra.mxu0 %v2054
    %2086 = vmatprep.subr.bf16.mxu0 0
    %2087 = vmatpush2.bf16.msra.mxu0 0
    %2088 = vmatprep.subr.bf16.mxu0 0
    %2089 = vmatpush2.bf16.msra.mxu0 0
    %2090 = vmatprep.subr.bf16.mxu0 0
    %2091 = vmatpush2.bf16.msra.mxu0 0
    %2092 = vmatprep.subr.bf16.mxu0 0
    %2093 = vmatpush2.bf16.msra.mxu0 0
    %2094 = vmatprep.subr.bf16.mxu0 0
    %2095 = vmatpush2.bf16.msra.mxu0 0
    %2096 = vmatprep.subr.bf16.mxu0 0
    %2097 = vmatpush2.bf16.msra.mxu0 0
    %2098 = vmatprep.subr.bf16.mxu0 0
    %2099 = vmatpush2.bf16.msra.mxu0 0
    %2100 = vmatprep.subr.bf16.mxu0 0
    %2101 = vmatpush2.bf16.msra.mxu0 0
    %2102 = vmatprep.mubr.bf16.mxu0 0
    %2103 = vmatmul.mubr.bf16.gmra.mxu0 %v2020
    %v2104 = vpop.f32.mrf.mxu0
    %v2105 = vadd.f32 0.0, %v2104
    %v2106 = vpop.f32.mrf.mxu0
    %v2107 = vpop.f32.mrf.mxu0
    %v2108 = vpop.f32.mrf.mxu0
    %2109 = vdwg.mxu0
    %v2110 = vadd.f32 %v1968, %v2105
    %v2111 = vld [vmem:[#allocation4 + $0x4] sm:$0x1]
    %v2112 = vld [vmem:[#allocation4 + $0xc] sm:$0x1]
    %v2113 = vld [vmem:[#allocation4 + $0x14] sm:$0x1]
    %v2114 = vld [vmem:[#allocation4 + $0x1c] sm:$0x1]
    %v2115 = vld [vmem:[#allocation4 + $0x24] sm:$0x1]
    %v2116 = vld [vmem:[#allocation4 + $0x2c] sm:$0x1]
    %v2117 = vpack.c.bf16 %v2111, %v2111
    %v2118 = vpack.c.bf16 %v2112, %v2112
    %v2119 = vpack.c.bf16 %v2113, %v2113
    %v2120 = vpack.c.bf16 %v2114, %v2114
    %v2121 = vpack.c.bf16 %v2115, %v2115
    %v2122 = vpack.c.bf16 %v2116, %v2116
    %s2123 = scalar_lea.vmem [#allocation13], 256
    %v2124 = vld [vmem:[%s2123] sm:$0xf]
    %v2125 = vld [vmem:[%s2123 + $0x4] sm:$0xf]
    %v2126 = vld [vmem:[%s2123 + $0x8] sm:$0xf]
    %v2127 = vld [vmem:[%s2123 + $0xc] sm:$0xf]
    %v2128 = vld [vmem:[%s2123 + $0x10] sm:$0xf]
    %v2129 = vld [vmem:[%s2123 + $0x14] sm:$0xf]
    %v2130 = vld [vmem:[%s2123 + $0x18] sm:$0xf]
    %v2131 = vld [vmem:[%s2123 + $0x1c] sm:$0xf]
    %v2132 = vld [vmem:[%s2123 + $0x20] sm:$0xf]
    %v2133 = vld [vmem:[%s2123 + $0x24] sm:$0xf]
    %v2134 = vld [vmem:[%s2123 + $0x28] sm:$0xf]
    %v2135 = vld [vmem:[%s2123 + $0x2c] sm:$0xf]
    %v2136 = vld [vmem:[%s2123 + $0x30] sm:$0xf]
    %v2137 = vld [vmem:[%s2123 + $0x34] sm:$0xf]
    %v2138 = vld [vmem:[%s2123 + $0x38] sm:$0xf]
    %v2139 = vld [vmem:[%s2123 + $0x3c] sm:$0xf]
    %v2146 = vunpack.c.l.b16 %v2117
    %v2147 = vunpack.c.l.b16 %v2118
    %v2148 = vunpack.c.l.b16 %v2119
    %v2149 = vunpack.c.l.b16 %v2120
    %v2150 = vunpack.c.l.b16 %v2121
    %v2151 = vunpack.c.l.b16 %v2122
    %v2152 = vrot.slane %v2147, 7
    %v2153 = vsel %vm809, %v2152, %v2146
    %v2154 = vrot.slane %v2148, 6
    %v2155 = vsel %vm812, %v2154, %v2153
    %v2156 = vrot.slane %v2149, 5
    %v2157 = vsel %vm815, %v2156, %v2155
    %v2158 = vrot.slane %v2150, 4
    %v2159 = vsel %vm818, %v2158, %v2157
    %v2160 = vrot.slane %v2151, 3
    %v2161 = vsel %vm821, %v2160, %v2159
    %v2162 = vpack.c.b16 %v2161, %v2161
    %v2180 = vunpack.c.l.b16 %v2124
    %v2181 = vunpack.c.l.b16 %v2125
    %v2182 = vunpack.c.l.b16 %v2126
    %v2183 = vunpack.c.l.b16 %v2127
    %v2184 = vunpack.c.l.b16 %v2128
    %v2185 = vunpack.c.l.b16 %v2129
    %v2186 = vunpack.c.l.b16 %v2130
    %v2187 = vunpack.c.l.b16 %v2131
    %v2188 = vunpack.c.l.b16 %v2132
    %v2189 = vunpack.c.l.b16 %v2133
    %v2190 = vunpack.c.l.b16 %v2134
    %v2191 = vunpack.c.l.b16 %v2135
    %v2192 = vunpack.c.l.b16 %v2136
    %v2193 = vunpack.c.l.b16 %v2137
    %v2194 = vunpack.c.l.b16 %v2138
    %v2195 = vunpack.c.l.b16 %v2139
    %v2196 = vpack.c.b16 %v2181, %v2180
    %v2197 = vpack.c.b16 %v2183, %v2182
    %v2198 = vpack.c.b16 %v2185, %v2184
    %v2199 = vpack.c.b16 %v2187, %v2186
    %v2200 = vpack.c.b16 %v2189, %v2188
    %v2201 = vpack.c.b16 %v2191, %v2190
    %v2202 = vpack.c.b16 %v2193, %v2192
    %v2203 = vpack.c.b16 %v2195, %v2194
    %2212 = vmatprep.subr.bf16.mxu0 0
    %2213 = vmatpush1.bf16.msra.mxu0 %v2203
    %2214 = vmatprep.subr.bf16.mxu0 0
    %2215 = vmatpush1.bf16.msra.mxu0 %v2202
    %2216 = vmatprep.subr.bf16.mxu0 0
    %2217 = vmatpush1.bf16.msra.mxu0 %v2201
    %2218 = vmatprep.subr.bf16.mxu0 0
    %2219 = vmatpush1.bf16.msra.mxu0 %v2200
    %2220 = vmatprep.subr.bf16.mxu0 0
    %2221 = vmatpush1.bf16.msra.mxu0 %v2199
    %2222 = vmatprep.subr.bf16.mxu0 0
    %2223 = vmatpush1.bf16.msra.mxu0 %v2198
    %2224 = vmatprep.subr.bf16.mxu0 0
    %2225 = vmatpush1.bf16.msra.mxu0 %v2197
    %2226 = vmatprep.subr.bf16.mxu0 0
    %2227 = vmatpush1.bf16.msra.mxu0 %v2196
    %2228 = vmatprep.subr.bf16.mxu0 0
    %2229 = vmatpush2.bf16.msra.mxu0 0
    %2230 = vmatprep.subr.bf16.mxu0 0
    %2231 = vmatpush2.bf16.msra.mxu0 0
    %2232 = vmatprep.subr.bf16.mxu0 0
    %2233 = vmatpush2.bf16.msra.mxu0 0
    %2234 = vmatprep.subr.bf16.mxu0 0
    %2235 = vmatpush2.bf16.msra.mxu0 0
    %2236 = vmatprep.subr.bf16.mxu0 0
    %2237 = vmatpush2.bf16.msra.mxu0 0
    %2238 = vmatprep.subr.bf16.mxu0 0
    %2239 = vmatpush2.bf16.msra.mxu0 0
    %2240 = vmatprep.subr.bf16.mxu0 0
    %2241 = vmatpush2.bf16.msra.mxu0 0
    %2242 = vmatprep.subr.bf16.mxu0 0
    %2243 = vmatpush2.bf16.msra.mxu0 0
    %2244 = vmatprep.mubr.bf16.mxu0 0
    %2245 = vmatmul.mubr.bf16.gmra.mxu0 %v2162
    %v2246 = vpop.f32.mrf.mxu0
    %v2247 = vadd.f32 0.0, %v2246
    %v2248 = vpop.f32.mrf.mxu0
    %v2249 = vpop.f32.mrf.mxu0
    %v2250 = vpop.f32.mrf.mxu0
    %2251 = vdwg.mxu0
    %v2252 = vadd.f32 %v2110, %v2247
    %v2253 = vld [vmem:[%s6] sm:$0x1]
    %v2255 = vlaneseq
    %v2256 = vshrl.u32 %v2255, 7
    %v2257 = vsub.s32 0, %v2256
    %v2258 = vrot.slane %v2253, %v2257
    %v2260 = vadd.f32 %v2252, %v2258
    %vm2261 = vcmp.ge.f32.partialorder %v2260, 0.0
    %v2262 = vmul.f32 %v2260, 0.1
    %v2263 = vsel %vm2261, %v2260, %v2262
    %v2265 = vcombine.high %v2263, %v2263
    %v2267 = vunpack.c.l.s4 1966171168
    %v2268 = vunpack.c.0.s8 %v2267
    %v2269 = vlaneseq
    %v2270 = vshrl.u32 %v2269, 7
    %v2271 = vsub.s32 %v2268, %v2270
    %v2272 = vrot.slane %v2263, %v2271
    %v2274 = vunpack.c.l.s4 1966171168
    %v2275 = vunpack.c.0.s8 %v2274
    %v2276 = vlaneseq
    %v2277 = vshrl.u32 %v2276, 7
    %v2278 = vsub.s32 %v2275, %v2277
    %v2279 = vrot.slane %v2265, %v2278
    %v2280 = vcombine.high %v2272, %v2272
    %v2281 = vcombine.high %v2279, %v2279
    %v2283 = vunpack.c.l.s4 1966171168
    %v2284 = vunpack.c.0.s8 %v2283
    %v2285 = vlaneseq
    %v2286 = vshrl.u32 %v2285, 7
    %v2287 = vsub.s32 %v2284, %v2286
    %v2288 = vrot.slane %v2272, %v2287
    %v2290 = vunpack.c.l.s4 1966171168
    %v2291 = vunpack.c.0.s8 %v2290
    %v2292 = vlaneseq
    %v2293 = vshrl.u32 %v2292, 7
    %v2294 = vsub.s32 %v2291, %v2293
    %v2295 = vrot.slane %v2279, %v2294
    %v2297 = vunpack.c.l.s4 1966171168
    %v2298 = vunpack.c.0.s8 %v2297
    %v2299 = vlaneseq
    %v2300 = vshrl.u32 %v2299, 7
    %v2301 = vsub.s32 %v2298, %v2300
    %v2302 = vrot.slane %v2280, %v2301
    %v2304 = vunpack.c.l.s4 1966171168
    %v2305 = vunpack.c.0.s8 %v2304
    %v2306 = vlaneseq
    %v2307 = vshrl.u32 %v2306, 7
    %v2308 = vsub.s32 %v2305, %v2307
    %v2309 = vrot.slane %v2281, %v2308
    %v2310 = vcombine.high %v2288, %v2288
    %v2311 = vcombine.high %v2302, %v2302
    %2318 = vst [vmem:[#allocation17] sm:$0x1] %v2288
    %2319 = vst [vmem:[#allocation17 + $0x1] sm:$0x1] %v2302
    %2320 = vst [vmem:[#allocation17 + $0x2] sm:$0x1] %v2310
    %2321 = vst [vmem:[#allocation17 + $0x3] sm:$0x1] %v2311
    %2322 = vst [vmem:[#allocation17 + $0x4] sm:$0x1] %v2295
    %2323 = vst [vmem:[#allocation17 + $0x5] sm:$0x1] %v2309
    %2324 = vst [vmem:[#allocation5] sm:$0x3] 0.0
    %2325 = vst [vmem:[#allocation5 + $0x8] sm:$0x3] 0.0
    %2326 = vst [vmem:[#allocation5 + $0x10] sm:$0x3] 0.0
    %2327 = vst [vmem:[#allocation5 + $0x18] sm:$0x3] 0.0
    %2328 = vst [vmem:[#allocation5 + $0x20] sm:$0x3] 0.0
    %2329 = vst [vmem:[#allocation5 + $0x28] sm:$0x3] 0.0
    %2330 = vst [vmem:[#allocation5 + $0x3] sm:$0x3] 0.0
    %2331 = vst [vmem:[#allocation5 + $0xb] sm:$0x3] 0.0
    %2332 = vst [vmem:[#allocation5 + $0x13] sm:$0x3] 0.0
    %2333 = vst [vmem:[#allocation5 + $0x1b] sm:$0x3] 0.0
    %2334 = vst [vmem:[#allocation5 + $0x23] sm:$0x3] 0.0
    %2335 = vst [vmem:[#allocation5 + $0x2b] sm:$0x3] 0.0
    %v2336 = vld [vmem:[#allocation17] sm:$0x1]
    %v2337 = vld [vmem:[#allocation17 + $0x1] sm:$0x1]
    %v2338 = vld [vmem:[#allocation17 + $0x2] sm:$0x1]
    %v2339 = vld [vmem:[#allocation17 + $0x3] sm:$0x1]
    %v2340 = vld [vmem:[#allocation17 + $0x4] sm:$0x1]
    %v2341 = vld [vmem:[#allocation17 + $0x5] sm:$0x1]
    %2342 = vst [vmem:[#allocation5 + $0x2] sm:$0x1] %v2336
    %2343 = vst [vmem:[#allocation5 + $0xa] sm:$0x1] %v2337
    %2344 = vst [vmem:[#allocation5 + $0x12] sm:$0x1] %v2338
    %2345 = vst [vmem:[#allocation5 + $0x1a] sm:$0x1] %v2339
    %2346 = vst [vmem:[#allocation5 + $0x22] sm:$0x1] %v2340
    %2347 = vst [vmem:[#allocation5 + $0x2a] sm:$0x1] %v2341
    %v2348 = vld [vmem:[#allocation5] sm:$0x1]
    %v2349 = vld [vmem:[#allocation5 + $0x8] sm:$0x1]
    %v2350 = vld [vmem:[#allocation5 + $0x10] sm:$0x1]
    %v2351 = vld [vmem:[#allocation5 + $0x18] sm:$0x1]
    %v2352 = vld [vmem:[#allocation5 + $0x20] sm:$0x1]
    %v2353 = vld [vmem:[#allocation5 + $0x28] sm:$0x1]
    %v2354 = vpack.c.bf16 %v2348, %v2348
    %v2355 = vpack.c.bf16 %v2349, %v2349
    %v2356 = vpack.c.bf16 %v2350, %v2350
    %v2357 = vpack.c.bf16 %v2351, %v2351
    %v2358 = vpack.c.bf16 %v2352, %v2352
    %v2359 = vpack.c.bf16 %v2353, %v2353
    %v2360 = vld [vmem:[%s7] sm:$0xf]
    %v2361 = vld [vmem:[%s7 + $0x4] sm:$0xf]
    %v2362 = vld [vmem:[%s7 + $0x8] sm:$0xf]
    %v2363 = vld [vmem:[%s7 + $0xc] sm:$0xf]
    %v2364 = vld [vmem:[%s7 + $0x10] sm:$0xf]
    %v2365 = vld [vmem:[%s7 + $0x14] sm:$0xf]
    %v2366 = vld [vmem:[%s7 + $0x18] sm:$0xf]
    %v2367 = vld [vmem:[%s7 + $0x1c] sm:$0xf]
    %v2368 = vld [vmem:[%s7 + $0x20] sm:$0xf]
    %v2369 = vld [vmem:[%s7 + $0x24] sm:$0xf]
    %v2370 = vld [vmem:[%s7 + $0x28] sm:$0xf]
    %v2371 = vld [vmem:[%s7 + $0x2c] sm:$0xf]
    %v2372 = vld [vmem:[%s7 + $0x30] sm:$0xf]
    %v2373 = vld [vmem:[%s7 + $0x34] sm:$0xf]
    %v2374 = vld [vmem:[%s7 + $0x38] sm:$0xf]
    %v2375 = vld [vmem:[%s7 + $0x3c] sm:$0xf]
    %v2376 = vld [vmem:[#allocation5 + $0x1] sm:$0x1]
    %v2377 = vld [vmem:[#allocation5 + $0x9] sm:$0x1]
    %v2378 = vld [vmem:[#allocation5 + $0x11] sm:$0x1]
    %v2379 = vld [vmem:[#allocation5 + $0x19] sm:$0x1]
    %v2380 = vld [vmem:[#allocation5 + $0x21] sm:$0x1]
    %v2381 = vld [vmem:[#allocation5 + $0x29] sm:$0x1]
    %v2382 = vpack.c.bf16 %v2376, %v2376
    %v2383 = vpack.c.bf16 %v2377, %v2377
    %v2384 = vpack.c.bf16 %v2378, %v2378
    %v2385 = vpack.c.bf16 %v2379, %v2379
    %v2386 = vpack.c.bf16 %v2380, %v2380
    %v2387 = vpack.c.bf16 %v2381, %v2381
    %s2388 = scalar_lea.vmem %s7, 64
    %v2389 = vld [vmem:[%s2388] sm:$0xf]
    %v2390 = vld [vmem:[%s2388 + $0x4] sm:$0xf]
    %v2391 = vld [vmem:[%s2388 + $0x8] sm:$0xf]
    %v2392 = vld [vmem:[%s2388 + $0xc] sm:$0xf]
    %v2393 = vld [vmem:[%s2388 + $0x10] sm:$0xf]
    %v2394 = vld [vmem:[%s2388 + $0x14] sm:$0xf]
    %v2395 = vld [vmem:[%s2388 + $0x18] sm:$0xf]
    %v2396 = vld [vmem:[%s2388 + $0x1c] sm:$0xf]
    %v2397 = vld [vmem:[%s2388 + $0x20] sm:$0xf]
    %v2398 = vld [vmem:[%s2388 + $0x24] sm:$0xf]
    %v2399 = vld [vmem:[%s2388 + $0x28] sm:$0xf]
    %v2400 = vld [vmem:[%s2388 + $0x2c] sm:$0xf]
    %v2401 = vld [vmem:[%s2388 + $0x30] sm:$0xf]
    %v2402 = vld [vmem:[%s2388 + $0x34] sm:$0xf]
    %v2403 = vld [vmem:[%s2388 + $0x38] sm:$0xf]
    %v2404 = vld [vmem:[%s2388 + $0x3c] sm:$0xf]
    %v2411 = vunpack.c.l.b16 %v2382
    %v2412 = vunpack.c.l.b16 %v2383
    %v2413 = vunpack.c.l.b16 %v2384
    %v2414 = vunpack.c.l.b16 %v2385
    %v2415 = vunpack.c.l.b16 %v2386
    %v2416 = vunpack.c.l.b16 %v2387
    %v2417 = vrot.slane %v2412, 7
    %v2418 = vsel %vm809, %v2417, %v2411
    %v2419 = vrot.slane %v2413, 6
    %v2420 = vsel %vm812, %v2419, %v2418
    %v2421 = vrot.slane %v2414, 5
    %v2422 = vsel %vm815, %v2421, %v2420
    %v2423 = vrot.slane %v2415, 4
    %v2424 = vsel %vm818, %v2423, %v2422
    %v2425 = vrot.slane %v2416, 3
    %v2426 = vsel %vm821, %v2425, %v2424
    %v2427 = vpack.c.b16 %v2426, %v2426
    %v2445 = vunpack.c.l.b16 %v2389
    %v2446 = vunpack.c.l.b16 %v2390
    %v2447 = vunpack.c.l.b16 %v2391
    %v2448 = vunpack.c.l.b16 %v2392
    %v2449 = vunpack.c.l.b16 %v2393
    %v2450 = vunpack.c.l.b16 %v2394
    %v2451 = vunpack.c.l.b16 %v2395
    %v2452 = vunpack.c.l.b16 %v2396
    %v2453 = vunpack.c.l.b16 %v2397
    %v2454 = vunpack.c.l.b16 %v2398
    %v2455 = vunpack.c.l.b16 %v2399
    %v2456 = vunpack.c.l.b16 %v2400
    %v2457 = vunpack.c.l.b16 %v2401
    %v2458 = vunpack.c.l.b16 %v2402
    %v2459 = vunpack.c.l.b16 %v2403
    %v2460 = vunpack.c.l.b16 %v2404
    %v2461 = vpack.c.b16 %v2446, %v2445
    %v2462 = vpack.c.b16 %v2448, %v2447
    %v2463 = vpack.c.b16 %v2450, %v2449
    %v2464 = vpack.c.b16 %v2452, %v2451
    %v2465 = vpack.c.b16 %v2454, %v2453
    %v2466 = vpack.c.b16 %v2456, %v2455
    %v2467 = vpack.c.b16 %v2458, %v2457
    %v2468 = vpack.c.b16 %v2460, %v2459
    %2477 = vmatprep.subr.bf16.mxu0 0
    %2478 = vmatpush1.bf16.msra.mxu0 %v2468
    %2479 = vmatprep.subr.bf16.mxu0 0
    %2480 = vmatpush1.bf16.msra.mxu0 %v2467
    %2481 = vmatprep.subr.bf16.mxu0 0
    %2482 = vmatpush1.bf16.msra.mxu0 %v2466
    %2483 = vmatprep.subr.bf16.mxu0 0
    %2484 = vmatpush1.bf16.msra.mxu0 %v2465
    %2485 = vmatprep.subr.bf16.mxu0 0
    %2486 = vmatpush1.bf16.msra.mxu0 %v2464
    %2487 = vmatprep.subr.bf16.mxu0 0
    %2488 = vmatpush1.bf16.msra.mxu0 %v2463
    %2489 = vmatprep.subr.bf16.mxu0 0
    %2490 = vmatpush1.bf16.msra.mxu0 %v2462
    %2491 = vmatprep.subr.bf16.mxu0 0
    %2492 = vmatpush1.bf16.msra.mxu0 %v2461
    %2493 = vmatprep.subr.bf16.mxu0 0
    %2494 = vmatpush2.bf16.msra.mxu0 0
    %2495 = vmatprep.subr.bf16.mxu0 0
    %2496 = vmatpush2.bf16.msra.mxu0 0
    %2497 = vmatprep.subr.bf16.mxu0 0
    %2498 = vmatpush2.bf16.msra.mxu0 0
    %2499 = vmatprep.subr.bf16.mxu0 0
    %2500 = vmatpush2.bf16.msra.mxu0 0
    %2501 = vmatprep.subr.bf16.mxu0 0
    %2502 = vmatpush2.bf16.msra.mxu0 0
    %2503 = vmatprep.subr.bf16.mxu0 0
    %2504 = vmatpush2.bf16.msra.mxu0 0
    %2505 = vmatprep.subr.bf16.mxu0 0
    %2506 = vmatpush2.bf16.msra.mxu0 0
    %2507 = vmatprep.subr.bf16.mxu0 0
    %2508 = vmatpush2.bf16.msra.mxu0 0
    %2509 = vmatprep.mubr.bf16.mxu0 0
    %2510 = vmatmul.mubr.bf16.gmra.mxu0 %v2427
    %v2511 = vpop.f32.mrf.mxu0
    %v2512 = vadd.f32 0.0, %v2511
    %v2513 = vpop.f32.mrf.mxu0
    %v2514 = vpop.f32.mrf.mxu0
    %v2515 = vpop.f32.mrf.mxu0
    %2516 = vdwg.mxu0
    %v2523 = vunpack.c.l.b16 %v2354
    %v2524 = vunpack.c.l.b16 %v2355
    %v2525 = vunpack.c.l.b16 %v2356
    %v2526 = vunpack.c.l.b16 %v2357
    %v2527 = vunpack.c.l.b16 %v2358
    %v2528 = vunpack.c.l.b16 %v2359
    %v2529 = vrot.slane %v2524, 7
    %v2530 = vsel %vm809, %v2529, %v2523
    %v2531 = vrot.slane %v2525, 6
    %v2532 = vsel %vm812, %v2531, %v2530
    %v2533 = vrot.slane %v2526, 5
    %v2534 = vsel %vm815, %v2533, %v2532
    %v2535 = vrot.slane %v2527, 4
    %v2536 = vsel %vm818, %v2535, %v2534
    %v2537 = vrot.slane %v2528, 3
    %v2538 = vsel %vm821, %v2537, %v2536
    %v2539 = vpack.c.b16 %v2538, %v2538
    %v2557 = vunpack.c.l.b16 %v2360
    %v2558 = vunpack.c.l.b16 %v2361
    %v2559 = vunpack.c.l.b16 %v2362
    %v2560 = vunpack.c.l.b16 %v2363
    %v2561 = vunpack.c.l.b16 %v2364
    %v2562 = vunpack.c.l.b16 %v2365
    %v2563 = vunpack.c.l.b16 %v2366
    %v2564 = vunpack.c.l.b16 %v2367
    %v2565 = vunpack.c.l.b16 %v2368
    %v2566 = vunpack.c.l.b16 %v2369
    %v2567 = vunpack.c.l.b16 %v2370
    %v2568 = vunpack.c.l.b16 %v2371
    %v2569 = vunpack.c.l.b16 %v2372
    %v2570 = vunpack.c.l.b16 %v2373
    %v2571 = vunpack.c.l.b16 %v2374
    %v2572 = vunpack.c.l.b16 %v2375
    %v2573 = vpack.c.b16 %v2558, %v2557
    %v2574 = vpack.c.b16 %v2560, %v2559
    %v2575 = vpack.c.b16 %v2562, %v2561
    %v2576 = vpack.c.b16 %v2564, %v2563
    %v2577 = vpack.c.b16 %v2566, %v2565
    %v2578 = vpack.c.b16 %v2568, %v2567
    %v2579 = vpack.c.b16 %v2570, %v2569
    %v2580 = vpack.c.b16 %v2572, %v2571
    %2589 = vmatprep.subr.bf16.mxu0 0
    %2590 = vmatpush1.bf16.msra.mxu0 %v2580
    %2591 = vmatprep.subr.bf16.mxu0 0
    %2592 = vmatpush1.bf16.msra.mxu0 %v2579
    %2593 = vmatprep.subr.bf16.mxu0 0
    %2594 = vmatpush1.bf16.msra.mxu0 %v2578
    %2595 = vmatprep.subr.bf16.mxu0 0
    %2596 = vmatpush1.bf16.msra.mxu0 %v2577
    %2597 = vmatprep.subr.bf16.mxu0 0
    %2598 = vmatpush1.bf16.msra.mxu0 %v2576
    %2599 = vmatprep.subr.bf16.mxu0 0
    %2600 = vmatpush1.bf16.msra.mxu0 %v2575
    %2601 = vmatprep.subr.bf16.mxu0 0
    %2602 = vmatpush1.bf16.msra.mxu0 %v2574
    %2603 = vmatprep.subr.bf16.mxu0 0
    %2604 = vmatpush1.bf16.msra.mxu0 %v2573
    %2605 = vmatprep.subr.bf16.mxu0 0
    %2606 = vmatpush2.bf16.msra.mxu0 0
    %2607 = vmatprep.subr.bf16.mxu0 0
    %2608 = vmatpush2.bf16.msra.mxu0 0
    %2609 = vmatprep.subr.bf16.mxu0 0
    %2610 = vmatpush2.bf16.msra.mxu0 0
    %2611 = vmatprep.subr.bf16.mxu0 0
    %2612 = vmatpush2.bf16.msra.mxu0 0
    %2613 = vmatprep.subr.bf16.mxu0 0
    %2614 = vmatpush2.bf16.msra.mxu0 0
    %2615 = vmatprep.subr.bf16.mxu0 0
    %2616 = vmatpush2.bf16.msra.mxu0 0
    %2617 = vmatprep.subr.bf16.mxu0 0
    %2618 = vmatpush2.bf16.msra.mxu0 0
    %2619 = vmatprep.subr.bf16.mxu0 0
    %2620 = vmatpush2.bf16.msra.mxu0 0
    %2621 = vmatprep.mubr.bf16.mxu0 0
    %2622 = vmatmul.mubr.bf16.gmra.mxu0 %v2539
    %v2623 = vpop.f32.mrf.mxu0
    %v2624 = vadd.f32 %v2512, %v2623
    %v2625 = vpop.f32.mrf.mxu0
    %v2626 = vpop.f32.mrf.mxu0
    %v2627 = vpop.f32.mrf.mxu0
    %2628 = vdwg.mxu0
    %v2629 = vld [vmem:[#allocation5 + $0x2] sm:$0x1]
    %v2630 = vld [vmem:[#allocation5 + $0xa] sm:$0x1]
    %v2631 = vld [vmem:[#allocation5 + $0x12] sm:$0x1]
    %v2632 = vld [vmem:[#allocation5 + $0x1a] sm:$0x1]
    %v2633 = vld [vmem:[#allocation5 + $0x22] sm:$0x1]
    %v2634 = vld [vmem:[#allocation5 + $0x2a] sm:$0x1]
    %v2635 = vpack.c.bf16 %v2629, %v2629
    %v2636 = vpack.c.bf16 %v2630, %v2630
    %v2637 = vpack.c.bf16 %v2631, %v2631
    %v2638 = vpack.c.bf16 %v2632, %v2632
    %v2639 = vpack.c.bf16 %v2633, %v2633
    %v2640 = vpack.c.bf16 %v2634, %v2634
    %s2641 = scalar_lea.vmem %s7, 128
    %v2642 = vld [vmem:[%s2641] sm:$0xf]
    %v2643 = vld [vmem:[%s2641 + $0x4] sm:$0xf]
    %v2644 = vld [vmem:[%s2641 + $0x8] sm:$0xf]
    %v2645 = vld [vmem:[%s2641 + $0xc] sm:$0xf]
    %v2646 = vld [vmem:[%s2641 + $0x10] sm:$0xf]
    %v2647 = vld [vmem:[%s2641 + $0x14] sm:$0xf]
    %v2648 = vld [vmem:[%s2641 + $0x18] sm:$0xf]
    %v2649 = vld [vmem:[%s2641 + $0x1c] sm:$0xf]
    %v2650 = vld [vmem:[%s2641 + $0x20] sm:$0xf]
    %v2651 = vld [vmem:[%s2641 + $0x24] sm:$0xf]
    %v2652 = vld [vmem:[%s2641 + $0x28] sm:$0xf]
    %v2653 = vld [vmem:[%s2641 + $0x2c] sm:$0xf]
    %v2654 = vld [vmem:[%s2641 + $0x30] sm:$0xf]
    %v2655 = vld [vmem:[%s2641 + $0x34] sm:$0xf]
    %v2656 = vld [vmem:[%s2641 + $0x38] sm:$0xf]
    %v2657 = vld [vmem:[%s2641 + $0x3c] sm:$0xf]
    %v2664 = vunpack.c.l.b16 %v2635
    %v2665 = vunpack.c.l.b16 %v2636
    %v2666 = vunpack.c.l.b16 %v2637
    %v2667 = vunpack.c.l.b16 %v2638
    %v2668 = vunpack.c.l.b16 %v2639
    %v2669 = vunpack.c.l.b16 %v2640
    %v2670 = vrot.slane %v2665, 7
    %v2671 = vsel %vm809, %v2670, %v2664
    %v2672 = vrot.slane %v2666, 6
    %v2673 = vsel %vm812, %v2672, %v2671
    %v2674 = vrot.slane %v2667, 5
    %v2675 = vsel %vm815, %v2674, %v2673
    %v2676 = vrot.slane %v2668, 4
    %v2677 = vsel %vm818, %v2676, %v2675
    %v2678 = vrot.slane %v2669, 3
    %v2679 = vsel %vm821, %v2678, %v2677
    %v2680 = vpack.c.b16 %v2679, %v2679
    %v2698 = vunpack.c.l.b16 %v2642
    %v2699 = vunpack.c.l.b16 %v2643
    %v2700 = vunpack.c.l.b16 %v2644
    %v2701 = vunpack.c.l.b16 %v2645
    %v2702 = vunpack.c.l.b16 %v2646
    %v2703 = vunpack.c.l.b16 %v2647
    %v2704 = vunpack.c.l.b16 %v2648
    %v2705 = vunpack.c.l.b16 %v2649
    %v2706 = vunpack.c.l.b16 %v2650
    %v2707 = vunpack.c.l.b16 %v2651
    %v2708 = vunpack.c.l.b16 %v2652
    %v2709 = vunpack.c.l.b16 %v2653
    %v2710 = vunpack.c.l.b16 %v2654
    %v2711 = vunpack.c.l.b16 %v2655
    %v2712 = vunpack.c.l.b16 %v2656
    %v2713 = vunpack.c.l.b16 %v2657
    %v2714 = vpack.c.b16 %v2699, %v2698
    %v2715 = vpack.c.b16 %v2701, %v2700
    %v2716 = vpack.c.b16 %v2703, %v2702
    %v2717 = vpack.c.b16 %v2705, %v2704
    %v2718 = vpack.c.b16 %v2707, %v2706
    %v2719 = vpack.c.b16 %v2709, %v2708
    %v2720 = vpack.c.b16 %v2711, %v2710
    %v2721 = vpack.c.b16 %v2713, %v2712
    %2730 = vmatprep.subr.bf16.mxu0 0
    %2731 = vmatpush1.bf16.msra.mxu0 %v2721
    %2732 = vmatprep.subr.bf16.mxu0 0
    %2733 = vmatpush1.bf16.msra.mxu0 %v2720
    %2734 = vmatprep.subr.bf16.mxu0 0
    %2735 = vmatpush1.bf16.msra.mxu0 %v2719
    %2736 = vmatprep.subr.bf16.mxu0 0
    %2737 = vmatpush1.bf16.msra.mxu0 %v2718
    %2738 = vmatprep.subr.bf16.mxu0 0
    %2739 = vmatpush1.bf16.msra.mxu0 %v2717
    %2740 = vmatprep.subr.bf16.mxu0 0
    %2741 = vmatpush1.bf16.msra.mxu0 %v2716
    %2742 = vmatprep.subr.bf16.mxu0 0
    %2743 = vmatpush1.bf16.msra.mxu0 %v2715
    %2744 = vmatprep.subr.bf16.mxu0 0
    %2745 = vmatpush1.bf16.msra.mxu0 %v2714
    %2746 = vmatprep.subr.bf16.mxu0 0
    %2747 = vmatpush2.bf16.msra.mxu0 0
    %2748 = vmatprep.subr.bf16.mxu0 0
    %2749 = vmatpush2.bf16.msra.mxu0 0
    %2750 = vmatprep.subr.bf16.mxu0 0
    %2751 = vmatpush2.bf16.msra.mxu0 0
    %2752 = vmatprep.subr.bf16.mxu0 0
    %2753 = vmatpush2.bf16.msra.mxu0 0
    %2754 = vmatprep.subr.bf16.mxu0 0
    %2755 = vmatpush2.bf16.msra.mxu0 0
    %2756 = vmatprep.subr.bf16.mxu0 0
    %2757 = vmatpush2.bf16.msra.mxu0 0
    %2758 = vmatprep.subr.bf16.mxu0 0
    %2759 = vmatpush2.bf16.msra.mxu0 0
    %2760 = vmatprep.subr.bf16.mxu0 0
    %2761 = vmatpush2.bf16.msra.mxu0 0
    %2762 = vmatprep.mubr.bf16.mxu0 0
    %2763 = vmatmul.mubr.bf16.gmra.mxu0 %v2680
    %v2764 = vpop.f32.mrf.mxu0
    %v2765 = vadd.f32 0.0, %v2764
    %v2766 = vpop.f32.mrf.mxu0
    %v2767 = vpop.f32.mrf.mxu0
    %v2768 = vpop.f32.mrf.mxu0
    %2769 = vdwg.mxu0
    %v2770 = vadd.f32 %v2624, %v2765
    %v2771 = vld [vmem:[#allocation5 + $0x3] sm:$0x1]
    %v2772 = vld [vmem:[#allocation5 + $0xb] sm:$0x1]
    %v2773 = vld [vmem:[#allocation5 + $0x13] sm:$0x1]
    %v2774 = vld [vmem:[#allocation5 + $0x1b] sm:$0x1]
    %v2775 = vld [vmem:[#allocation5 + $0x23] sm:$0x1]
    %v2776 = vld [vmem:[#allocation5 + $0x2b] sm:$0x1]
    %v2777 = vpack.c.bf16 %v2771, %v2771
    %v2778 = vpack.c.bf16 %v2772, %v2772
    %v2779 = vpack.c.bf16 %v2773, %v2773
    %v2780 = vpack.c.bf16 %v2774, %v2774
    %v2781 = vpack.c.bf16 %v2775, %v2775
    %v2782 = vpack.c.bf16 %v2776, %v2776
    %s2783 = scalar_lea.vmem %s7, 192
    %v2784 = vld [vmem:[%s2783] sm:$0xf]
    %v2785 = vld [vmem:[%s2783 + $0x4] sm:$0xf]
    %v2786 = vld [vmem:[%s2783 + $0x8] sm:$0xf]
    %v2787 = vld [vmem:[%s2783 + $0xc] sm:$0xf]
    %v2788 = vld [vmem:[%s2783 + $0x10] sm:$0xf]
    %v2789 = vld [vmem:[%s2783 + $0x14] sm:$0xf]
    %v2790 = vld [vmem:[%s2783 + $0x18] sm:$0xf]
    %v2791 = vld [vmem:[%s2783 + $0x1c] sm:$0xf]
    %v2792 = vld [vmem:[%s2783 + $0x20] sm:$0xf]
    %v2793 = vld [vmem:[%s2783 + $0x24] sm:$0xf]
    %v2794 = vld [vmem:[%s2783 + $0x28] sm:$0xf]
    %v2795 = vld [vmem:[%s2783 + $0x2c] sm:$0xf]
    %v2796 = vld [vmem:[%s2783 + $0x30] sm:$0xf]
    %v2797 = vld [vmem:[%s2783 + $0x34] sm:$0xf]
    %v2798 = vld [vmem:[%s2783 + $0x38] sm:$0xf]
    %v2799 = vld [vmem:[%s2783 + $0x3c] sm:$0xf]
    %v2806 = vunpack.c.l.b16 %v2777
    %v2807 = vunpack.c.l.b16 %v2778
    %v2808 = vunpack.c.l.b16 %v2779
    %v2809 = vunpack.c.l.b16 %v2780
    %v2810 = vunpack.c.l.b16 %v2781
    %v2811 = vunpack.c.l.b16 %v2782
    %v2812 = vrot.slane %v2807, 7
    %v2813 = vsel %vm809, %v2812, %v2806
    %v2814 = vrot.slane %v2808, 6
    %v2815 = vsel %vm812, %v2814, %v2813
    %v2816 = vrot.slane %v2809, 5
    %v2817 = vsel %vm815, %v2816, %v2815
    %v2818 = vrot.slane %v2810, 4
    %v2819 = vsel %vm818, %v2818, %v2817
    %v2820 = vrot.slane %v2811, 3
    %v2821 = vsel %vm821, %v2820, %v2819
    %v2822 = vpack.c.b16 %v2821, %v2821
    %v2840 = vunpack.c.l.b16 %v2784
    %v2841 = vunpack.c.l.b16 %v2785
    %v2842 = vunpack.c.l.b16 %v2786
    %v2843 = vunpack.c.l.b16 %v2787
    %v2844 = vunpack.c.l.b16 %v2788
    %v2845 = vunpack.c.l.b16 %v2789
    %v2846 = vunpack.c.l.b16 %v2790
    %v2847 = vunpack.c.l.b16 %v2791
    %v2848 = vunpack.c.l.b16 %v2792
    %v2849 = vunpack.c.l.b16 %v2793
    %v2850 = vunpack.c.l.b16 %v2794
    %v2851 = vunpack.c.l.b16 %v2795
    %v2852 = vunpack.c.l.b16 %v2796
    %v2853 = vunpack.c.l.b16 %v2797
    %v2854 = vunpack.c.l.b16 %v2798
    %v2855 = vunpack.c.l.b16 %v2799
    %v2856 = vpack.c.b16 %v2841, %v2840
    %v2857 = vpack.c.b16 %v2843, %v2842
    %v2858 = vpack.c.b16 %v2845, %v2844
    %v2859 = vpack.c.b16 %v2847, %v2846
    %v2860 = vpack.c.b16 %v2849, %v2848
    %v2861 = vpack.c.b16 %v2851, %v2850
    %v2862 = vpack.c.b16 %v2853, %v2852
    %v2863 = vpack.c.b16 %v2855, %v2854
    %2872 = vmatprep.subr.bf16.mxu0 0
    %2873 = vmatpush1.bf16.msra.mxu0 %v2863
    %2874 = vmatprep.subr.bf16.mxu0 0
    %2875 = vmatpush1.bf16.msra.mxu0 %v2862
    %2876 = vmatprep.subr.bf16.mxu0 0
    %2877 = vmatpush1.bf16.msra.mxu0 %v2861
    %2878 = vmatprep.subr.bf16.mxu0 0
    %2879 = vmatpush1.bf16.msra.mxu0 %v2860
    %2880 = vmatprep.subr.bf16.mxu0 0
    %2881 = vmatpush1.bf16.msra.mxu0 %v2859
    %2882 = vmatprep.subr.bf16.mxu0 0
    %2883 = vmatpush1.bf16.msra.mxu0 %v2858
    %2884 = vmatprep.subr.bf16.mxu0 0
    %2885 = vmatpush1.bf16.msra.mxu0 %v2857
    %2886 = vmatprep.subr.bf16.mxu0 0
    %2887 = vmatpush1.bf16.msra.mxu0 %v2856
    %2888 = vmatprep.subr.bf16.mxu0 0
    %2889 = vmatpush2.bf16.msra.mxu0 0
    %2890 = vmatprep.subr.bf16.mxu0 0
    %2891 = vmatpush2.bf16.msra.mxu0 0
    %2892 = vmatprep.subr.bf16.mxu0 0
    %2893 = vmatpush2.bf16.msra.mxu0 0
    %2894 = vmatprep.subr.bf16.mxu0 0
    %2895 = vmatpush2.bf16.msra.mxu0 0
    %2896 = vmatprep.subr.bf16.mxu0 0
    %2897 = vmatpush2.bf16.msra.mxu0 0
    %2898 = vmatprep.subr.bf16.mxu0 0
    %2899 = vmatpush2.bf16.msra.mxu0 0
    %2900 = vmatprep.subr.bf16.mxu0 0
    %2901 = vmatpush2.bf16.msra.mxu0 0
    %2902 = vmatprep.subr.bf16.mxu0 0
    %2903 = vmatpush2.bf16.msra.mxu0 0
    %2904 = vmatprep.mubr.bf16.mxu0 0
    %2905 = vmatmul.mubr.bf16.gmra.mxu0 %v2822
    %v2906 = vpop.f32.mrf.mxu0
    %v2907 = vadd.f32 0.0, %v2906
    %v2908 = vpop.f32.mrf.mxu0
    %v2909 = vpop.f32.mrf.mxu0
    %v2910 = vpop.f32.mrf.mxu0
    %2911 = vdwg.mxu0
    %v2912 = vadd.f32 %v2770, %v2907
    %v2913 = vld [vmem:[#allocation5 + $0x4] sm:$0x1]
    %v2914 = vld [vmem:[#allocation5 + $0xc] sm:$0x1]
    %v2915 = vld [vmem:[#allocation5 + $0x14] sm:$0x1]
    %v2916 = vld [vmem:[#allocation5 + $0x1c] sm:$0x1]
    %v2917 = vld [vmem:[#allocation5 + $0x24] sm:$0x1]
    %v2918 = vld [vmem:[#allocation5 + $0x2c] sm:$0x1]
    %v2919 = vpack.c.bf16 %v2913, %v2913
    %v2920 = vpack.c.bf16 %v2914, %v2914
    %v2921 = vpack.c.bf16 %v2915, %v2915
    %v2922 = vpack.c.bf16 %v2916, %v2916
    %v2923 = vpack.c.bf16 %v2917, %v2917
    %v2924 = vpack.c.bf16 %v2918, %v2918
    %s2925 = scalar_lea.vmem %s7, 256
    %v2926 = vld [vmem:[%s2925] sm:$0xf]
    %v2927 = vld [vmem:[%s2925 + $0x4] sm:$0xf]
    %v2928 = vld [vmem:[%s2925 + $0x8] sm:$0xf]
    %v2929 = vld [vmem:[%s2925 + $0xc] sm:$0xf]
    %v2930 = vld [vmem:[%s2925 + $0x10] sm:$0xf]
    %v2931 = vld [vmem:[%s2925 + $0x14] sm:$0xf]
    %v2932 = vld [vmem:[%s2925 + $0x18] sm:$0xf]
    %v2933 = vld [vmem:[%s2925 + $0x1c] sm:$0xf]
    %v2934 = vld [vmem:[%s2925 + $0x20] sm:$0xf]
    %v2935 = vld [vmem:[%s2925 + $0x24] sm:$0xf]
    %v2936 = vld [vmem:[%s2925 + $0x28] sm:$0xf]
    %v2937 = vld [vmem:[%s2925 + $0x2c] sm:$0xf]
    %v2938 = vld [vmem:[%s2925 + $0x30] sm:$0xf]
    %v2939 = vld [vmem:[%s2925 + $0x34] sm:$0xf]
    %v2940 = vld [vmem:[%s2925 + $0x38] sm:$0xf]
    %v2941 = vld [vmem:[%s2925 + $0x3c] sm:$0xf]
    %v2948 = vunpack.c.l.b16 %v2919
    %v2949 = vunpack.c.l.b16 %v2920
    %v2950 = vunpack.c.l.b16 %v2921
    %v2951 = vunpack.c.l.b16 %v2922
    %v2952 = vunpack.c.l.b16 %v2923
    %v2953 = vunpack.c.l.b16 %v2924
    %v2954 = vrot.slane %v2949, 7
    %v2955 = vsel %vm809, %v2954, %v2948
    %v2956 = vrot.slane %v2950, 6
    %v2957 = vsel %vm812, %v2956, %v2955
    %v2958 = vrot.slane %v2951, 5
    %v2959 = vsel %vm815, %v2958, %v2957
    %v2960 = vrot.slane %v2952, 4
    %v2961 = vsel %vm818, %v2960, %v2959
    %v2962 = vrot.slane %v2953, 3
    %v2963 = vsel %vm821, %v2962, %v2961
    %v2964 = vpack.c.b16 %v2963, %v2963
    %v2982 = vunpack.c.l.b16 %v2926
    %v2983 = vunpack.c.l.b16 %v2927
    %v2984 = vunpack.c.l.b16 %v2928
    %v2985 = vunpack.c.l.b16 %v2929
    %v2986 = vunpack.c.l.b16 %v2930
    %v2987 = vunpack.c.l.b16 %v2931
    %v2988 = vunpack.c.l.b16 %v2932
    %v2989 = vunpack.c.l.b16 %v2933
    %v2990 = vunpack.c.l.b16 %v2934
    %v2991 = vunpack.c.l.b16 %v2935
    %v2992 = vunpack.c.l.b16 %v2936
    %v2993 = vunpack.c.l.b16 %v2937
    %v2994 = vunpack.c.l.b16 %v2938
    %v2995 = vunpack.c.l.b16 %v2939
    %v2996 = vunpack.c.l.b16 %v2940
    %v2997 = vunpack.c.l.b16 %v2941
    %v2998 = vpack.c.b16 %v2983, %v2982
    %v2999 = vpack.c.b16 %v2985, %v2984
    %v3000 = vpack.c.b16 %v2987, %v2986
    %v3001 = vpack.c.b16 %v2989, %v2988
    %v3002 = vpack.c.b16 %v2991, %v2990
    %v3003 = vpack.c.b16 %v2993, %v2992
    %v3004 = vpack.c.b16 %v2995, %v2994
    %v3005 = vpack.c.b16 %v2997, %v2996
    %3014 = vmatprep.subr.bf16.mxu0 0
    %3015 = vmatpush1.bf16.msra.mxu0 %v3005
    %3016 = vmatprep.subr.bf16.mxu0 0
    %3017 = vmatpush1.bf16.msra.mxu0 %v3004
    %3018 = vmatprep.subr.bf16.mxu0 0
    %3019 = vmatpush1.bf16.msra.mxu0 %v3003
    %3020 = vmatprep.subr.bf16.mxu0 0
    %3021 = vmatpush1.bf16.msra.mxu0 %v3002
    %3022 = vmatprep.subr.bf16.mxu0 0
    %3023 = vmatpush1.bf16.msra.mxu0 %v3001
    %3024 = vmatprep.subr.bf16.mxu0 0
    %3025 = vmatpush1.bf16.msra.mxu0 %v3000
    %3026 = vmatprep.subr.bf16.mxu0 0
    %3027 = vmatpush1.bf16.msra.mxu0 %v2999
    %3028 = vmatprep.subr.bf16.mxu0 0
    %3029 = vmatpush1.bf16.msra.mxu0 %v2998
    %3030 = vmatprep.subr.bf16.mxu0 0
    %3031 = vmatpush2.bf16.msra.mxu0 0
    %3032 = vmatprep.subr.bf16.mxu0 0
    %3033 = vmatpush2.bf16.msra.mxu0 0
    %3034 = vmatprep.subr.bf16.mxu0 0
    %3035 = vmatpush2.bf16.msra.mxu0 0
    %3036 = vmatprep.subr.bf16.mxu0 0
    %3037 = vmatpush2.bf16.msra.mxu0 0
    %3038 = vmatprep.subr.bf16.mxu0 0
    %3039 = vmatpush2.bf16.msra.mxu0 0
    %3040 = vmatprep.subr.bf16.mxu0 0
    %3041 = vmatpush2.bf16.msra.mxu0 0
    %3042 = vmatprep.subr.bf16.mxu0 0
    %3043 = vmatpush2.bf16.msra.mxu0 0
    %3044 = vmatprep.subr.bf16.mxu0 0
    %3045 = vmatpush2.bf16.msra.mxu0 0
    %3046 = vmatprep.mubr.bf16.mxu0 0
    %3047 = vmatmul.mubr.bf16.gmra.mxu0 %v2964
    %v3048 = vpop.f32.mrf.mxu0
    %v3049 = vadd.f32 0.0, %v3048
    %v3050 = vpop.f32.mrf.mxu0
    %v3051 = vpop.f32.mrf.mxu0
    %v3052 = vpop.f32.mrf.mxu0
    %3053 = vdwg.mxu0
    %v3054 = vadd.f32 %v2912, %v3049
    %v3055 = vld [vmem:[%s8] sm:$0x1]
    %v3057 = vlaneseq
    %v3058 = vshrl.u32 %v3057, 7
    %v3059 = vsub.s32 0, %v3058
    %v3060 = vrot.slane %v3055, %v3059
    %v3062 = vadd.f32 %v3054, %v3060
    %vm3063 = vcmp.ge.f32.partialorder %v3062, 0.0
    %v3064 = vmul.f32 %v3062, 0.1
    %v3065 = vsel %vm3063, %v3062, %v3064
    %v3067 = vcombine.high %v3065, %v3065
    %v3069 = vunpack.c.l.s4 1966171168
    %v3070 = vunpack.c.0.s8 %v3069
    %v3071 = vlaneseq
    %v3072 = vshrl.u32 %v3071, 7
    %v3073 = vsub.s32 %v3070, %v3072
    %v3074 = vrot.slane %v3065, %v3073
    %v3076 = vunpack.c.l.s4 1966171168
    %v3077 = vunpack.c.0.s8 %v3076
    %v3078 = vlaneseq
    %v3079 = vshrl.u32 %v3078, 7
    %v3080 = vsub.s32 %v3077, %v3079
    %v3081 = vrot.slane %v3067, %v3080
    %v3082 = vcombine.high %v3074, %v3074
    %v3083 = vcombine.high %v3081, %v3081
    %v3085 = vunpack.c.l.s4 1966171168
    %v3086 = vunpack.c.0.s8 %v3085
    %v3087 = vlaneseq
    %v3088 = vshrl.u32 %v3087, 7
    %v3089 = vsub.s32 %v3086, %v3088
    %v3090 = vrot.slane %v3074, %v3089
    %v3092 = vunpack.c.l.s4 1966171168
    %v3093 = vunpack.c.0.s8 %v3092
    %v3094 = vlaneseq
    %v3095 = vshrl.u32 %v3094, 7
    %v3096 = vsub.s32 %v3093, %v3095
    %v3097 = vrot.slane %v3081, %v3096
    %v3099 = vunpack.c.l.s4 1966171168
    %v3100 = vunpack.c.0.s8 %v3099
    %v3101 = vlaneseq
    %v3102 = vshrl.u32 %v3101, 7
    %v3103 = vsub.s32 %v3100, %v3102
    %v3104 = vrot.slane %v3082, %v3103
    %v3106 = vunpack.c.l.s4 1966171168
    %v3107 = vunpack.c.0.s8 %v3106
    %v3108 = vlaneseq
    %v3109 = vshrl.u32 %v3108, 7
    %v3110 = vsub.s32 %v3107, %v3109
    %v3111 = vrot.slane %v3083, %v3110
    %v3112 = vcombine.high %v3090, %v3090
    %v3113 = vcombine.high %v3104, %v3104
    %3120 = vst [vmem:[#allocation18] sm:$0x1] %v3090
    %3121 = vst [vmem:[#allocation18 + $0x1] sm:$0x1] %v3104
    %3122 = vst [vmem:[#allocation18 + $0x2] sm:$0x1] %v3112
    %3123 = vst [vmem:[#allocation18 + $0x3] sm:$0x1] %v3113
    %3124 = vst [vmem:[#allocation18 + $0x4] sm:$0x1] %v3097
    %3125 = vst [vmem:[#allocation18 + $0x5] sm:$0x1] %v3111
    %3126 = vst [vmem:[#allocation6] sm:$0x1] 0.0
    %3127 = vst [vmem:[#allocation6 + $0x4] sm:$0x1] 0.0
    %3128 = vst [vmem:[#allocation6 + $0x8] sm:$0x1] 0.0
    %3129 = vst [vmem:[#allocation6 + $0xc] sm:$0x1] 0.0
    %3130 = vst [vmem:[#allocation6 + $0x10] sm:$0x1] 0.0
    %3131 = vst [vmem:[#allocation6 + $0x14] sm:$0x1] 0.0
    %3132 = vst [vmem:[#allocation6 + $0x2] sm:$0x1] 0.0
    %3133 = vst [vmem:[#allocation6 + $0x6] sm:$0x1] 0.0
    %3134 = vst [vmem:[#allocation6 + $0xa] sm:$0x1] 0.0
    %3135 = vst [vmem:[#allocation6 + $0xe] sm:$0x1] 0.0
    %3136 = vst [vmem:[#allocation6 + $0x12] sm:$0x1] 0.0
    %3137 = vst [vmem:[#allocation6 + $0x16] sm:$0x1] 0.0
    %v3138 = vld [vmem:[#allocation18] sm:$0x1]
    %v3139 = vld [vmem:[#allocation18 + $0x1] sm:$0x1]
    %v3140 = vld [vmem:[#allocation18 + $0x2] sm:$0x1]
    %v3141 = vld [vmem:[#allocation18 + $0x3] sm:$0x1]
    %v3142 = vld [vmem:[#allocation18 + $0x4] sm:$0x1]
    %v3143 = vld [vmem:[#allocation18 + $0x5] sm:$0x1]
    %3144 = vst [vmem:[#allocation6 + $0x1] sm:$0x1] %v3138
    %3145 = vst [vmem:[#allocation6 + $0x5] sm:$0x1] %v3139
    %3146 = vst [vmem:[#allocation6 + $0x9] sm:$0x1] %v3140
    %3147 = vst [vmem:[#allocation6 + $0xd] sm:$0x1] %v3141
    %3148 = vst [vmem:[#allocation6 + $0x11] sm:$0x1] %v3142
    %3149 = vst [vmem:[#allocation6 + $0x15] sm:$0x1] %v3143
    %v3150 = vld [vmem:[%s9] sm:$0x3]
    %v3151 = vld [vmem:[#allocation6] sm:$0x3]
    %v3152 = vld [vmem:[#allocation6 + $0x4] sm:$0x3]
    %v3153 = vld [vmem:[#allocation6 + $0x8] sm:$0x3]
    %v3154 = vld [vmem:[#allocation6 + $0xc] sm:$0x3]
    %v3155 = vld [vmem:[#allocation6 + $0x10] sm:$0x3]
    %v3156 = vld [vmem:[#allocation6 + $0x14] sm:$0x3]
    %v3157 = vlaneseq
    %v3158 = vshrl.u32 %v3157, 7
    %v3159 = vsub.s32 0, %v3158
    %v3160 = vrot.slane %v3150, %v3159
    %v3161 = vmul.f32 %v3151, %v3160
    %v3162 = vmul.f32 %v3152, %v3160
    %v3163 = vmul.f32 %v3153, %v3160
    %v3164 = vmul.f32 %v3154, %v3160
    %v3165 = vmul.f32 %v3155, %v3160
    %v3166 = vmul.f32 %v3156, %v3160
    %v3167 = vadd.f32 %v3161, 0.0
    %v3168 = vadd.f32 %v3162, 0.0
    %v3169 = vadd.f32 %v3163, 0.0
    %v3170 = vadd.f32 %v3164, 0.0
    %v3171 = vadd.f32 %v3165, 0.0
    %v3172 = vadd.f32 %v3166, 0.0
    %v3173 = vld [vmem:[#allocation6 + $0x1] sm:$0x3]
    %v3174 = vld [vmem:[#allocation6 + $0x5] sm:$0x3]
    %v3175 = vld [vmem:[#allocation6 + $0x9] sm:$0x3]
    %v3176 = vld [vmem:[#allocation6 + $0xd] sm:$0x3]
    %v3177 = vld [vmem:[#allocation6 + $0x11] sm:$0x3]
    %v3178 = vld [vmem:[#allocation6 + $0x15] sm:$0x3]
    %v3179 = vlaneseq
    %v3180 = vshrl.u32 %v3179, 7
    %v3181 = vsub.s32 1, %v3180
    %v3182 = vrot.slane %v3150, %v3181
    %v3183 = vmul.f32 %v3173, %v3182
    %v3184 = vmul.f32 %v3174, %v3182
    %v3185 = vmul.f32 %v3175, %v3182
    %v3186 = vmul.f32 %v3176, %v3182
    %v3187 = vmul.f32 %v3177, %v3182
    %v3188 = vmul.f32 %v3178, %v3182
    %v3189 = vadd.f32 %v3167, %v3183
    %v3190 = vadd.f32 %v3168, %v3184
    %v3191 = vadd.f32 %v3169, %v3185
    %v3192 = vadd.f32 %v3170, %v3186
    %v3193 = vadd.f32 %v3171, %v3187
    %v3194 = vadd.f32 %v3172, %v3188
    %vm3195 = vcmask 1041408
    %v3196 = vsel %vm3195, %v3189, 0.0
    %3197 = vadd.xlane.f32.xlu0 %v3196
    %v3198 = vpop.xlane.xlu0 %3197
    %v3199 = vsel %vm3195, %v3190, 0.0
    %3200 = vadd.xlane.f32.xlu0 %v3199
    %v3201 = vpop.xlane.xlu0 %3200
    %v3202 = vsel %vm3195, %v3191, 0.0
    %3203 = vadd.xlane.f32.xlu0 %v3202
    %v3204 = vpop.xlane.xlu0 %3203
    %v3205 = vsel %vm3195, %v3192, 0.0
    %3206 = vadd.xlane.f32.xlu0 %v3205
    %v3207 = vpop.xlane.xlu0 %3206
    %v3208 = vsel %vm3195, %v3193, 0.0
    %3209 = vadd.xlane.f32.xlu0 %v3208
    %v3210 = vpop.xlane.xlu0 %3209
    %v3211 = vsel %vm3195, %v3194, 0.0
    %3212 = vadd.xlane.f32.xlu0 %v3211
    %v3213 = vpop.xlane.xlu0 %3212
    %s3214 = sld [smem:[#allocation7]]
    %v3215 = vstv %s3214
    %v3216 = vadd.f32 %v3198, %v3215
    %v3217 = vadd.f32 %v3201, %v3215
    %v3218 = vadd.f32 %v3204, %v3215
    %v3219 = vadd.f32 %v3207, %v3215
    %v3220 = vadd.f32 %v3210, %v3215
    %v3221 = vadd.f32 %v3213, %v3215
    %v3228 = vlaneseq
    %v3229 = vand.u32 %v3228, 127
    %v3230 = vlaneseq
    %v3231 = vshrl.u32 %v3230, 7
    %v3232 = vsub.s32 %v3229, %v3231
    %v3233 = vrot.slane %v3216, %v3232
    %v3234 = vlaneseq
    %v3235 = vshrl.u32 %v3234, 7
    %v3236 = vsub.s32 %v3229, %v3235
    %v3237 = vrot.slane %v3217, %v3236
    %v3238 = vlaneseq
    %v3239 = vshrl.u32 %v3238, 7
    %v3240 = vsub.s32 %v3229, %v3239
    %v3241 = vrot.slane %v3218, %v3240
    %v3242 = vlaneseq
    %v3243 = vshrl.u32 %v3242, 7
    %v3244 = vsub.s32 %v3229, %v3243
    %v3245 = vrot.slane %v3219, %v3244
    %v3246 = vlaneseq
    %v3247 = vshrl.u32 %v3246, 7
    %v3248 = vsub.s32 %v3229, %v3247
    %v3249 = vrot.slane %v3220, %v3248
    %v3250 = vlaneseq
    %v3251 = vshrl.u32 %v3250, 7
    %v3252 = vsub.s32 %v3229, %v3251
    %v3253 = vrot.slane %v3221, %v3252
    %v3254 = vsel %vm809, %v3237, %v3233
    %v3255 = vsel %vm812, %v3241, %v3254
    %v3256 = vsel %vm815, %v3245, %v3255
    %v3257 = vsel %vm818, %v3249, %v3256
    %v3258 = vsel %vm821, %v3253, %v3257
    %vm3260 = vcmask 13312
    %3261 = vst.msk [vmem:[%s15] sm:$0x3f] %vm3260, %v3258
    // Predicated region
    $region58: #{_lambda_.1} parent=1 // pred_check
      _
    $region59: #{_lambda_.1} parent=1 // pred_check_branch
      %3263 = sbr.rel (0) target = $region61
    $region60: #{_lambda_.1} parent=1 // pred_region
      %s3265 = ssub.s32 192, 192
      %3266 = vsyncadd [#allocation10], %s3265
      %s3267 = sshll.u32 [#allocation14], 4
      %s3268 = int_to_ptr.vmem [resolvable:$true] %s3267
      %3273 = dma.vmem_to_hbm [thread:$0]  %s3268, 192, %s11, [#allocation10], 32, 32, 2
    $region61: #{_lambda_.1} parent=1 // pred_fallthru
      _
    // Predicated region
    $region62: #{_lambda_.1} parent=1 // pred_check
      _
    $region63: #{_lambda_.1} parent=1 // pred_check_branch
      %3275 = sbr.rel (0) target = $region65
    $region64: #{_lambda_.1} parent=1 // pred_region
      %s3277 = ssub.s32 96, 96
      %3278 = vsyncadd [#allocation16], %s3277
      %s3279 = sshll.u32 [#allocation15], 4
      %s3280 = int_to_ptr.vmem [resolvable:$true] %s3279
      %3285 = dma.vmem_to_hbm [thread:$0]  %s3280, 96, %s12, [#allocation16], 16, 16, 1
    $region65: #{_lambda_.1} parent=1 // pred_fallthru
      _
    // Predicated region
    $region66: #{_lambda_.1} parent=1 // pred_check
      _
    $region67: #{_lambda_.1} parent=1 // pred_check_branch
      %3287 = sbr.rel (0) target = $region69
    $region68: #{_lambda_.1} parent=1 // pred_region
      %s3289 = ssub.s32 96, 96
      %3290 = vsyncadd [#allocation16], %s3289
      %s3291 = sshll.u32 [#allocation17], 4
      %s3292 = int_to_ptr.vmem [resolvable:$true] %s3291
      %3297 = dma.vmem_to_hbm [thread:$0]  %s3292, 96, %s13, [#allocation16], 16, 16, 1
    $region69: #{_lambda_.1} parent=1 // pred_fallthru
      _
    // Predicated region
    $region70: #{_lambda_.1} parent=1 // pred_check
      _
    $region71: #{_lambda_.1} parent=1 // pred_check_branch
      %3299 = sbr.rel (0) target = $region73
    $region72: #{_lambda_.1} parent=1 // pred_region
      %s3301 = ssub.s32 96, 96
      %3302 = vsyncadd [#allocation19], %s3301
      %s3303 = sshll.u32 [#allocation18], 4
      %s3304 = int_to_ptr.vmem [resolvable:$true] %s3303
      %3309 = dma.vmem_to_hbm [thread:$0]  %s3304, 96, %s14, [#allocation19], 16, 16, 1
    $region73: #{_lambda_.1} parent=1 // pred_fallthru
      _
    // Predicated region
    $region74: #{_lambda_.1} parent=1 // pred_check
      _
    $region75: #{_lambda_.1} parent=1 // pred_check_branch
      %3311 = sbr.rel (0) target = $region77
    $region76: #{_lambda_.1} parent=1 // pred_region
      _
    $region77: #{_lambda_.1} parent=1 // pred_fallthru
      _
    // Predicated region
    $region78: #{_lambda_.1} parent=1 // pred_check
      _
    $region79: #{_lambda_.1} parent=1 // pred_check_branch
      %3313 = sbr.rel (0) target = $region81
    $region80: #{_lambda_.1} parent=1 // pred_region
      %3314 = dma.done [#allocation10], 192
    $region81: #{_lambda_.1} parent=1 // pred_fallthru
      _
    // Predicated region
    $region82: #{_lambda_.1} parent=1 // pred_check
      _
    $region83: #{_lambda_.1} parent=1 // pred_check_branch
      %3316 = sbr.rel (0) target = $region85
    $region84: #{_lambda_.1} parent=1 // pred_region
      %3317 = dma.done [#allocation16], 96
    $region85: #{_lambda_.1} parent=1 // pred_fallthru
      _
    // Predicated region
    $region86: #{_lambda_.1} parent=1 // pred_check
      _
    $region87: #{_lambda_.1} parent=1 // pred_check_branch
      %3319 = sbr.rel (0) target = $region89
    $region88: #{_lambda_.1} parent=1 // pred_region
      %3320 = dma.done [#allocation16], 96
    $region89: #{_lambda_.1} parent=1 // pred_fallthru
      _
    // Predicated region
    $region90: #{_lambda_.1} parent=1 // pred_check
      _
    $region91: #{_lambda_.1} parent=1 // pred_check_branch
      %3322 = sbr.rel (0) target = $region93
    $region92: #{_lambda_.1} parent=1 // pred_region
      %3323 = dma.done [#allocation19], 96
    $region93: #{_lambda_.1} parent=1 // pred_fallthru
      _
    // Predicated region
    $region94: #{_lambda_.1} parent=1 // pred_check
      _
    $region95: #{_lambda_.1} parent=1 // pred_check_branch
      %3325 = sbr.rel (0) target = $region97
    $region96: #{_lambda_.1} parent=1 // pred_region
      _
    $region97: #{_lambda_.1} parent=1 // pred_fallthru
      _
    %3326 = vsyncpa [#allocation9], 1
    %3327 = vsyncpa [#allocation12], 1
    %3328 = vsyncpa [#allocation10], 1
    %3329 = vsyncpa [#allocation16], 1
    %3330 = vsyncpa [#allocation19], 1

</llo_original>
